<compile_context>
chip_gen: v7x
topology: tpu7x:2x2x1
jax: 0.10.0
libtpu: 0.0.40
codegen_flags: <defaults>
</compile_context>

<pallas_src>
import jax
import jax.numpy as jnp
from jax import lax
from jax.experimental import pallas as pl
from jax.experimental.pallas import tpu as pltpu

LANE = 128  # all kernel-output channel dims padded to this (lane-dense stores)


def _round_up(x, m):
    return (x + m - 1) // m * m


def _row_tile(m, max_tile=512):
    """8-aligned row tile (<= max_tile) and the padded row count."""
    tm = min(max_tile, _round_up(m, 8))
    return tm, _round_up(m, tm)


# ----------------------------------------------------------------------------
# Pallas kernels
# ----------------------------------------------------------------------------
def _conv_relu_pool_kernel(p00_ref, p01_ref, p10_ref, p11_ref, w_ref, b_ref,
                           o_ref):
    """Fused conv-as-matmul + bias + ReLU + 2x2 max-pool.

    p**_ref : (TM, K)   im2col patches for the four positions of each 2x2
                        pooling window (row m of every phase = pooled pixel m).
    w_ref   : (K, 128)  flattened conv weights, zero-padded to 128 out-channels.
    b_ref   : (1, 128)  bias (zero-padded).
    o_ref   : (TM, 128) pooled activation (lane-dense store).
    """
    w = w_ref[...]
    z = jnp.dot(p00_ref[...], w, preferred_element_type=jnp.float32)
    z = jnp.maximum(z, jnp.dot(p01_ref[...], w, preferred_element_type=jnp.float32))
    z = jnp.maximum(z, jnp.dot(p10_ref[...], w, preferred_element_type=jnp.float32))
    z = jnp.maximum(z, jnp.dot(p11_ref[...], w, preferred_element_type=jnp.float32))
    # pool(relu(z + b)) == relu(max_phases(z) + b)
    o_ref[...] = jnp.maximum(z + b_ref[...], 0.0)


def _fc_chain_kernel(x_ref, w1_ref, b1_ref, w2_ref, b2_ref, w3_ref, b3_ref,
                     o_ref):
    """fc1 -> ReLU -> fc2 -> ReLU -> fc3 in one kernel; intermediates stay in VMEM."""
    h = jnp.dot(x_ref[...], w1_ref[...], preferred_element_type=jnp.float32)
    h = jnp.maximum(h + b1_ref[...], 0.0)
    h = jnp.dot(h, w2_ref[...], preferred_element_type=jnp.float32)
    h = jnp.maximum(h + b2_ref[...], 0.0)
    h = jnp.dot(h, w3_ref[...], preferred_element_type=jnp.float32)
    o_ref[...] = h + b3_ref[...]


# ----------------------------------------------------------------------------
# Wrappers
# ----------------------------------------------------------------------------
def conv_relu_pool(x_nhwc, w_mat, b_row, kh, kw):
    """nn.Conv2d(k, stride=1, VALID) + bias + ReLU + MaxPool2d(2,2), fused.

    x_nhwc: (B, H, W, Cin) f32.  w_mat: (Cin*kh*kw, 128).  b_row: (1, 128).
    Returns (B, Ho//2, Wo//2, 128); channels >= Cout are zero.
    """
    # TODO(synk): optionally cast MXU operands to bf16 (v6e/v7x) and move the
    # patch extraction in-kernel to drop the materialized im2col entirely.
    B, H, W, Cin = x_nhwc.shape
    Ho, Wo = H - kh + 1, W - kw + 1
    Hp, Wp = Ho // 2, Wo // 2
    K = Cin * kh * kw
    dn = ("NHWC", "HWIO", "NHWC")

    # im2col of the four 2x2-pool phases: stride-2 patch extraction on a
    # (di, dj)-shifted view.  Row m of every phase is the same pooled pixel.
    phases = []
    for di in (0, 1):
        for dj in (0, 1):
            p = lax.conv_general_dilated_patches(
                x_nhwc[:, di:, dj:, :], (kh, kw), (2, 2), "VALID",
                dimension_numbers=dn)
            p = p[:, :Hp, :Wp, :]                       # defensive trim (no-op here)
            phases.append(p.reshape(B * Hp * Wp, K))

    M = B * Hp * Wp
    TM, Mp = _row_tile(M)
    if Mp != M:
        phases = [jnp.pad(p, ((0, Mp - M), (0, 0))) for p in phases]
    Np = w_mat.shape[1]

    out = pl.pallas_call(
        _conv_relu_pool_kernel,
        out_shape=jax.ShapeDtypeStruct((Mp, Np), jnp.float32),
        grid=(Mp // TM,),
        in_specs=[pl.BlockSpec((TM, K), lambda i: (i, 0))] * 4
        + [pl.BlockSpec((K, Np), lambda i: (0, 0)),
           pl.BlockSpec((1, Np), lambda i: (0, 0))],
        out_specs=pl.BlockSpec((TM, Np), lambda i: (i, 0)),
        compiler_params=pltpu.CompilerParams(
            dimension_semantics=("parallel",)),
    )(*phases, w_mat, b_row)
    return out[:M].reshape(B, Hp, Wp, Np)


def fc_chain(x, w1, b1, w2, b2, w3, b3):
    """x:(B,400) -> fc1(120)+ReLU -> fc2(84)+ReLU -> fc3(10), padded to 128 lanes."""
    B, K = x.shape
    TB, Bp = _row_tile(B)
    if Bp != B:
        x = jnp.pad(x, ((0, Bp - B), (0, 0)))
    N1, N2, N3 = w1.shape[1], w2.shape[1], w3.shape[1]
    out = pl.pallas_call(
        _fc_chain_kernel,
        out_shape=jax.ShapeDtypeStruct((Bp, N3), jnp.float32),
        grid=(Bp // TB,),
        in_specs=[
            pl.BlockSpec((TB, K), lambda i: (i, 0)),
            pl.BlockSpec((K, N1), lambda i: (0, 0)),
            pl.BlockSpec((1, N1), lambda i: (0, 0)),
            pl.BlockSpec((N1, N2), lambda i: (0, 0)),
            pl.BlockSpec((1, N2), lambda i: (0, 0)),
            pl.BlockSpec((N2, N3), lambda i: (0, 0)),
            pl.BlockSpec((1, N3), lambda i: (0, 0)),
        ],
        out_specs=pl.BlockSpec((TB, N3), lambda i: (i, 0)),
        compiler_params=pltpu.CompilerParams(
            dimension_semantics=("parallel",)),
    )(x, w1, b1, w2, b2, w3, b3)
    return out[:B]


# ----------------------------------------------------------------------------
# Parameters (PyTorch layout) + one-time repack into kernel layout
# ----------------------------------------------------------------------------
def _uniform(key, shape, fan_in):
    bound = 1.0 / jnp.sqrt(jnp.asarray(fan_in, jnp.float32))
    return jax.random.uniform(key, shape, jnp.float32, -bound, bound)


def init_params(key):
    """PyTorch-layout params (Conv2d: (Cout,Cin,kh,kw); Linear: (out,in))."""
    ks = jax.random.split(key, 10)
    return {
        "conv1_w": _uniform(ks[0], (6, 3, 5, 5), 3 * 5 * 5),
        "conv1_b": _uniform(ks[1], (6,), 3 * 5 * 5),
        "conv2_w": _uniform(ks[2], (16, 6, 5, 5), 6 * 5 * 5),
        "conv2_b": _uniform(ks[3], (16,), 6 * 5 * 5),
        "fc1_w": _uniform(ks[4], (120, 400), 400),
        "fc1_b": _uniform(ks[5], (120,), 400),
        "fc2_w": _uniform(ks[6], (84, 120), 120),
        "fc2_b": _uniform(ks[7], (84,), 120),
        "fc3_w": _uniform(ks[8], (10, 84), 84),
        "fc3_b": _uniform(ks[9], (10,), 84),
    }


def _flatten_conv_weight(w):
    """(Cout,Cin,kh,kw) -> (Cin*kh*kw, Cout) using the *same* patch-extraction op
    as the activations, so the feature ordering matches by construction."""
    Cout, Cin, kh, kw = w.shape
    w_img = jnp.transpose(w, (0, 2, 3, 1))                       # (Cout,kh,kw,Cin)
    flat = lax.conv_general_dilated_patches(
        w_img, (kh, kw), (1, 1), "VALID",
        dimension_numbers=("NHWC", "HWIO", "NHWC"))              # (Cout,1,1,K)
    return flat.reshape(Cout, Cin * kh * kw).T                   # (K, Cout)


def _pad_cols(m, n):
    return jnp.pad(m, ((0, 0), (0, n - m.shape[1])))


def _pad_bias(b, n):
    return jnp.pad(b, (0, n - b.shape[0])).reshape(1, n)


def prepare_params(p):
    """One-time repack: transposed (in,out) weight matrices, zero-padded to 128
    lanes, fc1 columns permuted to accept an NHWC flatten.  Hoisted out of jit."""
    kp = {
        "conv1_w": _pad_cols(_flatten_conv_weight(p["conv1_w"]), LANE),  # (75,128)
        "conv1_b": _pad_bias(p["conv1_b"], LANE),
        "conv2_w": _pad_cols(_flatten_conv_weight(p["conv2_w"]), LANE),  # (150,128)
        "conv2_b": _pad_bias(p["conv2_b"], LANE),
    }
    # fc1 expects a PyTorch NCHW flatten of (B,16,5,5); we feed an NHWC flatten,
    # so permute its input columns once here (same math).
    w1 = p["fc1_w"].reshape(120, 16, 5, 5).transpose(0, 2, 3, 1).reshape(120, 400)
    kp["fc1_w"] = _pad_cols(w1.T, LANE)                                   # (400,128)
    kp["fc1_b"] = _pad_bias(p["fc1_b"], LANE)
    kp["fc2_w"] = jnp.pad(p["fc2_w"].T, ((0, LANE - 120), (0, LANE - 84)))  # (128,128)
    kp["fc2_b"] = _pad_bias(p["fc2_b"], LANE)
    kp["fc3_w"] = jnp.pad(p["fc3_w"].T, ((0, LANE - 84), (0, LANE - 10)))   # (128,128)
    kp["fc3_b"] = _pad_bias(p["fc3_b"], LANE)
    return kp


# ----------------------------------------------------------------------------
# Forward pass (mirrors Net.forward) + pure-JAX reference
# ----------------------------------------------------------------------------
@jax.jit
def net_forward(kparams, x_nchw):
    """Net.forward on NCHW float32 input (B,3,32,32) -> (B,10)."""
    B = x_nchw.shape[0]
    x = jnp.transpose(x_nchw, (0, 2, 3, 1))                   # single NCHW->NHWC
    y = conv_relu_pool(x, kparams["conv1_w"], kparams["conv1_b"], 5, 5)
    y = y[..., :6]                                            # (B,14,14,6)
    y = conv_relu_pool(y, kparams["conv2_w"], kparams["conv2_b"], 5, 5)
    y = y[..., :16].reshape(B, 5 * 5 * 16)                    # NHWC flatten (B,400)
    out = fc_chain(y, kparams["fc1_w"], kparams["fc1_b"],
                   kparams["fc2_w"], kparams["fc2_b"],
                   kparams["fc3_w"], kparams["fc3_b"])
    return out[:, :10]


@jax.jit
def net_forward_ref(params, x_nchw):
    """Pure-JAX/XLA reference (no Pallas) mirroring the PyTorch module exactly."""
    dn = ("NCHW", "OIHW", "NCHW")
    hp = lax.Precision.HIGHEST

    def conv_relu(x, w, b):
        y = lax.conv_general_dilated(x, w, (1, 1), "VALID",
                                     dimension_numbers=dn, precision=hp)
        return jnp.maximum(y + b[None, :, None, None], 0.0)

    def pool(x):
        return lax.reduce_window(x, -jnp.inf, lax.max,
                                 (1, 1, 2, 2), (1, 1, 2, 2), "VALID")

    y = pool(conv_relu(x_nchw, params["conv1_w"], params["conv1_b"]))
    y = pool(conv_relu(y, params["conv2_w"], params["conv2_b"]))
    y = y.reshape(y.shape[0], -1)
    y = jnp.maximum(jnp.dot(y, params["fc1_w"].T, precision=hp) + params["fc1_b"], 0.0)
    y = jnp.maximum(jnp.dot(y, params["fc2_w"].T, precision=hp) + params["fc2_b"], 0.0)
    return jnp.dot(y, params["fc3_w"].T, precision=hp) + params["fc3_b"]


if __name__ == "__main__":
    key = jax.random.PRNGKey(0)
    pkey, xkey = jax.random.split(key)
    params = init_params(pkey)
    kparams = prepare_params(params)          # one-time weight repack (outside jit)

    x = jax.random.normal(xkey, (2, 3, 32, 32), jnp.float32)   # NCHW, like PyTorch

    out = net_forward(kparams, x)
    jax.block_until_ready(out)
    assert out.shape == (2, 10) and out.dtype == jnp.float32

    ref = net_forward_ref(params, x)
    err = float(jnp.max(jnp.abs(out - ref)))
    assert err < 5e-2, f"Pallas forward mismatch vs reference: max|diff|={err}"

    print("KERNEL_OK")
</pallas_src>

<mosaic_0001>
module attributes {stable_mosaic.version = 11 : i64} {
  func.func @_conv_relu_pool_kernel(%arg0: i32, %arg1: memref<392x75xf32, #tpu.memory_space<vmem>>, %arg2: memref<392x75xf32, #tpu.memory_space<vmem>>, %arg3: memref<392x75xf32, #tpu.memory_space<vmem>>, %arg4: memref<392x75xf32, #tpu.memory_space<vmem>>, %arg5: memref<75x128xf32, #tpu.memory_space<vmem>>, %arg6: memref<1x128xf32, #tpu.memory_space<vmem>>, %arg7: memref<392x128xf32, #tpu.memory_space<vmem>>) attributes {dimension_semantics = [#tpu.dimension_semantics<parallel>], iteration_bounds = array<i64: 1>, scalar_prefetch = 0 : i64, scratch_operands = 0 : i64, tpu.core_type = #tpu.core_type<tc>, window_params = [{transform_indices = @transform_0, window_bounds = array<i64: 392, 75>}, {transform_indices = @transform_1, window_bounds = array<i64: 392, 75>}, {transform_indices = @transform_2, window_bounds = array<i64: 392, 75>}, {transform_indices = @transform_3, window_bounds = array<i64: 392, 75>}, {pipeline_mode = #tpu.pipeline_mode<synchronous>, transform_indices = @transform_4, window_bounds = array<i64: 75, 128>}, {pipeline_mode = #tpu.pipeline_mode<synchronous>, transform_indices = @transform_5, window_bounds = array<i64: 1, 128>}, {transform_indices = @transform_6, window_bounds = array<i64: 392, 128>}]} {
    %c0 = arith.constant 0 : index
    %c0_0 = arith.constant 0 : index
    %0 = vector.load %arg5[%c0, %c0_0] : memref<75x128xf32, #tpu.memory_space<vmem>>, vector<75x128xf32>
    %c0_1 = arith.constant 0 : index
    %c0_2 = arith.constant 0 : index
    %1 = vector.load %arg1[%c0_1, %c0_2] : memref<392x75xf32, #tpu.memory_space<vmem>>, vector<392x75xf32>
    %cst = arith.constant dense<0.000000e+00> : vector<392x128xf32>
    %2 = tpu.matmul %1, %0, %cst {dimension_numbers = #tpu.dot_dimension_numbers<[1], [0], [0], [1], [0, 0, 1, 1], [], []>} : vector<392x75xf32>, vector<75x128xf32>, vector<392x128xf32> -> vector<392x128xf32>
    %c0_3 = arith.constant 0 : index
    %c0_4 = arith.constant 0 : index
    %3 = vector.load %arg2[%c0_3, %c0_4] : memref<392x75xf32, #tpu.memory_space<vmem>>, vector<392x75xf32>
    %cst_5 = arith.constant dense<0.000000e+00> : vector<392x128xf32>
    %4 = tpu.matmul %3, %0, %cst_5 {dimension_numbers = #tpu.dot_dimension_numbers<[1], [0], [0], [1], [0, 0, 1, 1], [], []>} : vector<392x75xf32>, vector<75x128xf32>, vector<392x128xf32> -> vector<392x128xf32>
    %5 = arith.maximumf %2, %4 : vector<392x128xf32>
    %c0_6 = arith.constant 0 : index
    %c0_7 = arith.constant 0 : index
    %6 = vector.load %arg3[%c0_6, %c0_7] : memref<392x75xf32, #tpu.memory_space<vmem>>, vector<392x75xf32>
    %cst_8 = arith.constant dense<0.000000e+00> : vector<392x128xf32>
    %7 = tpu.matmul %6, %0, %cst_8 {dimension_numbers = #tpu.dot_dimension_numbers<[1], [0], [0], [1], [0, 0, 1, 1], [], []>} : vector<392x75xf32>, vector<75x128xf32>, vector<392x128xf32> -> vector<392x128xf32>
    %8 = arith.maximumf %5, %7 : vector<392x128xf32>
    %c0_9 = arith.constant 0 : index
    %c0_10 = arith.constant 0 : index
    %9 = vector.load %arg4[%c0_9, %c0_10] : memref<392x75xf32, #tpu.memory_space<vmem>>, vector<392x75xf32>
    %cst_11 = arith.constant dense<0.000000e+00> : vector<392x128xf32>
    %10 = tpu.matmul %9, %0, %cst_11 {dimension_numbers = #tpu.dot_dimension_numbers<[1], [0], [0], [1], [0, 0, 1, 1], [], []>} : vector<392x75xf32>, vector<75x128xf32>, vector<392x128xf32> -> vector<392x128xf32>
    %11 = arith.maximumf %8, %10 : vector<392x128xf32>
    %c0_12 = arith.constant 0 : index
    %c0_13 = arith.constant 0 : index
    %12 = vector.load %arg6[%c0_12, %c0_13] : memref<1x128xf32, #tpu.memory_space<vmem>>, vector<1x128xf32>
    %13 = vector.broadcast %12 : vector<1x128xf32> to vector<392x128xf32>
    %14 = arith.addf %11, %13 : vector<392x128xf32>
    %cst_14 = arith.constant 0.000000e+00 : f32
    %15 = vector.broadcast %cst_14 : f32 to vector<392x128xf32>
    %16 = arith.maximumf %14, %15 : vector<392x128xf32>
    %c0_15 = arith.constant 0 : index
    %c0_16 = arith.constant 0 : index
    %17 = vector.load %arg7[%c0_15, %c0_16] : memref<392x128xf32, #tpu.memory_space<vmem>>, vector<392x128xf32>
    tpu.vector_store %arg7[%c0_15, %c0_16], %16 {strides = array<i32>} : memref<392x128xf32, #tpu.memory_space<vmem>>, vector<392x128xf32>,
    return
  }
  func.func @transform_0(%arg0: i32) -> (i32, i32) {
    %c0_i32 = arith.constant 0 : i32
    %c0_i32_0 = arith.constant 0 : i32
    return %arg0, %c0_i32 : i32, i32
  }
  func.func @transform_1(%arg0: i32) -> (i32, i32) {
    %c0_i32 = arith.constant 0 : i32
    %c0_i32_0 = arith.constant 0 : i32
    return %arg0, %c0_i32 : i32, i32
  }
  func.func @transform_2(%arg0: i32) -> (i32, i32) {
    %c0_i32 = arith.constant 0 : i32
    %c0_i32_0 = arith.constant 0 : i32
    return %arg0, %c0_i32 : i32, i32
  }
  func.func @transform_3(%arg0: i32) -> (i32, i32) {
    %c0_i32 = arith.constant 0 : i32
    %c0_i32_0 = arith.constant 0 : i32
    return %arg0, %c0_i32 : i32, i32
  }
  func.func @transform_4(%arg0: i32) -> (i32, i32) {
    %c0_i32 = arith.constant 0 : i32
    %c0_i32_0 = arith.constant 0 : i32
    %c0_i32_1 = arith.constant 0 : i32
    return %c0_i32, %c0_i32_0 : i32, i32
  }
  func.func @transform_5(%arg0: i32) -> (i32, i32) {
    %c0_i32 = arith.constant 0 : i32
    %c0_i32_0 = arith.constant 0 : i32
    %c0_i32_1 = arith.constant 0 : i32
    return %c0_i32, %c0_i32_0 : i32, i32
  }
  func.func @transform_6(%arg0: i32) -> (i32, i32) {
    %c0_i32 = arith.constant 0 : i32
    %c0_i32_0 = arith.constant 0 : i32
    return %arg0, %c0_i32 : i32, i32
  }
}

module attributes {stable_mosaic.version = 11 : i64} {
  func.func @_conv_relu_pool_kernel(%arg0: i32, %arg1: memref<56x150xf32, #tpu.memory_space<vmem>>, %arg2: memref<56x150xf32, #tpu.memory_space<vmem>>, %arg3: memref<56x150xf32, #tpu.memory_space<vmem>>, %arg4: memref<56x150xf32, #tpu.memory_space<vmem>>, %arg5: memref<150x128xf32, #tpu.memory_space<vmem>>, %arg6: memref<1x128xf32, #tpu.memory_space<vmem>>, %arg7: memref<56x128xf32, #tpu.memory_space<vmem>>) attributes {dimension_semantics = [#tpu.dimension_semantics<parallel>], iteration_bounds = array<i64: 1>, scalar_prefetch = 0 : i64, scratch_operands = 0 : i64, tpu.core_type = #tpu.core_type<tc>, window_params = [{transform_indices = @transform_0, window_bounds = array<i64: 56, 150>}, {transform_indices = @transform_1, window_bounds = array<i64: 56, 150>}, {transform_indices = @transform_2, window_bounds = array<i64: 56, 150>}, {transform_indices = @transform_3, window_bounds = array<i64: 56, 150>}, {pipeline_mode = #tpu.pipeline_mode<synchronous>, transform_indices = @transform_4, window_bounds = array<i64: 150, 128>}, {pipeline_mode = #tpu.pipeline_mode<synchronous>, transform_indices = @transform_5, window_bounds = array<i64: 1, 128>}, {transform_indices = @transform_6, window_bounds = array<i64: 56, 128>}]} {
    %c0 = arith.constant 0 : index
    %c0_0 = arith.constant 0 : index
    %0 = vector.load %arg5[%c0, %c0_0] : memref<150x128xf32, #tpu.memory_space<vmem>>, vector<150x128xf32>
    %c0_1 = arith.constant 0 : index
    %c0_2 = arith.constant 0 : index
    %1 = vector.load %arg1[%c0_1, %c0_2] : memref<56x150xf32, #tpu.memory_space<vmem>>, vector<56x150xf32>
    %cst = arith.constant dense<0.000000e+00> : vector<56x128xf32>
    %2 = tpu.matmul %1, %0, %cst {dimension_numbers = #tpu.dot_dimension_numbers<[1], [0], [0], [1], [0, 0, 1, 1], [], []>} : vector<56x150xf32>, vector<150x128xf32>, vector<56x128xf32> -> vector<56x128xf32>
    %c0_3 = arith.constant 0 : index
    %c0_4 = arith.constant 0 : index
    %3 = vector.load %arg2[%c0_3, %c0_4] : memref<56x150xf32, #tpu.memory_space<vmem>>, vector<56x150xf32>
    %cst_5 = arith.constant dense<0.000000e+00> : vector<56x128xf32>
    %4 = tpu.matmul %3, %0, %cst_5 {dimension_numbers = #tpu.dot_dimension_numbers<[1], [0], [0], [1], [0, 0, 1, 1], [], []>} : vector<56x150xf32>, vector<150x128xf32>, vector<56x128xf32> -> vector<56x128xf32>
    %5 = arith.maximumf %2, %4 : vector<56x128xf32>
    %c0_6 = arith.constant 0 : index
    %c0_7 = arith.constant 0 : index
    %6 = vector.load %arg3[%c0_6, %c0_7] : memref<56x150xf32, #tpu.memory_space<vmem>>, vector<56x150xf32>
    %cst_8 = arith.constant dense<0.000000e+00> : vector<56x128xf32>
    %7 = tpu.matmul %6, %0, %cst_8 {dimension_numbers = #tpu.dot_dimension_numbers<[1], [0], [0], [1], [0, 0, 1, 1], [], []>} : vector<56x150xf32>, vector<150x128xf32>, vector<56x128xf32> -> vector<56x128xf32>
    %8 = arith.maximumf %5, %7 : vector<56x128xf32>
    %c0_9 = arith.constant 0 : index
    %c0_10 = arith.constant 0 : index
    %9 = vector.load %arg4[%c0_9, %c0_10] : memref<56x150xf32, #tpu.memory_space<vmem>>, vector<56x150xf32>
    %cst_11 = arith.constant dense<0.000000e+00> : vector<56x128xf32>
    %10 = tpu.matmul %9, %0, %cst_11 {dimension_numbers = #tpu.dot_dimension_numbers<[1], [0], [0], [1], [0, 0, 1, 1], [], []>} : vector<56x150xf32>, vector<150x128xf32>, vector<56x128xf32> -> vector<56x128xf32>
    %11 = arith.maximumf %8, %10 : vector<56x128xf32>
    %c0_12 = arith.constant 0 : index
    %c0_13 = arith.constant 0 : index
    %12 = vector.load %arg6[%c0_12, %c0_13] : memref<1x128xf32, #tpu.memory_space<vmem>>, vector<1x128xf32>
    %13 = vector.broadcast %12 : vector<1x128xf32> to vector<56x128xf32>
    %14 = arith.addf %11, %13 : vector<56x128xf32>
    %cst_14 = arith.constant 0.000000e+00 : f32
    %15 = vector.broadcast %cst_14 : f32 to vector<56x128xf32>
    %16 = arith.maximumf %14, %15 : vector<56x128xf32>
    %c0_15 = arith.constant 0 : index
    %c0_16 = arith.constant 0 : index
    %17 = vector.load %arg7[%c0_15, %c0_16] : memref<56x128xf32, #tpu.memory_space<vmem>>, vector<56x128xf32>
    tpu.vector_store %arg7[%c0_15, %c0_16], %16 {strides = array<i32>} : memref<56x128xf32, #tpu.memory_space<vmem>>, vector<56x128xf32>,
    return
  }
  func.func @transform_0(%arg0: i32) -> (i32, i32) {
    %c0_i32 = arith.constant 0 : i32
    %c0_i32_0 = arith.constant 0 : i32
    return %arg0, %c0_i32 : i32, i32
  }
  func.func @transform_1(%arg0: i32) -> (i32, i32) {
    %c0_i32 = arith.constant 0 : i32
    %c0_i32_0 = arith.constant 0 : i32
    return %arg0, %c0_i32 : i32, i32
  }
  func.func @transform_2(%arg0: i32) -> (i32, i32) {
    %c0_i32 = arith.constant 0 : i32
    %c0_i32_0 = arith.constant 0 : i32
    return %arg0, %c0_i32 : i32, i32
  }
  func.func @transform_3(%arg0: i32) -> (i32, i32) {
    %c0_i32 = arith.constant 0 : i32
    %c0_i32_0 = arith.constant 0 : i32
    return %arg0, %c0_i32 : i32, i32
  }
  func.func @transform_4(%arg0: i32) -> (i32, i32) {
    %c0_i32 = arith.constant 0 : i32
    %c0_i32_0 = arith.constant 0 : i32
    %c0_i32_1 = arith.constant 0 : i32
    return %c0_i32, %c0_i32_0 : i32, i32
  }
  func.func @transform_5(%arg0: i32) -> (i32, i32) {
    %c0_i32 = arith.constant 0 : i32
    %c0_i32_0 = arith.constant 0 : i32
    %c0_i32_1 = arith.constant 0 : i32
    return %c0_i32, %c0_i32_0 : i32, i32
  }
  func.func @transform_6(%arg0: i32) -> (i32, i32) {
    %c0_i32 = arith.constant 0 : i32
    %c0_i32_0 = arith.constant 0 : i32
    return %arg0, %c0_i32 : i32, i32
  }
}

module attributes {stable_mosaic.version = 11 : i64} {
  func.func @_fc_chain_kernel(%arg0: i32, %arg1: memref<8x400xf32, #tpu.memory_space<vmem>>, %arg2: memref<400x128xf32, #tpu.memory_space<vmem>>, %arg3: memref<1x128xf32, #tpu.memory_space<vmem>>, %arg4: memref<128x128xf32, #tpu.memory_space<vmem>>, %arg5: memref<1x128xf32, #tpu.memory_space<vmem>>, %arg6: memref<128x128xf32, #tpu.memory_space<vmem>>, %arg7: memref<1x128xf32, #tpu.memory_space<vmem>>, %arg8: memref<8x128xf32, #tpu.memory_space<vmem>>) attributes {dimension_semantics = [#tpu.dimension_semantics<parallel>], iteration_bounds = array<i64: 1>, scalar_prefetch = 0 : i64, scratch_operands = 0 : i64, tpu.core_type = #tpu.core_type<tc>, window_params = [{transform_indices = @transform_0, window_bounds = array<i64: 8, 400>}, {pipeline_mode = #tpu.pipeline_mode<synchronous>, transform_indices = @transform_1, window_bounds = array<i64: 400, 128>}, {pipeline_mode = #tpu.pipeline_mode<synchronous>, transform_indices = @transform_2, window_bounds = array<i64: 1, 128>}, {pipeline_mode = #tpu.pipeline_mode<synchronous>, transform_indices = @transform_3, window_bounds = array<i64: 128, 128>}, {pipeline_mode = #tpu.pipeline_mode<synchronous>, transform_indices = @transform_4, window_bounds = array<i64: 1, 128>}, {pipeline_mode = #tpu.pipeline_mode<synchronous>, transform_indices = @transform_5, window_bounds = array<i64: 128, 128>}, {pipeline_mode = #tpu.pipeline_mode<synchronous>, transform_indices = @transform_6, window_bounds = array<i64: 1, 128>}, {transform_indices = @transform_7, window_bounds = array<i64: 8, 128>}]} {
    %c0 = arith.constant 0 : index
    %c0_0 = arith.constant 0 : index
    %0 = vector.load %arg1[%c0, %c0_0] : memref<8x400xf32, #tpu.memory_space<vmem>>, vector<8x400xf32>
    %c0_1 = arith.constant 0 : index
    %c0_2 = arith.constant 0 : index
    %1 = vector.load %arg2[%c0_1, %c0_2] : memref<400x128xf32, #tpu.memory_space<vmem>>, vector<400x128xf32>
    %cst = arith.constant dense<0.000000e+00> : vector<8x128xf32>
    %2 = tpu.matmul %0, %1, %cst {dimension_numbers = #tpu.dot_dimension_numbers<[1], [0], [0], [1], [0, 0, 1, 1], [], []>} : vector<8x400xf32>, vector<400x128xf32>, vector<8x128xf32> -> vector<8x128xf32>
    %c0_3 = arith.constant 0 : index
    %c0_4 = arith.constant 0 : index
    %3 = vector.load %arg3[%c0_3, %c0_4] : memref<1x128xf32, #tpu.memory_space<vmem>>, vector<1x128xf32>
    %4 = vector.broadcast %3 : vector<1x128xf32> to vector<8x128xf32>
    %5 = arith.addf %2, %4 : vector<8x128xf32>
    %cst_5 = arith.constant 0.000000e+00 : f32
    %6 = vector.broadcast %cst_5 : f32 to vector<8x128xf32>
    %7 = arith.maximumf %5, %6 : vector<8x128xf32>
    %c0_6 = arith.constant 0 : index
    %c0_7 = arith.constant 0 : index
    %8 = vector.load %arg4[%c0_6, %c0_7] : memref<128x128xf32, #tpu.memory_space<vmem>>, vector<128x128xf32>
    %cst_8 = arith.constant dense<0.000000e+00> : vector<8x128xf32>
    %9 = tpu.matmul %7, %8, %cst_8 {dimension_numbers = #tpu.dot_dimension_numbers<[1], [0], [0], [1], [0, 0, 1, 1], [], []>} : vector<8x128xf32>, vector<128x128xf32>, vector<8x128xf32> -> vector<8x128xf32>
    %c0_9 = arith.constant 0 : index
    %c0_10 = arith.constant 0 : index
    %10 = vector.load %arg5[%c0_9, %c0_10] : memref<1x128xf32, #tpu.memory_space<vmem>>, vector<1x128xf32>
    %11 = vector.broadcast %10 : vector<1x128xf32> to vector<8x128xf32>
    %12 = arith.addf %9, %11 : vector<8x128xf32>
    %cst_11 = arith.constant 0.000000e+00 : f32
    %13 = vector.broadcast %cst_11 : f32 to vector<8x128xf32>
    %14 = arith.maximumf %12, %13 : vector<8x128xf32>
    %c0_12 = arith.constant 0 : index
    %c0_13 = arith.constant 0 : index
    %15 = vector.load %arg6[%c0_12, %c0_13] : memref<128x128xf32, #tpu.memory_space<vmem>>, vector<128x128xf32>
    %cst_14 = arith.constant dense<0.000000e+00> : vector<8x128xf32>
    %16 = tpu.matmul %14, %15, %cst_14 {dimension_numbers = #tpu.dot_dimension_numbers<[1], [0], [0], [1], [0, 0, 1, 1], [], []>} : vector<8x128xf32>, vector<128x128xf32>, vector<8x128xf32> -> vector<8x128xf32>
    %c0_15 = arith.constant 0 : index
    %c0_16 = arith.constant 0 : index
    %17 = vector.load %arg7[%c0_15, %c0_16] : memref<1x128xf32, #tpu.memory_space<vmem>>, vector<1x128xf32>
    %18 = vector.broadcast %17 : vector<1x128xf32> to vector<8x128xf32>
    %19 = arith.addf %16, %18 : vector<8x128xf32>
    %c0_17 = arith.constant 0 : index
    %c0_18 = arith.constant 0 : index
    %20 = vector.load %arg8[%c0_17, %c0_18] : memref<8x128xf32, #tpu.memory_space<vmem>>, vector<8x128xf32>
    tpu.vector_store %arg8[%c0_17, %c0_18], %19 {strides = array<i32>} : memref<8x128xf32, #tpu.memory_space<vmem>>, vector<8x128xf32>,
    return
  }
  func.func @transform_0(%arg0: i32) -> (i32, i32) {
    %c0_i32 = arith.constant 0 : i32
    %c0_i32_0 = arith.constant 0 : i32
    return %arg0, %c0_i32 : i32, i32
  }
  func.func @transform_1(%arg0: i32) -> (i32, i32) {
    %c0_i32 = arith.constant 0 : i32
    %c0_i32_0 = arith.constant 0 : i32
    %c0_i32_1 = arith.constant 0 : i32
    return %c0_i32, %c0_i32_0 : i32, i32
  }
  func.func @transform_2(%arg0: i32) -> (i32, i32) {
    %c0_i32 = arith.constant 0 : i32
    %c0_i32_0 = arith.constant 0 : i32
    %c0_i32_1 = arith.constant 0 : i32
    return %c0_i32, %c0_i32_0 : i32, i32
  }
  func.func @transform_3(%arg0: i32) -> (i32, i32) {
    %c0_i32 = arith.constant 0 : i32
    %c0_i32_0 = arith.constant 0 : i32
    %c0_i32_1 = arith.constant 0 : i32
    return %c0_i32, %c0_i32_0 : i32, i32
  }
  func.func @transform_4(%arg0: i32) -> (i32, i32) {
    %c0_i32 = arith.constant 0 : i32
    %c0_i32_0 = arith.constant 0 : i32
    %c0_i32_1 = arith.constant 0 : i32
    return %c0_i32, %c0_i32_0 : i32, i32
  }
  func.func @transform_5(%arg0: i32) -> (i32, i32) {
    %c0_i32 = arith.constant 0 : i32
    %c0_i32_0 = arith.constant 0 : i32
    %c0_i32_1 = arith.constant 0 : i32
    return %c0_i32, %c0_i32_0 : i32, i32
  }
  func.func @transform_6(%arg0: i32) -> (i32, i32) {
    %c0_i32 = arith.constant 0 : i32
    %c0_i32_0 = arith.constant 0 : i32
    %c0_i32_1 = arith.constant 0 : i32
    return %c0_i32, %c0_i32_0 : i32, i32
  }
  func.func @transform_7(%arg0: i32) -> (i32, i32) {
    %c0_i32 = arith.constant 0 : i32
    %c0_i32_0 = arith.constant 0 : i32
    return %arg0, %c0_i32 : i32, i32
  }
}

</mosaic_0001>

<llo_original>
// kernel: net_forward.3
$region0: #{net_forward.3}
  #allocation0 [shape = 'u32[]', space=smem, size = 0x4, offset = 0x4, fixed_abs, tag = 'smem constant byte address 0x4 - core index']
  #allocation1 [shape = 'u32[144,128]{1,0:T(1,128)}', space=vmem, size = 0x12000, scoped, tag = 'internal scratch']
  %s0 = inlined_call_operand.vmem [shape: f32[392,75], index: 0, kind: input, shape index: {}]
  %s1 = inlined_call_operand.vmem [shape: f32[392,75], index: 1, kind: input, shape index: {}]
  %s2 = inlined_call_operand.vmem [shape: f32[392,75], index: 2, kind: input, shape index: {}]
  %s3 = inlined_call_operand.vmem [shape: f32[392,75], index: 3, kind: input, shape index: {}]
  %s4 = inlined_call_operand.vmem [shape: f32[75,128], index: 4, kind: input, shape index: {}]
  %s5 = inlined_call_operand.vmem [shape: f32[1,128], index: 5, kind: input, shape index: {}]
  %s6 = inlined_call_operand.vmem [shape: f32[392,128], index: 6, kind: output, shape index: {}]
  %s7 = sld [smem:[#allocation0]]
  $region34: #{net_forward.3} parent=0
    _
  %s9 = ssub.s32 1, %s7
  %s10 = scalar_select 0, %s9, %s7
  // Predicated region
  $region2: #{net_forward.3} parent=0 // pred_check
    _
  $region3: #{net_forward.3} parent=0 // pred_check_branch
    %12 = sbr.rel (0) target = $region5
  $region4: #{net_forward.3} parent=0 // pred_region
    _
  $region5: #{net_forward.3} parent=0 // pred_fallthru
    _
  // Predicated region
  $region6: #{net_forward.3} parent=0 // pred_check
    _
  $region7: #{net_forward.3} parent=0 // pred_check_branch
    %14 = sbr.rel (0) target = $region9
  $region8: #{net_forward.3} parent=0 // pred_region
    _
  $region9: #{net_forward.3} parent=0 // pred_fallthru
    _
  // Predicated region
  $region10: #{net_forward.3} parent=0 // pred_check
    _
  $region11: #{net_forward.3} parent=0 // pred_check_branch
    %16 = sbr.rel (0) target = $region13
  $region12: #{net_forward.3} parent=0 // pred_region
    _
  $region13: #{net_forward.3} parent=0 // pred_fallthru
    _
  // Predicated region
  $region14: #{net_forward.3} parent=0 // pred_check
    _
  $region15: #{net_forward.3} parent=0 // pred_check_branch
    %18 = sbr.rel (0) target = $region17
  $region16: #{net_forward.3} parent=0 // pred_region
    _
  $region17: #{net_forward.3} parent=0 // pred_fallthru
    _
  // Predicated region
  $region18: #{net_forward.3} parent=0 // pred_check
    _
  $region19: #{net_forward.3} parent=0 // pred_check_branch
    %20 = sbr.rel (0) target = $region21
  $region20: #{net_forward.3} parent=0 // pred_region
    _
  $region21: #{net_forward.3} parent=0 // pred_fallthru
    _
  // Predicated region
  $region22: #{net_forward.3} parent=0 // pred_check
    _
  $region23: #{net_forward.3} parent=0 // pred_check_branch
    %22 = sbr.rel (0) target = $region25
  $region24: #{net_forward.3} parent=0 // pred_region
    _
  $region25: #{net_forward.3} parent=0 // pred_fallthru
    _
  %v23 = vld [vmem:[%s4] sm:$0xff]
  %v24 = vld [vmem:[%s4 + $0x8] sm:$0xff]
  %v25 = vld [vmem:[%s4 + $0x10] sm:$0xff]
  %v26 = vld [vmem:[%s4 + $0x18] sm:$0xff]
  %v27 = vld [vmem:[%s4 + $0x20] sm:$0xff]
  %v28 = vld [vmem:[%s4 + $0x28] sm:$0xff]
  %v29 = vld [vmem:[%s4 + $0x30] sm:$0xff]
  %v30 = vld [vmem:[%s4 + $0x38] sm:$0xff]
  %v31 = vld [vmem:[%s4 + $0x40] sm:$0xff]
  %v32 = vld [vmem:[%s4 + $0x48] sm:$0x7]
  %v33 = vld [vmem:[%s0] sm:$0xff]
  %v34 = vld [vmem:[%s0 + $0x8] sm:$0xff]
  %v35 = vld [vmem:[%s0 + $0x10] sm:$0xff]
  %v36 = vld [vmem:[%s0 + $0x18] sm:$0xff]
  %v37 = vld [vmem:[%s0 + $0x20] sm:$0xff]
  %v38 = vld [vmem:[%s0 + $0x28] sm:$0xff]
  %v39 = vld [vmem:[%s0 + $0x30] sm:$0xff]
  %v40 = vld [vmem:[%s0 + $0x38] sm:$0xff]
  %v41 = vld [vmem:[%s0 + $0x40] sm:$0xff]
  %v42 = vld [vmem:[%s0 + $0x48] sm:$0xff]
  %v43 = vld [vmem:[%s0 + $0x50] sm:$0xff]
  %v44 = vld [vmem:[%s0 + $0x58] sm:$0xff]
  %v45 = vld [vmem:[%s0 + $0x60] sm:$0xff]
  %v46 = vld [vmem:[%s0 + $0x68] sm:$0xff]
  %v47 = vld [vmem:[%s0 + $0x70] sm:$0xff]
  %v48 = vld [vmem:[%s0 + $0x78] sm:$0xff]
  %v49 = vld [vmem:[%s0 + $0x80] sm:$0xff]
  %v50 = vld [vmem:[%s0 + $0x88] sm:$0xff]
  %v51 = vld [vmem:[%s0 + $0x90] sm:$0xff]
  %v52 = vld [vmem:[%s0 + $0x98] sm:$0xff]
  %v53 = vld [vmem:[%s0 + $0xa0] sm:$0xff]
  %v54 = vld [vmem:[%s0 + $0xa8] sm:$0xff]
  %v55 = vld [vmem:[%s0 + $0xb0] sm:$0xff]
  %v56 = vld [vmem:[%s0 + $0xb8] sm:$0xff]
  %v57 = vld [vmem:[%s0 + $0xc0] sm:$0xff]
  %v58 = vld [vmem:[%s0 + $0xc8] sm:$0xff]
  %v59 = vld [vmem:[%s0 + $0xd0] sm:$0xff]
  %v60 = vld [vmem:[%s0 + $0xd8] sm:$0xff]
  %v61 = vld [vmem:[%s0 + $0xe0] sm:$0xff]
  %v62 = vld [vmem:[%s0 + $0xe8] sm:$0xff]
  %v63 = vld [vmem:[%s0 + $0xf0] sm:$0xff]
  %v64 = vld [vmem:[%s0 + $0xf8] sm:$0xff]
  %v65 = vld [vmem:[%s0 + $0x100] sm:$0xff]
  %v66 = vld [vmem:[%s0 + $0x108] sm:$0xff]
  %v67 = vld [vmem:[%s0 + $0x110] sm:$0xff]
  %v68 = vld [vmem:[%s0 + $0x118] sm:$0xff]
  %v69 = vld [vmem:[%s0 + $0x120] sm:$0xff]
  %v70 = vld [vmem:[%s0 + $0x128] sm:$0xff]
  %v71 = vld [vmem:[%s0 + $0x130] sm:$0xff]
  %v72 = vld [vmem:[%s0 + $0x138] sm:$0xff]
  %v73 = vld [vmem:[%s0 + $0x140] sm:$0xff]
  %v74 = vld [vmem:[%s0 + $0x148] sm:$0xff]
  %v75 = vld [vmem:[%s0 + $0x150] sm:$0xff]
  %v76 = vld [vmem:[%s0 + $0x158] sm:$0xff]
  %v77 = vld [vmem:[%s0 + $0x160] sm:$0xff]
  %v78 = vld [vmem:[%s0 + $0x168] sm:$0xff]
  %v79 = vld [vmem:[%s0 + $0x170] sm:$0xff]
  %v80 = vld [vmem:[%s0 + $0x178] sm:$0xff]
  %v81 = vld [vmem:[%s0 + $0x180] sm:$0xff]
  %vm82 = vcmask 613376
  %v84 = vsel %vm82, %v33, 0
  %v87 = vsel %vm82, %v34, 0
  %v90 = vsel %vm82, %v35, 0
  %v93 = vsel %vm82, %v36, 0
  %v96 = vsel %vm82, %v37, 0
  %v99 = vsel %vm82, %v38, 0
  %v102 = vsel %vm82, %v39, 0
  %v105 = vsel %vm82, %v40, 0
  %v108 = vsel %vm82, %v41, 0
  %v111 = vsel %vm82, %v42, 0
  %v114 = vsel %vm82, %v43, 0
  %v117 = vsel %vm82, %v44, 0
  %v120 = vsel %vm82, %v45, 0
  %v123 = vsel %vm82, %v46, 0
  %v126 = vsel %vm82, %v47, 0
  %v129 = vsel %vm82, %v48, 0
  %v132 = vsel %vm82, %v49, 0
  %v135 = vsel %vm82, %v50, 0
  %v138 = vsel %vm82, %v51, 0
  %v141 = vsel %vm82, %v52, 0
  %v144 = vsel %vm82, %v53, 0
  %v147 = vsel %vm82, %v54, 0
  %v150 = vsel %vm82, %v55, 0
  %v153 = vsel %vm82, %v56, 0
  %v156 = vsel %vm82, %v57, 0
  %v159 = vsel %vm82, %v58, 0
  %v162 = vsel %vm82, %v59, 0
  %v165 = vsel %vm82, %v60, 0
  %v168 = vsel %vm82, %v61, 0
  %v171 = vsel %vm82, %v62, 0
  %v174 = vsel %vm82, %v63, 0
  %v177 = vsel %vm82, %v64, 0
  %v180 = vsel %vm82, %v65, 0
  %v183 = vsel %vm82, %v66, 0
  %v186 = vsel %vm82, %v67, 0
  %v189 = vsel %vm82, %v68, 0
  %v192 = vsel %vm82, %v69, 0
  %v195 = vsel %vm82, %v70, 0
  %v198 = vsel %vm82, %v71, 0
  %v201 = vsel %vm82, %v72, 0
  %v204 = vsel %vm82, %v73, 0
  %v207 = vsel %vm82, %v74, 0
  %v210 = vsel %vm82, %v75, 0
  %v213 = vsel %vm82, %v76, 0
  %v216 = vsel %vm82, %v77, 0
  %v219 = vsel %vm82, %v78, 0
  %v222 = vsel %vm82, %v79, 0
  %v225 = vsel %vm82, %v80, 0
  %v228 = vsel %vm82, %v81, 0
  %vm230 = vcmask 1042432
  %v232 = vsel %vm230, %v32, 0
  %234 = vmatprep.subr.mxu0 0.0
  %235 = vmatpush1.msra.mxu0 %v23
  %236 = vmatprep.subr.mxu0 0.0
  %237 = vmatpush1.msra.mxu0 %v24
  %238 = vmatprep.subr.mxu0 0.0
  %239 = vmatpush1.msra.mxu0 %v25
  %240 = vmatprep.subr.mxu0 0.0
  %241 = vmatpush1.msra.mxu0 %v26
  %242 = vmatprep.subr.mxu0 0.0
  %243 = vmatpush1.msra.mxu0 %v27
  %244 = vmatprep.subr.mxu0 0.0
  %245 = vmatpush1.msra.mxu0 %v28
  %246 = vmatprep.subr.mxu0 0.0
  %247 = vmatpush1.msra.mxu0 %v29
  %248 = vmatprep.subr.mxu0 0.0
  %249 = vmatpush1.msra.mxu0 %v30
  %250 = vmatprep.subr.mxu0 0.0
  %251 = vmatpush1.msra.mxu0 %v31
  %252 = vmatprep.subr.mxu0 0.0
  %253 = vmatpush1.msra.mxu0 %v232
  %254 = vmatprep.subr.mxu0 0.0
  %255 = vmatpush1.msra.mxu0 0.0
  %256 = vmatprep.subr.mxu0 0.0
  %257 = vmatpush1.msra.mxu0 0.0
  %258 = vmatprep.subr.mxu0 0.0
  %259 = vmatpush1.msra.mxu0 0.0
  %260 = vmatprep.subr.mxu0 0.0
  %261 = vmatpush1.msra.mxu0 0.0
  %262 = vmatprep.subr.mxu0 0.0
  %263 = vmatpush1.msra.mxu0 0.0
  %264 = vmatprep.subr.mxu0 0.0
  %265 = vmatpush1.msra.mxu0 0.0
  %266 = vmatprep.subr.mxu0 0.0
  %267 = vmatpush1.msra.mxu0 0.0
  %268 = vmatprep.subr.mxu0 0.0
  %269 = vmatpush1.msra.mxu0 0.0
  %270 = vmatprep.subr.mxu0 0.0
  %271 = vmatpush1.msra.mxu0 0.0
  %272 = vmatprep.subr.mxu0 0.0
  %273 = vmatpush1.msra.mxu0 0.0
  %274 = vmatprep.subr.mxu0 0.0
  %275 = vmatpush1.msra.mxu0 0.0
  %276 = vmatprep.subr.mxu0 0.0
  %277 = vmatpush1.msra.mxu0 0.0
  %278 = vmatprep.subr.mxu0 0.0
  %279 = vmatpush1.msra.mxu0 0.0
  %280 = vmatprep.subr.mxu0 0.0
  %281 = vmatpush1.msra.mxu0 0.0
  %282 = vmatprep.subr.mxu0 0.0
  %283 = vmatpush1.msra.mxu0 0.0
  %284 = vmatprep.subr.mxu0 0.0
  %285 = vmatpush1.msra.mxu0 0.0
  %286 = vmatprep.subr.mxu0 0.0
  %287 = vmatpush1.msra.mxu0 0.0
  %288 = vmatprep.subr.mxu0 0.0
  %289 = vmatpush1.msra.mxu0 0.0
  %290 = vmatprep.subr.mxu0 0.0
  %291 = vmatpush1.msra.mxu0 0.0
  %292 = vmatprep.subr.mxu0 0.0
  %293 = vmatpush1.msra.mxu0 0.0
  %294 = vmatprep.subr.mxu0 0.0
  %295 = vmatpush1.msra.mxu0 0.0
  %296 = vmatprep.subr.mxu0 0.0
  %297 = vmatpush1.msra.mxu0 0.0
  %298 = vmatprep.mubr.f32.mxu0 0.0
  %299 = vmatmul.mubr.f32.gmra.mrb[0].mxu0 %v84
  %v300 = vpop.f32.mrb[0].mxu0
  %v301 = vadd.f32 0.0, %v300
  %v302 = vpop.f32.mrb[0].mxu0
  %303 = vmatprep.mubr.f32.mxu0 0.0
  %304 = vmatmul.mubr.f32.gmra.mrb[0].mxu0 %v87
  %v305 = vpop.f32.mrb[0].mxu0
  %v306 = vadd.f32 0.0, %v305
  %v307 = vpop.f32.mrb[0].mxu0
  %308 = vmatprep.mubr.f32.mxu0 0.0
  %309 = vmatmul.mubr.f32.gmra.mrb[0].mxu0 %v90
  %v310 = vpop.f32.mrb[0].mxu0
  %v311 = vadd.f32 0.0, %v310
  %v312 = vpop.f32.mrb[0].mxu0
  %313 = vmatprep.mubr.f32.mxu0 0.0
  %314 = vmatmul.mubr.f32.gmra.mrb[0].mxu0 %v93
  %v315 = vpop.f32.mrb[0].mxu0
  %v316 = vadd.f32 0.0, %v315
  %v317 = vpop.f32.mrb[0].mxu0
  %318 = vmatprep.mubr.f32.mxu0 0.0
  %319 = vmatmul.mubr.f32.gmra.mrb[0].mxu0 %v96
  %v320 = vpop.f32.mrb[0].mxu0
  %v321 = vadd.f32 0.0, %v320
  %v322 = vpop.f32.mrb[0].mxu0
  %323 = vmatprep.mubr.f32.mxu0 0.0
  %324 = vmatmul.mubr.f32.gmra.mrb[0].mxu0 %v99
  %v325 = vpop.f32.mrb[0].mxu0
  %v326 = vadd.f32 0.0, %v325
  %v327 = vpop.f32.mrb[0].mxu0
  %328 = vmatprep.mubr.f32.mxu0 0.0
  %329 = vmatmul.mubr.f32.gmra.mrb[0].mxu0 %v102
  %v330 = vpop.f32.mrb[0].mxu0
  %v331 = vadd.f32 0.0, %v330
  %v332 = vpop.f32.mrb[0].mxu0
  %333 = vmatprep.mubr.f32.mxu0 0.0
  %334 = vmatmul.mubr.f32.gmra.mrb[0].mxu0 %v105
  %v335 = vpop.f32.mrb[0].mxu0
  %v336 = vadd.f32 0.0, %v335
  %v337 = vpop.f32.mrb[0].mxu0
  %338 = vmatprep.mubr.f32.mxu0 0.0
  %339 = vmatmul.mubr.f32.gmra.mrb[0].mxu0 %v108
  %v340 = vpop.f32.mrb[0].mxu0
  %v341 = vadd.f32 0.0, %v340
  %v342 = vpop.f32.mrb[0].mxu0
  %343 = vmatprep.mubr.f32.mxu0 0.0
  %344 = vmatmul.mubr.f32.gmra.mrb[0].mxu0 %v111
  %v345 = vpop.f32.mrb[0].mxu0
  %v346 = vadd.f32 0.0, %v345
  %v347 = vpop.f32.mrb[0].mxu0
  %348 = vmatprep.mubr.f32.mxu0 0.0
  %349 = vmatmul.mubr.f32.gmra.mrb[0].mxu0 %v114
  %v350 = vpop.f32.mrb[0].mxu0
  %v351 = vadd.f32 0.0, %v350
  %v352 = vpop.f32.mrb[0].mxu0
  %353 = vmatprep.mubr.f32.mxu0 0.0
  %354 = vmatmul.mubr.f32.gmra.mrb[0].mxu0 %v117
  %v355 = vpop.f32.mrb[0].mxu0
  %v356 = vadd.f32 0.0, %v355
  %v357 = vpop.f32.mrb[0].mxu0
  %358 = vmatprep.mubr.f32.mxu0 0.0
  %359 = vmatmul.mubr.f32.gmra.mrb[0].mxu0 %v120
  %v360 = vpop.f32.mrb[0].mxu0
  %v361 = vadd.f32 0.0, %v360
  %v362 = vpop.f32.mrb[0].mxu0
  %363 = vmatprep.mubr.f32.mxu0 0.0
  %364 = vmatmul.mubr.f32.gmra.mrb[0].mxu0 %v123
  %v365 = vpop.f32.mrb[0].mxu0
  %v366 = vadd.f32 0.0, %v365
  %v367 = vpop.f32.mrb[0].mxu0
  %368 = vmatprep.mubr.f32.mxu0 0.0
  %369 = vmatmul.mubr.f32.gmra.mrb[0].mxu0 %v126
  %v370 = vpop.f32.mrb[0].mxu0
  %v371 = vadd.f32 0.0, %v370
  %v372 = vpop.f32.mrb[0].mxu0
  %373 = vmatprep.mubr.f32.mxu0 0.0
  %374 = vmatmul.mubr.f32.gmra.mrb[0].mxu0 %v129
  %v375 = vpop.f32.mrb[0].mxu0
  %v376 = vadd.f32 0.0, %v375
  %v377 = vpop.f32.mrb[0].mxu0
  %378 = vmatprep.mubr.f32.mxu0 0.0
  %379 = vmatmul.mubr.f32.gmra.mrb[0].mxu0 %v132
  %v380 = vpop.f32.mrb[0].mxu0
  %v381 = vadd.f32 0.0, %v380
  %v382 = vpop.f32.mrb[0].mxu0
  %383 = vmatprep.mubr.f32.mxu0 0.0
  %384 = vmatmul.mubr.f32.gmra.mrb[0].mxu0 %v135
  %v385 = vpop.f32.mrb[0].mxu0
  %v386 = vadd.f32 0.0, %v385
  %v387 = vpop.f32.mrb[0].mxu0
  %388 = vmatprep.mubr.f32.mxu0 0.0
  %389 = vmatmul.mubr.f32.gmra.mrb[0].mxu0 %v138
  %v390 = vpop.f32.mrb[0].mxu0
  %v391 = vadd.f32 0.0, %v390
  %v392 = vpop.f32.mrb[0].mxu0
  %393 = vmatprep.mubr.f32.mxu0 0.0
  %394 = vmatmul.mubr.f32.gmra.mrb[0].mxu0 %v141
  %v395 = vpop.f32.mrb[0].mxu0
  %v396 = vadd.f32 0.0, %v395
  %v397 = vpop.f32.mrb[0].mxu0
  %398 = vmatprep.mubr.f32.mxu0 0.0
  %399 = vmatmul.mubr.f32.gmra.mrb[0].mxu0 %v144
  %v400 = vpop.f32.mrb[0].mxu0
  %v401 = vadd.f32 0.0, %v400
  %v402 = vpop.f32.mrb[0].mxu0
  %403 = vmatprep.mubr.f32.mxu0 0.0
  %404 = vmatmul.mubr.f32.gmra.mrb[0].mxu0 %v147
  %v405 = vpop.f32.mrb[0].mxu0
  %v406 = vadd.f32 0.0, %v405
  %v407 = vpop.f32.mrb[0].mxu0
  %408 = vmatprep.mubr.f32.mxu0 0.0
  %409 = vmatmul.mubr.f32.gmra.mrb[0].mxu0 %v150
  %v410 = vpop.f32.mrb[0].mxu0
  %v411 = vadd.f32 0.0, %v410
  %v412 = vpop.f32.mrb[0].mxu0
  %413 = vmatprep.mubr.f32.mxu0 0.0
  %414 = vmatmul.mubr.f32.gmra.mrb[0].mxu0 %v153
  %v415 = vpop.f32.mrb[0].mxu0
  %v416 = vadd.f32 0.0, %v415
  %v417 = vpop.f32.mrb[0].mxu0
  %418 = vmatprep.mubr.f32.mxu0 0.0
  %419 = vmatmul.mubr.f32.gmra.mrb[0].mxu0 %v156
  %v420 = vpop.f32.mrb[0].mxu0
  %v421 = vadd.f32 0.0, %v420
  %v422 = vpop.f32.mrb[0].mxu0
  %423 = vmatprep.mubr.f32.mxu0 0.0
  %424 = vmatmul.mubr.f32.gmra.mrb[0].mxu0 %v159
  %v425 = vpop.f32.mrb[0].mxu0
  %v426 = vadd.f32 0.0, %v425
  %v427 = vpop.f32.mrb[0].mxu0
  %428 = vmatprep.mubr.f32.mxu0 0.0
  %429 = vmatmul.mubr.f32.gmra.mrb[0].mxu0 %v162
  %v430 = vpop.f32.mrb[0].mxu0
  %v431 = vadd.f32 0.0, %v430
  %v432 = vpop.f32.mrb[0].mxu0
  %433 = vmatprep.mubr.f32.mxu0 0.0
  %434 = vmatmul.mubr.f32.gmra.mrb[0].mxu0 %v165
  %v435 = vpop.f32.mrb[0].mxu0
  %v436 = vadd.f32 0.0, %v435
  %v437 = vpop.f32.mrb[0].mxu0
  %438 = vmatprep.mubr.f32.mxu0 0.0
  %439 = vmatmul.mubr.f32.gmra.mrb[0].mxu0 %v168
  %v440 = vpop.f32.mrb[0].mxu0
  %v441 = vadd.f32 0.0, %v440
  %v442 = vpop.f32.mrb[0].mxu0
  %443 = vmatprep.mubr.f32.mxu0 0.0
  %444 = vmatmul.mubr.f32.gmra.mrb[0].mxu0 %v171
  %v445 = vpop.f32.mrb[0].mxu0
  %v446 = vadd.f32 0.0, %v445
  %v447 = vpop.f32.mrb[0].mxu0
  %448 = vmatprep.mubr.f32.mxu0 0.0
  %449 = vmatmul.mubr.f32.gmra.mrb[0].mxu0 %v174
  %v450 = vpop.f32.mrb[0].mxu0
  %v451 = vadd.f32 0.0, %v450
  %v452 = vpop.f32.mrb[0].mxu0
  %453 = vmatprep.mubr.f32.mxu0 0.0
  %454 = vmatmul.mubr.f32.gmra.mrb[0].mxu0 %v177
  %v455 = vpop.f32.mrb[0].mxu0
  %v456 = vadd.f32 0.0, %v455
  %v457 = vpop.f32.mrb[0].mxu0
  %458 = vmatprep.mubr.f32.mxu0 0.0
  %459 = vmatmul.mubr.f32.gmra.mrb[0].mxu0 %v180
  %v460 = vpop.f32.mrb[0].mxu0
  %v461 = vadd.f32 0.0, %v460
  %v462 = vpop.f32.mrb[0].mxu0
  %463 = vmatprep.mubr.f32.mxu0 0.0
  %464 = vmatmul.mubr.f32.gmra.mrb[0].mxu0 %v183
  %v465 = vpop.f32.mrb[0].mxu0
  %v466 = vadd.f32 0.0, %v465
  %v467 = vpop.f32.mrb[0].mxu0
  %468 = vmatprep.mubr.f32.mxu0 0.0
  %469 = vmatmul.mubr.f32.gmra.mrb[0].mxu0 %v186
  %v470 = vpop.f32.mrb[0].mxu0
  %v471 = vadd.f32 0.0, %v470
  %v472 = vpop.f32.mrb[0].mxu0
  %473 = vmatprep.mubr.f32.mxu0 0.0
  %474 = vmatmul.mubr.f32.gmra.mrb[0].mxu0 %v189
  %v475 = vpop.f32.mrb[0].mxu0
  %v476 = vadd.f32 0.0, %v475
  %v477 = vpop.f32.mrb[0].mxu0
  %478 = vmatprep.mubr.f32.mxu0 0.0
  %479 = vmatmul.mubr.f32.gmra.mrb[0].mxu0 %v192
  %v480 = vpop.f32.mrb[0].mxu0
  %v481 = vadd.f32 0.0, %v480
  %v482 = vpop.f32.mrb[0].mxu0
  %483 = vmatprep.mubr.f32.mxu0 0.0
  %484 = vmatmul.mubr.f32.gmra.mrb[0].mxu0 %v195
  %v485 = vpop.f32.mrb[0].mxu0
  %v486 = vadd.f32 0.0, %v485
  %v487 = vpop.f32.mrb[0].mxu0
  %488 = vmatprep.mubr.f32.mxu0 0.0
  %489 = vmatmul.mubr.f32.gmra.mrb[0].mxu0 %v198
  %v490 = vpop.f32.mrb[0].mxu0
  %v491 = vadd.f32 0.0, %v490
  %v492 = vpop.f32.mrb[0].mxu0
  %493 = vmatprep.mubr.f32.mxu0 0.0
  %494 = vmatmul.mubr.f32.gmra.mrb[0].mxu0 %v201
  %v495 = vpop.f32.mrb[0].mxu0
  %v496 = vadd.f32 0.0, %v495
  %v497 = vpop.f32.mrb[0].mxu0
  %498 = vmatprep.mubr.f32.mxu0 0.0
  %499 = vmatmul.mubr.f32.gmra.mrb[0].mxu0 %v204
  %v500 = vpop.f32.mrb[0].mxu0
  %v501 = vadd.f32 0.0, %v500
  %v502 = vpop.f32.mrb[0].mxu0
  %503 = vmatprep.mubr.f32.mxu0 0.0
  %504 = vmatmul.mubr.f32.gmra.mrb[0].mxu0 %v207
  %v505 = vpop.f32.mrb[0].mxu0
  %v506 = vadd.f32 0.0, %v505
  %v507 = vpop.f32.mrb[0].mxu0
  %508 = vmatprep.mubr.f32.mxu0 0.0
  %509 = vmatmul.mubr.f32.gmra.mrb[0].mxu0 %v210
  %v510 = vpop.f32.mrb[0].mxu0
  %v511 = vadd.f32 0.0, %v510
  %v512 = vpop.f32.mrb[0].mxu0
  %513 = vmatprep.mubr.f32.mxu0 0.0
  %514 = vmatmul.mubr.f32.gmra.mrb[0].mxu0 %v213
  %v515 = vpop.f32.mrb[0].mxu0
  %v516 = vadd.f32 0.0, %v515
  %v517 = vpop.f32.mrb[0].mxu0
  %518 = vmatprep.mubr.f32.mxu0 0.0
  %519 = vmatmul.mubr.f32.gmra.mrb[0].mxu0 %v216
  %v520 = vpop.f32.mrb[0].mxu0
  %v521 = vadd.f32 0.0, %v520
  %v522 = vpop.f32.mrb[0].mxu0
  %523 = vmatprep.mubr.f32.mxu0 0.0
  %524 = vmatmul.mubr.f32.gmra.mrb[0].mxu0 %v219
  %v525 = vpop.f32.mrb[0].mxu0
  %v526 = vadd.f32 0.0, %v525
  %v527 = vpop.f32.mrb[0].mxu0
  %528 = vmatprep.mubr.f32.mxu0 0.0
  %529 = vmatmul.mubr.f32.gmra.mrb[0].mxu0 %v222
  %v530 = vpop.f32.mrb[0].mxu0
  %v531 = vadd.f32 0.0, %v530
  %v532 = vpop.f32.mrb[0].mxu0
  %533 = vmatprep.mubr.f32.mxu0 0.0
  %534 = vmatmul.mubr.f32.gmra.mrb[0].mxu0 %v225
  %v535 = vpop.f32.mrb[0].mxu0
  %v536 = vadd.f32 0.0, %v535
  %v537 = vpop.f32.mrb[0].mxu0
  %538 = vmatprep.mubr.f32.mxu0 0.0
  %539 = vmatmul.mubr.f32.gmra.mrb[0].mxu0 %v228
  %v540 = vpop.f32.mrb[0].mxu0
  %v541 = vadd.f32 0.0, %v540
  %v542 = vpop.f32.mrb[0].mxu0
  %543 = vdwg.mxu0
  %v544 = vld [vmem:[%s1] sm:$0xff]
  %v545 = vld [vmem:[%s1 + $0x8] sm:$0xff]
  %v546 = vld [vmem:[%s1 + $0x10] sm:$0xff]
  %v547 = vld [vmem:[%s1 + $0x18] sm:$0xff]
  %v548 = vld [vmem:[%s1 + $0x20] sm:$0xff]
  %v549 = vld [vmem:[%s1 + $0x28] sm:$0xff]
  %v550 = vld [vmem:[%s1 + $0x30] sm:$0xff]
  %v551 = vld [vmem:[%s1 + $0x38] sm:$0xff]
  %v552 = vld [vmem:[%s1 + $0x40] sm:$0xff]
  %v553 = vld [vmem:[%s1 + $0x48] sm:$0xff]
  %v554 = vld [vmem:[%s1 + $0x50] sm:$0xff]
  %v555 = vld [vmem:[%s1 + $0x58] sm:$0xff]
  %v556 = vld [vmem:[%s1 + $0x60] sm:$0xff]
  %v557 = vld [vmem:[%s1 + $0x68] sm:$0xff]
  %v558 = vld [vmem:[%s1 + $0x70] sm:$0xff]
  %v559 = vld [vmem:[%s1 + $0x78] sm:$0xff]
  %v560 = vld [vmem:[%s1 + $0x80] sm:$0xff]
  %v561 = vld [vmem:[%s1 + $0x88] sm:$0xff]
  %v562 = vld [vmem:[%s1 + $0x90] sm:$0xff]
  %v563 = vld [vmem:[%s1 + $0x98] sm:$0xff]
  %v564 = vld [vmem:[%s1 + $0xa0] sm:$0xff]
  %v565 = vld [vmem:[%s1 + $0xa8] sm:$0xff]
  %v566 = vld [vmem:[%s1 + $0xb0] sm:$0xff]
  %v567 = vld [vmem:[%s1 + $0xb8] sm:$0xff]
  %v568 = vld [vmem:[%s1 + $0xc0] sm:$0xff]
  %v569 = vld [vmem:[%s1 + $0xc8] sm:$0xff]
  %v570 = vld [vmem:[%s1 + $0xd0] sm:$0xff]
  %v571 = vld [vmem:[%s1 + $0xd8] sm:$0xff]
  %v572 = vld [vmem:[%s1 + $0xe0] sm:$0xff]
  %v573 = vld [vmem:[%s1 + $0xe8] sm:$0xff]
  %v574 = vld [vmem:[%s1 + $0xf0] sm:$0xff]
  %v575 = vld [vmem:[%s1 + $0xf8] sm:$0xff]
  %v576 = vld [vmem:[%s1 + $0x100] sm:$0xff]
  %v577 = vld [vmem:[%s1 + $0x108] sm:$0xff]
  %v578 = vld [vmem:[%s1 + $0x110] sm:$0xff]
  %v579 = vld [vmem:[%s1 + $0x118] sm:$0xff]
  %v580 = vld [vmem:[%s1 + $0x120] sm:$0xff]
  %v581 = vld [vmem:[%s1 + $0x128] sm:$0xff]
  %v582 = vld [vmem:[%s1 + $0x130] sm:$0xff]
  %v583 = vld [vmem:[%s1 + $0x138] sm:$0xff]
  %v584 = vld [vmem:[%s1 + $0x140] sm:$0xff]
  %v585 = vld [vmem:[%s1 + $0x148] sm:$0xff]
  %v586 = vld [vmem:[%s1 + $0x150] sm:$0xff]
  %v587 = vld [vmem:[%s1 + $0x158] sm:$0xff]
  %v588 = vld [vmem:[%s1 + $0x160] sm:$0xff]
  %v589 = vld [vmem:[%s1 + $0x168] sm:$0xff]
  %v590 = vld [vmem:[%s1 + $0x170] sm:$0xff]
  %v591 = vld [vmem:[%s1 + $0x178] sm:$0xff]
  %v592 = vld [vmem:[%s1 + $0x180] sm:$0xff]
  %v594 = vsel %vm82, %v544, 0
  %v597 = vsel %vm82, %v545, 0
  %v600 = vsel %vm82, %v546, 0
  %v603 = vsel %vm82, %v547, 0
  %v606 = vsel %vm82, %v548, 0
  %v609 = vsel %vm82, %v549, 0
  %v612 = vsel %vm82, %v550, 0
  %v615 = vsel %vm82, %v551, 0
  %v618 = vsel %vm82, %v552, 0
  %v621 = vsel %vm82, %v553, 0
  %v624 = vsel %vm82, %v554, 0
  %v627 = vsel %vm82, %v555, 0
  %v630 = vsel %vm82, %v556, 0
  %v633 = vsel %vm82, %v557, 0
  %v636 = vsel %vm82, %v558, 0
  %v639 = vsel %vm82, %v559, 0
  %v642 = vsel %vm82, %v560, 0
  %v645 = vsel %vm82, %v561, 0
  %v648 = vsel %vm82, %v562, 0
  %v651 = vsel %vm82, %v563, 0
  %v654 = vsel %vm82, %v564, 0
  %v657 = vsel %vm82, %v565, 0
  %v660 = vsel %vm82, %v566, 0
  %v663 = vsel %vm82, %v567, 0
  %v666 = vsel %vm82, %v568, 0
  %v669 = vsel %vm82, %v569, 0
  %v672 = vsel %vm82, %v570, 0
  %v675 = vsel %vm82, %v571, 0
  %v678 = vsel %vm82, %v572, 0
  %v681 = vsel %vm82, %v573, 0
  %v684 = vsel %vm82, %v574, 0
  %v687 = vsel %vm82, %v575, 0
  %v690 = vsel %vm82, %v576, 0
  %v693 = vsel %vm82, %v577, 0
  %v696 = vsel %vm82, %v578, 0
  %v699 = vsel %vm82, %v579, 0
  %v702 = vsel %vm82, %v580, 0
  %v705 = vsel %vm82, %v581, 0
  %v708 = vsel %vm82, %v582, 0
  %v711 = vsel %vm82, %v583, 0
  %v714 = vsel %vm82, %v584, 0
  %v717 = vsel %vm82, %v585, 0
  %v720 = vsel %vm82, %v586, 0
  %v723 = vsel %vm82, %v587, 0
  %v726 = vsel %vm82, %v588, 0
  %v729 = vsel %vm82, %v589, 0
  %v732 = vsel %vm82, %v590, 0
  %v735 = vsel %vm82, %v591, 0
  %v738 = vsel %vm82, %v592, 0
  %740 = vmatprep.subr.mxu0 0.0
  %741 = vmatpush1.msra.mxu0 %v23
  %742 = vmatprep.subr.mxu0 0.0
  %743 = vmatpush1.msra.mxu0 %v24
  %744 = vmatprep.subr.mxu0 0.0
  %745 = vmatpush1.msra.mxu0 %v25
  %746 = vmatprep.subr.mxu0 0.0
  %747 = vmatpush1.msra.mxu0 %v26
  %748 = vmatprep.subr.mxu0 0.0
  %749 = vmatpush1.msra.mxu0 %v27
  %750 = vmatprep.subr.mxu0 0.0
  %751 = vmatpush1.msra.mxu0 %v28
  %752 = vmatprep.subr.mxu0 0.0
  %753 = vmatpush1.msra.mxu0 %v29
  %754 = vmatprep.subr.mxu0 0.0
  %755 = vmatpush1.msra.mxu0 %v30
  %756 = vmatprep.subr.mxu0 0.0
  %757 = vmatpush1.msra.mxu0 %v31
  %758 = vmatprep.subr.mxu0 0.0
  %759 = vmatpush1.msra.mxu0 %v232
  %760 = vmatprep.subr.mxu0 0.0
  %761 = vmatpush1.msra.mxu0 0.0
  %762 = vmatprep.subr.mxu0 0.0
  %763 = vmatpush1.msra.mxu0 0.0
  %764 = vmatprep.subr.mxu0 0.0
  %765 = vmatpush1.msra.mxu0 0.0
  %766 = vmatprep.subr.mxu0 0.0
  %767 = vmatpush1.msra.mxu0 0.0
  %768 = vmatprep.subr.mxu0 0.0
  %769 = vmatpush1.msra.mxu0 0.0
  %770 = vmatprep.subr.mxu0 0.0
  %771 = vmatpush1.msra.mxu0 0.0
  %772 = vmatprep.subr.mxu0 0.0
  %773 = vmatpush1.msra.mxu0 0.0
  %774 = vmatprep.subr.mxu0 0.0
  %775 = vmatpush1.msra.mxu0 0.0
  %776 = vmatprep.subr.mxu0 0.0
  %777 = vmatpush1.msra.mxu0 0.0
  %778 = vmatprep.subr.mxu0 0.0
  %779 = vmatpush1.msra.mxu0 0.0
  %780 = vmatprep.subr.mxu0 0.0
  %781 = vmatpush1.msra.mxu0 0.0
  %782 = vmatprep.subr.mxu0 0.0
  %783 = vmatpush1.msra.mxu0 0.0
  %784 = vmatprep.subr.mxu0 0.0
  %785 = vmatpush1.msra.mxu0 0.0
  %786 = vmatprep.subr.mxu0 0.0
  %787 = vmatpush1.msra.mxu0 0.0
  %788 = vmatprep.subr.mxu0 0.0
  %789 = vmatpush1.msra.mxu0 0.0
  %790 = vmatprep.subr.mxu0 0.0
  %791 = vmatpush1.msra.mxu0 0.0
  %792 = vmatprep.subr.mxu0 0.0
  %793 = vmatpush1.msra.mxu0 0.0
  %794 = vmatprep.subr.mxu0 0.0
  %795 = vmatpush1.msra.mxu0 0.0
  %796 = vmatprep.subr.mxu0 0.0
  %797 = vmatpush1.msra.mxu0 0.0
  %798 = vmatprep.subr.mxu0 0.0
  %799 = vmatpush1.msra.mxu0 0.0
  %800 = vmatprep.subr.mxu0 0.0
  %801 = vmatpush1.msra.mxu0 0.0
  %802 = vmatprep.subr.mxu0 0.0
  %803 = vmatpush1.msra.mxu0 0.0
  %804 = vmatprep.mubr.f32.mxu0 0.0
  %805 = vmatmul.mubr.f32.gmra.mrb[0].mxu0 %v594
  %v806 = vpop.f32.mrb[0].mxu0
  %v807 = vadd.f32 0.0, %v806
  %v808 = vpop.f32.mrb[0].mxu0
  %809 = vmatprep.mubr.f32.mxu0 0.0
  %810 = vmatmul.mubr.f32.gmra.mrb[0].mxu0 %v597
  %v811 = vpop.f32.mrb[0].mxu0
  %v812 = vadd.f32 0.0, %v811
  %v813 = vpop.f32.mrb[0].mxu0
  %814 = vmatprep.mubr.f32.mxu0 0.0
  %815 = vmatmul.mubr.f32.gmra.mrb[0].mxu0 %v600
  %v816 = vpop.f32.mrb[0].mxu0
  %v817 = vadd.f32 0.0, %v816
  %v818 = vpop.f32.mrb[0].mxu0
  %819 = vmatprep.mubr.f32.mxu0 0.0
  %820 = vmatmul.mubr.f32.gmra.mrb[0].mxu0 %v603
  %v821 = vpop.f32.mrb[0].mxu0
  %v822 = vadd.f32 0.0, %v821
  %v823 = vpop.f32.mrb[0].mxu0
  %824 = vmatprep.mubr.f32.mxu0 0.0
  %825 = vmatmul.mubr.f32.gmra.mrb[0].mxu0 %v606
  %v826 = vpop.f32.mrb[0].mxu0
  %v827 = vadd.f32 0.0, %v826
  %v828 = vpop.f32.mrb[0].mxu0
  %829 = vmatprep.mubr.f32.mxu0 0.0
  %830 = vmatmul.mubr.f32.gmra.mrb[0].mxu0 %v609
  %v831 = vpop.f32.mrb[0].mxu0
  %v832 = vadd.f32 0.0, %v831
  %v833 = vpop.f32.mrb[0].mxu0
  %834 = vmatprep.mubr.f32.mxu0 0.0
  %835 = vmatmul.mubr.f32.gmra.mrb[0].mxu0 %v612
  %v836 = vpop.f32.mrb[0].mxu0
  %v837 = vadd.f32 0.0, %v836
  %v838 = vpop.f32.mrb[0].mxu0
  %839 = vmatprep.mubr.f32.mxu0 0.0
  %840 = vmatmul.mubr.f32.gmra.mrb[0].mxu0 %v615
  %v841 = vpop.f32.mrb[0].mxu0
  %v842 = vadd.f32 0.0, %v841
  %v843 = vpop.f32.mrb[0].mxu0
  %844 = vmatprep.mubr.f32.mxu0 0.0
  %845 = vmatmul.mubr.f32.gmra.mrb[0].mxu0 %v618
  %v846 = vpop.f32.mrb[0].mxu0
  %v847 = vadd.f32 0.0, %v846
  %v848 = vpop.f32.mrb[0].mxu0
  %849 = vmatprep.mubr.f32.mxu0 0.0
  %850 = vmatmul.mubr.f32.gmra.mrb[0].mxu0 %v621
  %v851 = vpop.f32.mrb[0].mxu0
  %v852 = vadd.f32 0.0, %v851
  %v853 = vpop.f32.mrb[0].mxu0
  %854 = vmatprep.mubr.f32.mxu0 0.0
  %855 = vmatmul.mubr.f32.gmra.mrb[0].mxu0 %v624
  %v856 = vpop.f32.mrb[0].mxu0
  %v857 = vadd.f32 0.0, %v856
  %v858 = vpop.f32.mrb[0].mxu0
  %859 = vmatprep.mubr.f32.mxu0 0.0
  %860 = vmatmul.mubr.f32.gmra.mrb[0].mxu0 %v627
  %v861 = vpop.f32.mrb[0].mxu0
  %v862 = vadd.f32 0.0, %v861
  %v863 = vpop.f32.mrb[0].mxu0
  %864 = vmatprep.mubr.f32.mxu0 0.0
  %865 = vmatmul.mubr.f32.gmra.mrb[0].mxu0 %v630
  %v866 = vpop.f32.mrb[0].mxu0
  %v867 = vadd.f32 0.0, %v866
  %v868 = vpop.f32.mrb[0].mxu0
  %869 = vmatprep.mubr.f32.mxu0 0.0
  %870 = vmatmul.mubr.f32.gmra.mrb[0].mxu0 %v633
  %v871 = vpop.f32.mrb[0].mxu0
  %v872 = vadd.f32 0.0, %v871
  %v873 = vpop.f32.mrb[0].mxu0
  %874 = vmatprep.mubr.f32.mxu0 0.0
  %875 = vmatmul.mubr.f32.gmra.mrb[0].mxu0 %v636
  %v876 = vpop.f32.mrb[0].mxu0
  %v877 = vadd.f32 0.0, %v876
  %v878 = vpop.f32.mrb[0].mxu0
  %879 = vmatprep.mubr.f32.mxu0 0.0
  %880 = vmatmul.mubr.f32.gmra.mrb[0].mxu0 %v639
  %v881 = vpop.f32.mrb[0].mxu0
  %v882 = vadd.f32 0.0, %v881
  %v883 = vpop.f32.mrb[0].mxu0
  %884 = vmatprep.mubr.f32.mxu0 0.0
  %885 = vmatmul.mubr.f32.gmra.mrb[0].mxu0 %v642
  %v886 = vpop.f32.mrb[0].mxu0
  %v887 = vadd.f32 0.0, %v886
  %v888 = vpop.f32.mrb[0].mxu0
  %889 = vmatprep.mubr.f32.mxu0 0.0
  %890 = vmatmul.mubr.f32.gmra.mrb[0].mxu0 %v645
  %v891 = vpop.f32.mrb[0].mxu0
  %v892 = vadd.f32 0.0, %v891
  %v893 = vpop.f32.mrb[0].mxu0
  %894 = vmatprep.mubr.f32.mxu0 0.0
  %895 = vmatmul.mubr.f32.gmra.mrb[0].mxu0 %v648
  %v896 = vpop.f32.mrb[0].mxu0
  %v897 = vadd.f32 0.0, %v896
  %v898 = vpop.f32.mrb[0].mxu0
  %899 = vmatprep.mubr.f32.mxu0 0.0
  %900 = vmatmul.mubr.f32.gmra.mrb[0].mxu0 %v651
  %v901 = vpop.f32.mrb[0].mxu0
  %v902 = vadd.f32 0.0, %v901
  %v903 = vpop.f32.mrb[0].mxu0
  %904 = vmatprep.mubr.f32.mxu0 0.0
  %905 = vmatmul.mubr.f32.gmra.mrb[0].mxu0 %v654
  %v906 = vpop.f32.mrb[0].mxu0
  %v907 = vadd.f32 0.0, %v906
  %v908 = vpop.f32.mrb[0].mxu0
  %909 = vmatprep.mubr.f32.mxu0 0.0
  %910 = vmatmul.mubr.f32.gmra.mrb[0].mxu0 %v657
  %v911 = vpop.f32.mrb[0].mxu0
  %v912 = vadd.f32 0.0, %v911
  %v913 = vpop.f32.mrb[0].mxu0
  %914 = vmatprep.mubr.f32.mxu0 0.0
  %915 = vmatmul.mubr.f32.gmra.mrb[0].mxu0 %v660
  %v916 = vpop.f32.mrb[0].mxu0
  %v917 = vadd.f32 0.0, %v916
  %v918 = vpop.f32.mrb[0].mxu0
  %919 = vmatprep.mubr.f32.mxu0 0.0
  %920 = vmatmul.mubr.f32.gmra.mrb[0].mxu0 %v663
  %v921 = vpop.f32.mrb[0].mxu0
  %v922 = vadd.f32 0.0, %v921
  %v923 = vpop.f32.mrb[0].mxu0
  %924 = vmatprep.mubr.f32.mxu0 0.0
  %925 = vmatmul.mubr.f32.gmra.mrb[0].mxu0 %v666
  %v926 = vpop.f32.mrb[0].mxu0
  %v927 = vadd.f32 0.0, %v926
  %v928 = vpop.f32.mrb[0].mxu0
  %929 = vmatprep.mubr.f32.mxu0 0.0
  %930 = vmatmul.mubr.f32.gmra.mrb[0].mxu0 %v669
  %v931 = vpop.f32.mrb[0].mxu0
  %v932 = vadd.f32 0.0, %v931
  %v933 = vpop.f32.mrb[0].mxu0
  %934 = vmatprep.mubr.f32.mxu0 0.0
  %935 = vmatmul.mubr.f32.gmra.mrb[0].mxu0 %v672
  %v936 = vpop.f32.mrb[0].mxu0
  %v937 = vadd.f32 0.0, %v936
  %v938 = vpop.f32.mrb[0].mxu0
  %939 = vmatprep.mubr.f32.mxu0 0.0
  %940 = vmatmul.mubr.f32.gmra.mrb[0].mxu0 %v675
  %v941 = vpop.f32.mrb[0].mxu0
  %v942 = vadd.f32 0.0, %v941
  %v943 = vpop.f32.mrb[0].mxu0
  %944 = vmatprep.mubr.f32.mxu0 0.0
  %945 = vmatmul.mubr.f32.gmra.mrb[0].mxu0 %v678
  %v946 = vpop.f32.mrb[0].mxu0
  %v947 = vadd.f32 0.0, %v946
  %v948 = vpop.f32.mrb[0].mxu0
  %949 = vmatprep.mubr.f32.mxu0 0.0
  %950 = vmatmul.mubr.f32.gmra.mrb[0].mxu0 %v681
  %v951 = vpop.f32.mrb[0].mxu0
  %v952 = vadd.f32 0.0, %v951
  %v953 = vpop.f32.mrb[0].mxu0
  %954 = vmatprep.mubr.f32.mxu0 0.0
  %955 = vmatmul.mubr.f32.gmra.mrb[0].mxu0 %v684
  %v956 = vpop.f32.mrb[0].mxu0
  %v957 = vadd.f32 0.0, %v956
  %v958 = vpop.f32.mrb[0].mxu0
  %959 = vmatprep.mubr.f32.mxu0 0.0
  %960 = vmatmul.mubr.f32.gmra.mrb[0].mxu0 %v687
  %v961 = vpop.f32.mrb[0].mxu0
  %v962 = vadd.f32 0.0, %v961
  %v963 = vpop.f32.mrb[0].mxu0
  %964 = vmatprep.mubr.f32.mxu0 0.0
  %965 = vmatmul.mubr.f32.gmra.mrb[0].mxu0 %v690
  %v966 = vpop.f32.mrb[0].mxu0
  %v967 = vadd.f32 0.0, %v966
  %v968 = vpop.f32.mrb[0].mxu0
  %969 = vmatprep.mubr.f32.mxu0 0.0
  %970 = vmatmul.mubr.f32.gmra.mrb[0].mxu0 %v693
  %v971 = vpop.f32.mrb[0].mxu0
  %v972 = vadd.f32 0.0, %v971
  %v973 = vpop.f32.mrb[0].mxu0
  %974 = vmatprep.mubr.f32.mxu0 0.0
  %975 = vmatmul.mubr.f32.gmra.mrb[0].mxu0 %v696
  %v976 = vpop.f32.mrb[0].mxu0
  %v977 = vadd.f32 0.0, %v976
  %v978 = vpop.f32.mrb[0].mxu0
  %979 = vmatprep.mubr.f32.mxu0 0.0
  %980 = vmatmul.mubr.f32.gmra.mrb[0].mxu0 %v699
  %v981 = vpop.f32.mrb[0].mxu0
  %v982 = vadd.f32 0.0, %v981
  %v983 = vpop.f32.mrb[0].mxu0
  %984 = vmatprep.mubr.f32.mxu0 0.0
  %985 = vmatmul.mubr.f32.gmra.mrb[0].mxu0 %v702
  %v986 = vpop.f32.mrb[0].mxu0
  %v987 = vadd.f32 0.0, %v986
  %v988 = vpop.f32.mrb[0].mxu0
  %989 = vmatprep.mubr.f32.mxu0 0.0
  %990 = vmatmul.mubr.f32.gmra.mrb[0].mxu0 %v705
  %v991 = vpop.f32.mrb[0].mxu0
  %v992 = vadd.f32 0.0, %v991
  %v993 = vpop.f32.mrb[0].mxu0
  %994 = vmatprep.mubr.f32.mxu0 0.0
  %995 = vmatmul.mubr.f32.gmra.mrb[0].mxu0 %v708
  %v996 = vpop.f32.mrb[0].mxu0
  %v997 = vadd.f32 0.0, %v996
  %v998 = vpop.f32.mrb[0].mxu0
  %999 = vmatprep.mubr.f32.mxu0 0.0
  %1000 = vmatmul.mubr.f32.gmra.mrb[0].mxu0 %v711
  %v1001 = vpop.f32.mrb[0].mxu0
  %v1002 = vadd.f32 0.0, %v1001
  %v1003 = vpop.f32.mrb[0].mxu0
  %1004 = vmatprep.mubr.f32.mxu0 0.0
  %1005 = vmatmul.mubr.f32.gmra.mrb[0].mxu0 %v714
  %v1006 = vpop.f32.mrb[0].mxu0
  %v1007 = vadd.f32 0.0, %v1006
  %v1008 = vpop.f32.mrb[0].mxu0
  %1009 = vmatprep.mubr.f32.mxu0 0.0
  %1010 = vmatmul.mubr.f32.gmra.mrb[0].mxu0 %v717
  %v1011 = vpop.f32.mrb[0].mxu0
  %v1012 = vadd.f32 0.0, %v1011
  %v1013 = vpop.f32.mrb[0].mxu0
  %1014 = vmatprep.mubr.f32.mxu0 0.0
  %1015 = vmatmul.mubr.f32.gmra.mrb[0].mxu0 %v720
  %v1016 = vpop.f32.mrb[0].mxu0
  %v1017 = vadd.f32 0.0, %v1016
  %v1018 = vpop.f32.mrb[0].mxu0
  %1019 = vmatprep.mubr.f32.mxu0 0.0
  %1020 = vmatmul.mubr.f32.gmra.mrb[0].mxu0 %v723
  %v1021 = vpop.f32.mrb[0].mxu0
  %v1022 = vadd.f32 0.0, %v1021
  %v1023 = vpop.f32.mrb[0].mxu0
  %1024 = vmatprep.mubr.f32.mxu0 0.0
  %1025 = vmatmul.mubr.f32.gmra.mrb[0].mxu0 %v726
  %v1026 = vpop.f32.mrb[0].mxu0
  %v1027 = vadd.f32 0.0, %v1026
  %v1028 = vpop.f32.mrb[0].mxu0
  %1029 = vmatprep.mubr.f32.mxu0 0.0
  %1030 = vmatmul.mubr.f32.gmra.mrb[0].mxu0 %v729
  %v1031 = vpop.f32.mrb[0].mxu0
  %v1032 = vadd.f32 0.0, %v1031
  %v1033 = vpop.f32.mrb[0].mxu0
  %1034 = vmatprep.mubr.f32.mxu0 0.0
  %1035 = vmatmul.mubr.f32.gmra.mrb[0].mxu0 %v732
  %v1036 = vpop.f32.mrb[0].mxu0
  %v1037 = vadd.f32 0.0, %v1036
  %v1038 = vpop.f32.mrb[0].mxu0
  %1039 = vmatprep.mubr.f32.mxu0 0.0
  %1040 = vmatmul.mubr.f32.gmra.mrb[0].mxu0 %v735
  %v1041 = vpop.f32.mrb[0].mxu0
  %v1042 = vadd.f32 0.0, %v1041
  %v1043 = vpop.f32.mrb[0].mxu0
  %1044 = vmatprep.mubr.f32.mxu0 0.0
  %1045 = vmatmul.mubr.f32.gmra.mrb[0].mxu0 %v738
  %v1046 = vpop.f32.mrb[0].mxu0
  %v1047 = vadd.f32 0.0, %v1046
  %v1048 = vpop.f32.mrb[0].mxu0
  %1049 = vdwg.mxu0
  %v1050 = vmax.f32 %v301, %v807
  %v1051 = vmax.f32 %v306, %v812
  %v1052 = vmax.f32 %v311, %v817
  %v1053 = vmax.f32 %v316, %v822
  %v1054 = vmax.f32 %v321, %v827
  %v1055 = vmax.f32 %v326, %v832
  %v1056 = vmax.f32 %v331, %v837
  %v1057 = vmax.f32 %v336, %v842
  %v1058 = vmax.f32 %v341, %v847
  %v1059 = vmax.f32 %v346, %v852
  %v1060 = vmax.f32 %v351, %v857
  %v1061 = vmax.f32 %v356, %v862
  %v1062 = vmax.f32 %v361, %v867
  %v1063 = vmax.f32 %v366, %v872
  %v1064 = vmax.f32 %v371, %v877
  %v1065 = vmax.f32 %v376, %v882
  %v1066 = vmax.f32 %v381, %v887
  %v1067 = vmax.f32 %v386, %v892
  %v1068 = vmax.f32 %v391, %v897
  %v1069 = vmax.f32 %v396, %v902
  %v1070 = vmax.f32 %v401, %v907
  %v1071 = vmax.f32 %v406, %v912
  %v1072 = vmax.f32 %v411, %v917
  %v1073 = vmax.f32 %v416, %v922
  %v1074 = vmax.f32 %v421, %v927
  %v1075 = vmax.f32 %v426, %v932
  %v1076 = vmax.f32 %v431, %v937
  %v1077 = vmax.f32 %v436, %v942
  %v1078 = vmax.f32 %v441, %v947
  %v1079 = vmax.f32 %v446, %v952
  %v1080 = vmax.f32 %v451, %v957
  %v1081 = vmax.f32 %v456, %v962
  %v1082 = vmax.f32 %v461, %v967
  %v1083 = vmax.f32 %v466, %v972
  %v1084 = vmax.f32 %v471, %v977
  %v1085 = vmax.f32 %v476, %v982
  %v1086 = vmax.f32 %v481, %v987
  %v1087 = vmax.f32 %v486, %v992
  %v1088 = vmax.f32 %v491, %v997
  %v1089 = vmax.f32 %v496, %v1002
  %v1090 = vmax.f32 %v501, %v1007
  %v1091 = vmax.f32 %v506, %v1012
  %v1092 = vmax.f32 %v511, %v1017
  %v1093 = vmax.f32 %v516, %v1022
  %v1094 = vmax.f32 %v521, %v1027
  %v1095 = vmax.f32 %v526, %v1032
  %v1096 = vmax.f32 %v531, %v1037
  %v1097 = vmax.f32 %v536, %v1042
  %v1098 = vmax.f32 %v541, %v1047
  %v1099 = vld [vmem:[%s2] sm:$0xff]
  %v1100 = vld [vmem:[%s2 + $0x8] sm:$0xff]
  %v1101 = vld [vmem:[%s2 + $0x10] sm:$0xff]
  %v1102 = vld [vmem:[%s2 + $0x18] sm:$0xff]
  %v1103 = vld [vmem:[%s2 + $0x20] sm:$0xff]
  %v1104 = vld [vmem:[%s2 + $0x28] sm:$0xff]
  %v1105 = vld [vmem:[%s2 + $0x30] sm:$0xff]
  %v1106 = vld [vmem:[%s2 + $0x38] sm:$0xff]
  %v1107 = vld [vmem:[%s2 + $0x40] sm:$0xff]
  %v1108 = vld [vmem:[%s2 + $0x48] sm:$0xff]
  %v1109 = vld [vmem:[%s2 + $0x50] sm:$0xff]
  %v1110 = vld [vmem:[%s2 + $0x58] sm:$0xff]
  %v1111 = vld [vmem:[%s2 + $0x60] sm:$0xff]
  %v1112 = vld [vmem:[%s2 + $0x68] sm:$0xff]
  %v1113 = vld [vmem:[%s2 + $0x70] sm:$0xff]
  %v1114 = vld [vmem:[%s2 + $0x78] sm:$0xff]
  %v1115 = vld [vmem:[%s2 + $0x80] sm:$0xff]
  %v1116 = vld [vmem:[%s2 + $0x88] sm:$0xff]
  %v1117 = vld [vmem:[%s2 + $0x90] sm:$0xff]
  %v1118 = vld [vmem:[%s2 + $0x98] sm:$0xff]
  %v1119 = vld [vmem:[%s2 + $0xa0] sm:$0xff]
  %v1120 = vld [vmem:[%s2 + $0xa8] sm:$0xff]
  %v1121 = vld [vmem:[%s2 + $0xb0] sm:$0xff]
  %v1122 = vld [vmem:[%s2 + $0xb8] sm:$0xff]
  %v1123 = vld [vmem:[%s2 + $0xc0] sm:$0xff]
  %v1124 = vld [vmem:[%s2 + $0xc8] sm:$0xff]
  %v1125 = vld [vmem:[%s2 + $0xd0] sm:$0xff]
  %v1126 = vld [vmem:[%s2 + $0xd8] sm:$0xff]
  %v1127 = vld [vmem:[%s2 + $0xe0] sm:$0xff]
  %v1128 = vld [vmem:[%s2 + $0xe8] sm:$0xff]
  %v1129 = vld [vmem:[%s2 + $0xf0] sm:$0xff]
  %v1130 = vld [vmem:[%s2 + $0xf8] sm:$0xff]
  %v1131 = vld [vmem:[%s2 + $0x100] sm:$0xff]
  %v1132 = vld [vmem:[%s2 + $0x108] sm:$0xff]
  %v1133 = vld [vmem:[%s2 + $0x110] sm:$0xff]
  %v1134 = vld [vmem:[%s2 + $0x118] sm:$0xff]
  %v1135 = vld [vmem:[%s2 + $0x120] sm:$0xff]
  %v1136 = vld [vmem:[%s2 + $0x128] sm:$0xff]
  %v1137 = vld [vmem:[%s2 + $0x130] sm:$0xff]
  %v1138 = vld [vmem:[%s2 + $0x138] sm:$0xff]
  %v1139 = vld [vmem:[%s2 + $0x140] sm:$0xff]
  %v1140 = vld [vmem:[%s2 + $0x148] sm:$0xff]
  %v1141 = vld [vmem:[%s2 + $0x150] sm:$0xff]
  %v1142 = vld [vmem:[%s2 + $0x158] sm:$0xff]
  %v1143 = vld [vmem:[%s2 + $0x160] sm:$0xff]
  %v1144 = vld [vmem:[%s2 + $0x168] sm:$0xff]
  %v1145 = vld [vmem:[%s2 + $0x170] sm:$0xff]
  %v1146 = vld [vmem:[%s2 + $0x178] sm:$0xff]
  %v1147 = vld [vmem:[%s2 + $0x180] sm:$0xff]
  %v1149 = vsel %vm82, %v1099, 0
  %v1152 = vsel %vm82, %v1100, 0
  %v1155 = vsel %vm82, %v1101, 0
  %v1158 = vsel %vm82, %v1102, 0
  %v1161 = vsel %vm82, %v1103, 0
  %v1164 = vsel %vm82, %v1104, 0
  %v1167 = vsel %vm82, %v1105, 0
  %v1170 = vsel %vm82, %v1106, 0
  %v1173 = vsel %vm82, %v1107, 0
  %v1176 = vsel %vm82, %v1108, 0
  %v1179 = vsel %vm82, %v1109, 0
  %v1182 = vsel %vm82, %v1110, 0
  %v1185 = vsel %vm82, %v1111, 0
  %v1188 = vsel %vm82, %v1112, 0
  %v1191 = vsel %vm82, %v1113, 0
  %v1194 = vsel %vm82, %v1114, 0
  %v1197 = vsel %vm82, %v1115, 0
  %v1200 = vsel %vm82, %v1116, 0
  %v1203 = vsel %vm82, %v1117, 0
  %v1206 = vsel %vm82, %v1118, 0
  %v1209 = vsel %vm82, %v1119, 0
  %v1212 = vsel %vm82, %v1120, 0
  %v1215 = vsel %vm82, %v1121, 0
  %v1218 = vsel %vm82, %v1122, 0
  %v1221 = vsel %vm82, %v1123, 0
  %v1224 = vsel %vm82, %v1124, 0
  %v1227 = vsel %vm82, %v1125, 0
  %v1230 = vsel %vm82, %v1126, 0
  %v1233 = vsel %vm82, %v1127, 0
  %v1236 = vsel %vm82, %v1128, 0
  %v1239 = vsel %vm82, %v1129, 0
  %v1242 = vsel %vm82, %v1130, 0
  %v1245 = vsel %vm82, %v1131, 0
  %v1248 = vsel %vm82, %v1132, 0
  %v1251 = vsel %vm82, %v1133, 0
  %v1254 = vsel %vm82, %v1134, 0
  %v1257 = vsel %vm82, %v1135, 0
  %v1260 = vsel %vm82, %v1136, 0
  %v1263 = vsel %vm82, %v1137, 0
  %v1266 = vsel %vm82, %v1138, 0
  %v1269 = vsel %vm82, %v1139, 0
  %v1272 = vsel %vm82, %v1140, 0
  %v1275 = vsel %vm82, %v1141, 0
  %v1278 = vsel %vm82, %v1142, 0
  %v1281 = vsel %vm82, %v1143, 0
  %v1284 = vsel %vm82, %v1144, 0
  %v1287 = vsel %vm82, %v1145, 0
  %v1290 = vsel %vm82, %v1146, 0
  %v1293 = vsel %vm82, %v1147, 0
  %1295 = vmatprep.subr.mxu0 0.0
  %1296 = vmatpush1.msra.mxu0 %v23
  %1297 = vmatprep.subr.mxu0 0.0
  %1298 = vmatpush1.msra.mxu0 %v24
  %1299 = vmatprep.subr.mxu0 0.0
  %1300 = vmatpush1.msra.mxu0 %v25
  %1301 = vmatprep.subr.mxu0 0.0
  %1302 = vmatpush1.msra.mxu0 %v26
  %1303 = vmatprep.subr.mxu0 0.0
  %1304 = vmatpush1.msra.mxu0 %v27
  %1305 = vmatprep.subr.mxu0 0.0
  %1306 = vmatpush1.msra.mxu0 %v28
  %1307 = vmatprep.subr.mxu0 0.0
  %1308 = vmatpush1.msra.mxu0 %v29
  %1309 = vmatprep.subr.mxu0 0.0
  %1310 = vmatpush1.msra.mxu0 %v30
  %1311 = vmatprep.subr.mxu0 0.0
  %1312 = vmatpush1.msra.mxu0 %v31
  %1313 = vmatprep.subr.mxu0 0.0
  %1314 = vmatpush1.msra.mxu0 %v232
  %1315 = vmatprep.subr.mxu0 0.0
  %1316 = vmatpush1.msra.mxu0 0.0
  %1317 = vmatprep.subr.mxu0 0.0
  %1318 = vmatpush1.msra.mxu0 0.0
  %1319 = vmatprep.subr.mxu0 0.0
  %1320 = vmatpush1.msra.mxu0 0.0
  %1321 = vmatprep.subr.mxu0 0.0
  %1322 = vmatpush1.msra.mxu0 0.0
  %1323 = vmatprep.subr.mxu0 0.0
  %1324 = vmatpush1.msra.mxu0 0.0
  %1325 = vmatprep.subr.mxu0 0.0
  %1326 = vmatpush1.msra.mxu0 0.0
  %1327 = vmatprep.subr.mxu0 0.0
  %1328 = vmatpush1.msra.mxu0 0.0
  %1329 = vmatprep.subr.mxu0 0.0
  %1330 = vmatpush1.msra.mxu0 0.0
  %1331 = vmatprep.subr.mxu0 0.0
  %1332 = vmatpush1.msra.mxu0 0.0
  %1333 = vmatprep.subr.mxu0 0.0
  %1334 = vmatpush1.msra.mxu0 0.0
  %1335 = vmatprep.subr.mxu0 0.0
  %1336 = vmatpush1.msra.mxu0 0.0
  %1337 = vmatprep.subr.mxu0 0.0
  %1338 = vmatpush1.msra.mxu0 0.0
  %1339 = vmatprep.subr.mxu0 0.0
  %1340 = vmatpush1.msra.mxu0 0.0
  %1341 = vmatprep.subr.mxu0 0.0
  %1342 = vmatpush1.msra.mxu0 0.0
  %1343 = vmatprep.subr.mxu0 0.0
  %1344 = vmatpush1.msra.mxu0 0.0
  %1345 = vmatprep.subr.mxu0 0.0
  %1346 = vmatpush1.msra.mxu0 0.0
  %1347 = vmatprep.subr.mxu0 0.0
  %1348 = vmatpush1.msra.mxu0 0.0
  %1349 = vmatprep.subr.mxu0 0.0
  %1350 = vmatpush1.msra.mxu0 0.0
  %1351 = vmatprep.subr.mxu0 0.0
  %1352 = vmatpush1.msra.mxu0 0.0
  %1353 = vmatprep.subr.mxu0 0.0
  %1354 = vmatpush1.msra.mxu0 0.0
  %1355 = vmatprep.subr.mxu0 0.0
  %1356 = vmatpush1.msra.mxu0 0.0
  %1357 = vmatprep.subr.mxu0 0.0
  %1358 = vmatpush1.msra.mxu0 0.0
  %1359 = vmatprep.mubr.f32.mxu0 0.0
  %1360 = vmatmul.mubr.f32.gmra.mrb[0].mxu0 %v1149
  %v1361 = vpop.f32.mrb[0].mxu0
  %v1362 = vadd.f32 0.0, %v1361
  %v1363 = vpop.f32.mrb[0].mxu0
  %1364 = vmatprep.mubr.f32.mxu0 0.0
  %1365 = vmatmul.mubr.f32.gmra.mrb[0].mxu0 %v1152
  %v1366 = vpop.f32.mrb[0].mxu0
  %v1367 = vadd.f32 0.0, %v1366
  %v1368 = vpop.f32.mrb[0].mxu0
  %1369 = vmatprep.mubr.f32.mxu0 0.0
  %1370 = vmatmul.mubr.f32.gmra.mrb[0].mxu0 %v1155
  %v1371 = vpop.f32.mrb[0].mxu0
  %v1372 = vadd.f32 0.0, %v1371
  %v1373 = vpop.f32.mrb[0].mxu0
  %1374 = vmatprep.mubr.f32.mxu0 0.0
  %1375 = vmatmul.mubr.f32.gmra.mrb[0].mxu0 %v1158
  %v1376 = vpop.f32.mrb[0].mxu0
  %v1377 = vadd.f32 0.0, %v1376
  %v1378 = vpop.f32.mrb[0].mxu0
  %1379 = vmatprep.mubr.f32.mxu0 0.0
  %1380 = vmatmul.mubr.f32.gmra.mrb[0].mxu0 %v1161
  %v1381 = vpop.f32.mrb[0].mxu0
  %v1382 = vadd.f32 0.0, %v1381
  %v1383 = vpop.f32.mrb[0].mxu0
  %1384 = vmatprep.mubr.f32.mxu0 0.0
  %1385 = vmatmul.mubr.f32.gmra.mrb[0].mxu0 %v1164
  %v1386 = vpop.f32.mrb[0].mxu0
  %v1387 = vadd.f32 0.0, %v1386
  %v1388 = vpop.f32.mrb[0].mxu0
  %1389 = vmatprep.mubr.f32.mxu0 0.0
  %1390 = vmatmul.mubr.f32.gmra.mrb[0].mxu0 %v1167
  %v1391 = vpop.f32.mrb[0].mxu0
  %v1392 = vadd.f32 0.0, %v1391
  %v1393 = vpop.f32.mrb[0].mxu0
  %1394 = vmatprep.mubr.f32.mxu0 0.0
  %1395 = vmatmul.mubr.f32.gmra.mrb[0].mxu0 %v1170
  %v1396 = vpop.f32.mrb[0].mxu0
  %v1397 = vadd.f32 0.0, %v1396
  %v1398 = vpop.f32.mrb[0].mxu0
  %1399 = vmatprep.mubr.f32.mxu0 0.0
  %1400 = vmatmul.mubr.f32.gmra.mrb[0].mxu0 %v1173
  %v1401 = vpop.f32.mrb[0].mxu0
  %v1402 = vadd.f32 0.0, %v1401
  %v1403 = vpop.f32.mrb[0].mxu0
  %1404 = vmatprep.mubr.f32.mxu0 0.0
  %1405 = vmatmul.mubr.f32.gmra.mrb[0].mxu0 %v1176
  %v1406 = vpop.f32.mrb[0].mxu0
  %v1407 = vadd.f32 0.0, %v1406
  %v1408 = vpop.f32.mrb[0].mxu0
  %1409 = vmatprep.mubr.f32.mxu0 0.0
  %1410 = vmatmul.mubr.f32.gmra.mrb[0].mxu0 %v1179
  %v1411 = vpop.f32.mrb[0].mxu0
  %v1412 = vadd.f32 0.0, %v1411
  %v1413 = vpop.f32.mrb[0].mxu0
  %1414 = vmatprep.mubr.f32.mxu0 0.0
  %1415 = vmatmul.mubr.f32.gmra.mrb[0].mxu0 %v1182
  %v1416 = vpop.f32.mrb[0].mxu0
  %v1417 = vadd.f32 0.0, %v1416
  %v1418 = vpop.f32.mrb[0].mxu0
  %1419 = vmatprep.mubr.f32.mxu0 0.0
  %1420 = vmatmul.mubr.f32.gmra.mrb[0].mxu0 %v1185
  %v1421 = vpop.f32.mrb[0].mxu0
  %v1422 = vadd.f32 0.0, %v1421
  %v1423 = vpop.f32.mrb[0].mxu0
  %1424 = vmatprep.mubr.f32.mxu0 0.0
  %1425 = vmatmul.mubr.f32.gmra.mrb[0].mxu0 %v1188
  %v1426 = vpop.f32.mrb[0].mxu0
  %v1427 = vadd.f32 0.0, %v1426
  %v1428 = vpop.f32.mrb[0].mxu0
  %1429 = vmatprep.mubr.f32.mxu0 0.0
  %1430 = vmatmul.mubr.f32.gmra.mrb[0].mxu0 %v1191
  %v1431 = vpop.f32.mrb[0].mxu0
  %v1432 = vadd.f32 0.0, %v1431
  %v1433 = vpop.f32.mrb[0].mxu0
  %1434 = vmatprep.mubr.f32.mxu0 0.0
  %1435 = vmatmul.mubr.f32.gmra.mrb[0].mxu0 %v1194
  %v1436 = vpop.f32.mrb[0].mxu0
  %v1437 = vadd.f32 0.0, %v1436
  %v1438 = vpop.f32.mrb[0].mxu0
  %1439 = vmatprep.mubr.f32.mxu0 0.0
  %1440 = vmatmul.mubr.f32.gmra.mrb[0].mxu0 %v1197
  %v1441 = vpop.f32.mrb[0].mxu0
  %v1442 = vadd.f32 0.0, %v1441
  %v1443 = vpop.f32.mrb[0].mxu0
  %1444 = vmatprep.mubr.f32.mxu0 0.0
  %1445 = vmatmul.mubr.f32.gmra.mrb[0].mxu0 %v1200
  %v1446 = vpop.f32.mrb[0].mxu0
  %v1447 = vadd.f32 0.0, %v1446
  %v1448 = vpop.f32.mrb[0].mxu0
  %1449 = vmatprep.mubr.f32.mxu0 0.0
  %1450 = vmatmul.mubr.f32.gmra.mrb[0].mxu0 %v1203
  %v1451 = vpop.f32.mrb[0].mxu0
  %v1452 = vadd.f32 0.0, %v1451
  %v1453 = vpop.f32.mrb[0].mxu0
  %1454 = vmatprep.mubr.f32.mxu0 0.0
  %1455 = vmatmul.mubr.f32.gmra.mrb[0].mxu0 %v1206
  %v1456 = vpop.f32.mrb[0].mxu0
  %v1457 = vadd.f32 0.0, %v1456
  %v1458 = vpop.f32.mrb[0].mxu0
  %1459 = vmatprep.mubr.f32.mxu0 0.0
  %1460 = vmatmul.mubr.f32.gmra.mrb[0].mxu0 %v1209
  %v1461 = vpop.f32.mrb[0].mxu0
  %v1462 = vadd.f32 0.0, %v1461
  %v1463 = vpop.f32.mrb[0].mxu0
  %1464 = vmatprep.mubr.f32.mxu0 0.0
  %1465 = vmatmul.mubr.f32.gmra.mrb[0].mxu0 %v1212
  %v1466 = vpop.f32.mrb[0].mxu0
  %v1467 = vadd.f32 0.0, %v1466
  %v1468 = vpop.f32.mrb[0].mxu0
  %1469 = vmatprep.mubr.f32.mxu0 0.0
  %1470 = vmatmul.mubr.f32.gmra.mrb[0].mxu0 %v1215
  %v1471 = vpop.f32.mrb[0].mxu0
  %v1472 = vadd.f32 0.0, %v1471
  %v1473 = vpop.f32.mrb[0].mxu0
  %1474 = vmatprep.mubr.f32.mxu0 0.0
  %1475 = vmatmul.mubr.f32.gmra.mrb[0].mxu0 %v1218
  %v1476 = vpop.f32.mrb[0].mxu0
  %v1477 = vadd.f32 0.0, %v1476
  %v1478 = vpop.f32.mrb[0].mxu0
  %1479 = vmatprep.mubr.f32.mxu0 0.0
  %1480 = vmatmul.mubr.f32.gmra.mrb[0].mxu0 %v1221
  %v1481 = vpop.f32.mrb[0].mxu0
  %v1482 = vadd.f32 0.0, %v1481
  %v1483 = vpop.f32.mrb[0].mxu0
  %1484 = vmatprep.mubr.f32.mxu0 0.0
  %1485 = vmatmul.mubr.f32.gmra.mrb[0].mxu0 %v1224
  %v1486 = vpop.f32.mrb[0].mxu0
  %v1487 = vadd.f32 0.0, %v1486
  %v1488 = vpop.f32.mrb[0].mxu0
  %1489 = vmatprep.mubr.f32.mxu0 0.0
  %1490 = vmatmul.mubr.f32.gmra.mrb[0].mxu0 %v1227
  %v1491 = vpop.f32.mrb[0].mxu0
  %v1492 = vadd.f32 0.0, %v1491
  %v1493 = vpop.f32.mrb[0].mxu0
  %1494 = vmatprep.mubr.f32.mxu0 0.0
  %1495 = vmatmul.mubr.f32.gmra.mrb[0].mxu0 %v1230
  %v1496 = vpop.f32.mrb[0].mxu0
  %v1497 = vadd.f32 0.0, %v1496
  %v1498 = vpop.f32.mrb[0].mxu0
  %1499 = vmatprep.mubr.f32.mxu0 0.0
  %1500 = vmatmul.mubr.f32.gmra.mrb[0].mxu0 %v1233
  %v1501 = vpop.f32.mrb[0].mxu0
  %v1502 = vadd.f32 0.0, %v1501
  %v1503 = vpop.f32.mrb[0].mxu0
  %1504 = vmatprep.mubr.f32.mxu0 0.0
  %1505 = vmatmul.mubr.f32.gmra.mrb[0].mxu0 %v1236
  %v1506 = vpop.f32.mrb[0].mxu0
  %v1507 = vadd.f32 0.0, %v1506
  %v1508 = vpop.f32.mrb[0].mxu0
  %1509 = vmatprep.mubr.f32.mxu0 0.0
  %1510 = vmatmul.mubr.f32.gmra.mrb[0].mxu0 %v1239
  %v1511 = vpop.f32.mrb[0].mxu0
  %v1512 = vadd.f32 0.0, %v1511
  %v1513 = vpop.f32.mrb[0].mxu0
  %1514 = vmatprep.mubr.f32.mxu0 0.0
  %1515 = vmatmul.mubr.f32.gmra.mrb[0].mxu0 %v1242
  %v1516 = vpop.f32.mrb[0].mxu0
  %v1517 = vadd.f32 0.0, %v1516
  %v1518 = vpop.f32.mrb[0].mxu0
  %1519 = vmatprep.mubr.f32.mxu0 0.0
  %1520 = vmatmul.mubr.f32.gmra.mrb[0].mxu0 %v1245
  %v1521 = vpop.f32.mrb[0].mxu0
  %v1522 = vadd.f32 0.0, %v1521
  %v1523 = vpop.f32.mrb[0].mxu0
  %1524 = vmatprep.mubr.f32.mxu0 0.0
  %1525 = vmatmul.mubr.f32.gmra.mrb[0].mxu0 %v1248
  %v1526 = vpop.f32.mrb[0].mxu0
  %v1527 = vadd.f32 0.0, %v1526
  %v1528 = vpop.f32.mrb[0].mxu0
  %1529 = vmatprep.mubr.f32.mxu0 0.0
  %1530 = vmatmul.mubr.f32.gmra.mrb[0].mxu0 %v1251
  %v1531 = vpop.f32.mrb[0].mxu0
  %v1532 = vadd.f32 0.0, %v1531
  %v1533 = vpop.f32.mrb[0].mxu0
  %1534 = vmatprep.mubr.f32.mxu0 0.0
  %1535 = vmatmul.mubr.f32.gmra.mrb[0].mxu0 %v1254
  %v1536 = vpop.f32.mrb[0].mxu0
  %v1537 = vadd.f32 0.0, %v1536
  %v1538 = vpop.f32.mrb[0].mxu0
  %1539 = vmatprep.mubr.f32.mxu0 0.0
  %1540 = vmatmul.mubr.f32.gmra.mrb[0].mxu0 %v1257
  %v1541 = vpop.f32.mrb[0].mxu0
  %v1542 = vadd.f32 0.0, %v1541
  %v1543 = vpop.f32.mrb[0].mxu0
  %1544 = vmatprep.mubr.f32.mxu0 0.0
  %1545 = vmatmul.mubr.f32.gmra.mrb[0].mxu0 %v1260
  %v1546 = vpop.f32.mrb[0].mxu0
  %v1547 = vadd.f32 0.0, %v1546
  %v1548 = vpop.f32.mrb[0].mxu0
  %1549 = vmatprep.mubr.f32.mxu0 0.0
  %1550 = vmatmul.mubr.f32.gmra.mrb[0].mxu0 %v1263
  %v1551 = vpop.f32.mrb[0].mxu0
  %v1552 = vadd.f32 0.0, %v1551
  %v1553 = vpop.f32.mrb[0].mxu0
  %1554 = vmatprep.mubr.f32.mxu0 0.0
  %1555 = vmatmul.mubr.f32.gmra.mrb[0].mxu0 %v1266
  %v1556 = vpop.f32.mrb[0].mxu0
  %v1557 = vadd.f32 0.0, %v1556
  %v1558 = vpop.f32.mrb[0].mxu0
  %1559 = vmatprep.mubr.f32.mxu0 0.0
  %1560 = vmatmul.mubr.f32.gmra.mrb[0].mxu0 %v1269
  %v1561 = vpop.f32.mrb[0].mxu0
  %v1562 = vadd.f32 0.0, %v1561
  %v1563 = vpop.f32.mrb[0].mxu0
  %1564 = vmatprep.mubr.f32.mxu0 0.0
  %1565 = vmatmul.mubr.f32.gmra.mrb[0].mxu0 %v1272
  %v1566 = vpop.f32.mrb[0].mxu0
  %v1567 = vadd.f32 0.0, %v1566
  %v1568 = vpop.f32.mrb[0].mxu0
  %1569 = vmatprep.mubr.f32.mxu0 0.0
  %1570 = vmatmul.mubr.f32.gmra.mrb[0].mxu0 %v1275
  %v1571 = vpop.f32.mrb[0].mxu0
  %v1572 = vadd.f32 0.0, %v1571
  %v1573 = vpop.f32.mrb[0].mxu0
  %1574 = vmatprep.mubr.f32.mxu0 0.0
  %1575 = vmatmul.mubr.f32.gmra.mrb[0].mxu0 %v1278
  %v1576 = vpop.f32.mrb[0].mxu0
  %v1577 = vadd.f32 0.0, %v1576
  %v1578 = vpop.f32.mrb[0].mxu0
  %1579 = vmatprep.mubr.f32.mxu0 0.0
  %1580 = vmatmul.mubr.f32.gmra.mrb[0].mxu0 %v1281
  %v1581 = vpop.f32.mrb[0].mxu0
  %v1582 = vadd.f32 0.0, %v1581
  %v1583 = vpop.f32.mrb[0].mxu0
  %1584 = vmatprep.mubr.f32.mxu0 0.0
  %1585 = vmatmul.mubr.f32.gmra.mrb[0].mxu0 %v1284
  %v1586 = vpop.f32.mrb[0].mxu0
  %v1587 = vadd.f32 0.0, %v1586
  %v1588 = vpop.f32.mrb[0].mxu0
  %1589 = vmatprep.mubr.f32.mxu0 0.0
  %1590 = vmatmul.mubr.f32.gmra.mrb[0].mxu0 %v1287
  %v1591 = vpop.f32.mrb[0].mxu0
  %v1592 = vadd.f32 0.0, %v1591
  %v1593 = vpop.f32.mrb[0].mxu0
  %1594 = vmatprep.mubr.f32.mxu0 0.0
  %1595 = vmatmul.mubr.f32.gmra.mrb[0].mxu0 %v1290
  %v1596 = vpop.f32.mrb[0].mxu0
  %v1597 = vadd.f32 0.0, %v1596
  %v1598 = vpop.f32.mrb[0].mxu0
  %1599 = vmatprep.mubr.f32.mxu0 0.0
  %1600 = vmatmul.mubr.f32.gmra.mrb[0].mxu0 %v1293
  %v1601 = vpop.f32.mrb[0].mxu0
  %v1602 = vadd.f32 0.0, %v1601
  %v1603 = vpop.f32.mrb[0].mxu0
  %1604 = vdwg.mxu0
  %v1605 = vmax.f32 %v1050, %v1362
  %v1606 = vmax.f32 %v1051, %v1367
  %v1607 = vmax.f32 %v1052, %v1372
  %v1608 = vmax.f32 %v1053, %v1377
  %v1609 = vmax.f32 %v1054, %v1382
  %v1610 = vmax.f32 %v1055, %v1387
  %v1611 = vmax.f32 %v1056, %v1392
  %v1612 = vmax.f32 %v1057, %v1397
  %v1613 = vmax.f32 %v1058, %v1402
  %v1614 = vmax.f32 %v1059, %v1407
  %v1615 = vmax.f32 %v1060, %v1412
  %v1616 = vmax.f32 %v1061, %v1417
  %v1617 = vmax.f32 %v1062, %v1422
  %v1618 = vmax.f32 %v1063, %v1427
  %v1619 = vmax.f32 %v1064, %v1432
  %v1620 = vmax.f32 %v1065, %v1437
  %v1621 = vmax.f32 %v1066, %v1442
  %v1622 = vmax.f32 %v1067, %v1447
  %v1623 = vmax.f32 %v1068, %v1452
  %v1624 = vmax.f32 %v1069, %v1457
  %v1625 = vmax.f32 %v1070, %v1462
  %v1626 = vmax.f32 %v1071, %v1467
  %v1627 = vmax.f32 %v1072, %v1472
  %v1628 = vmax.f32 %v1073, %v1477
  %v1629 = vmax.f32 %v1074, %v1482
  %v1630 = vmax.f32 %v1075, %v1487
  %v1631 = vmax.f32 %v1076, %v1492
  %v1632 = vmax.f32 %v1077, %v1497
  %v1633 = vmax.f32 %v1078, %v1502
  %v1634 = vmax.f32 %v1079, %v1507
  %v1635 = vmax.f32 %v1080, %v1512
  %v1636 = vmax.f32 %v1081, %v1517
  %v1637 = vmax.f32 %v1082, %v1522
  %v1638 = vmax.f32 %v1083, %v1527
  %v1639 = vmax.f32 %v1084, %v1532
  %v1640 = vmax.f32 %v1085, %v1537
  %v1641 = vmax.f32 %v1086, %v1542
  %v1642 = vmax.f32 %v1087, %v1547
  %v1643 = vmax.f32 %v1088, %v1552
  %v1644 = vmax.f32 %v1089, %v1557
  %v1645 = vmax.f32 %v1090, %v1562
  %v1646 = vmax.f32 %v1091, %v1567
  %v1647 = vmax.f32 %v1092, %v1572
  %v1648 = vmax.f32 %v1093, %v1577
  %v1649 = vmax.f32 %v1094, %v1582
  %v1650 = vmax.f32 %v1095, %v1587
  %v1651 = vmax.f32 %v1096, %v1592
  %v1652 = vmax.f32 %v1097, %v1597
  %v1653 = vmax.f32 %v1098, %v1602
  %v1654 = vld [vmem:[%s3] sm:$0xff]
  %v1655 = vld [vmem:[%s3 + $0x8] sm:$0xff]
  %v1656 = vld [vmem:[%s3 + $0x10] sm:$0xff]
  %v1657 = vld [vmem:[%s3 + $0x18] sm:$0xff]
  %v1658 = vld [vmem:[%s3 + $0x20] sm:$0xff]
  %v1659 = vld [vmem:[%s3 + $0x28] sm:$0xff]
  %v1660 = vld [vmem:[%s3 + $0x30] sm:$0xff]
  %v1661 = vld [vmem:[%s3 + $0x38] sm:$0xff]
  %v1662 = vld [vmem:[%s3 + $0x40] sm:$0xff]
  %v1663 = vld [vmem:[%s3 + $0x48] sm:$0xff]
  %v1664 = vld [vmem:[%s3 + $0x50] sm:$0xff]
  %v1665 = vld [vmem:[%s3 + $0x58] sm:$0xff]
  %v1666 = vld [vmem:[%s3 + $0x60] sm:$0xff]
  %v1667 = vld [vmem:[%s3 + $0x68] sm:$0xff]
  %v1668 = vld [vmem:[%s3 + $0x70] sm:$0xff]
  %v1669 = vld [vmem:[%s3 + $0x78] sm:$0xff]
  %v1670 = vld [vmem:[%s3 + $0x80] sm:$0xff]
  %v1671 = vld [vmem:[%s3 + $0x88] sm:$0xff]
  %v1672 = vld [vmem:[%s3 + $0x90] sm:$0xff]
  %v1673 = vld [vmem:[%s3 + $0x98] sm:$0xff]
  %v1674 = vld [vmem:[%s3 + $0xa0] sm:$0xff]
  %v1675 = vld [vmem:[%s3 + $0xa8] sm:$0xff]
  %v1676 = vld [vmem:[%s3 + $0xb0] sm:$0xff]
  %v1677 = vld [vmem:[%s3 + $0xb8] sm:$0xff]
  %v1678 = vld [vmem:[%s3 + $0xc0] sm:$0xff]
  %v1679 = vld [vmem:[%s3 + $0xc8] sm:$0xff]
  %v1680 = vld [vmem:[%s3 + $0xd0] sm:$0xff]
  %v1681 = vld [vmem:[%s3 + $0xd8] sm:$0xff]
  %v1682 = vld [vmem:[%s3 + $0xe0] sm:$0xff]
  %v1683 = vld [vmem:[%s3 + $0xe8] sm:$0xff]
  %v1684 = vld [vmem:[%s3 + $0xf0] sm:$0xff]
  %v1685 = vld [vmem:[%s3 + $0xf8] sm:$0xff]
  %v1686 = vld [vmem:[%s3 + $0x100] sm:$0xff]
  %v1687 = vld [vmem:[%s3 + $0x108] sm:$0xff]
  %v1688 = vld [vmem:[%s3 + $0x110] sm:$0xff]
  %v1689 = vld [vmem:[%s3 + $0x118] sm:$0xff]
  %v1690 = vld [vmem:[%s3 + $0x120] sm:$0xff]
  %v1691 = vld [vmem:[%s3 + $0x128] sm:$0xff]
  %v1692 = vld [vmem:[%s3 + $0x130] sm:$0xff]
  %v1693 = vld [vmem:[%s3 + $0x138] sm:$0xff]
  %v1694 = vld [vmem:[%s3 + $0x140] sm:$0xff]
  %v1695 = vld [vmem:[%s3 + $0x148] sm:$0xff]
  %v1696 = vld [vmem:[%s3 + $0x150] sm:$0xff]
  %v1697 = vld [vmem:[%s3 + $0x158] sm:$0xff]
  %v1698 = vld [vmem:[%s3 + $0x160] sm:$0xff]
  %v1699 = vld [vmem:[%s3 + $0x168] sm:$0xff]
  %v1700 = vld [vmem:[%s3 + $0x170] sm:$0xff]
  %v1701 = vld [vmem:[%s3 + $0x178] sm:$0xff]
  %v1702 = vld [vmem:[%s3 + $0x180] sm:$0xff]
  %v1704 = vsel %vm82, %v1654, 0
  %v1707 = vsel %vm82, %v1655, 0
  %v1710 = vsel %vm82, %v1656, 0
  %v1713 = vsel %vm82, %v1657, 0
  %v1716 = vsel %vm82, %v1658, 0
  %v1719 = vsel %vm82, %v1659, 0
  %v1722 = vsel %vm82, %v1660, 0
  %v1725 = vsel %vm82, %v1661, 0
  %v1728 = vsel %vm82, %v1662, 0
  %v1731 = vsel %vm82, %v1663, 0
  %v1734 = vsel %vm82, %v1664, 0
  %v1737 = vsel %vm82, %v1665, 0
  %v1740 = vsel %vm82, %v1666, 0
  %v1743 = vsel %vm82, %v1667, 0
  %v1746 = vsel %vm82, %v1668, 0
  %v1749 = vsel %vm82, %v1669, 0
  %v1752 = vsel %vm82, %v1670, 0
  %v1755 = vsel %vm82, %v1671, 0
  %v1758 = vsel %vm82, %v1672, 0
  %v1761 = vsel %vm82, %v1673, 0
  %v1764 = vsel %vm82, %v1674, 0
  %v1767 = vsel %vm82, %v1675, 0
  %v1770 = vsel %vm82, %v1676, 0
  %v1773 = vsel %vm82, %v1677, 0
  %v1776 = vsel %vm82, %v1678, 0
  %v1779 = vsel %vm82, %v1679, 0
  %v1782 = vsel %vm82, %v1680, 0
  %v1785 = vsel %vm82, %v1681, 0
  %v1788 = vsel %vm82, %v1682, 0
  %v1791 = vsel %vm82, %v1683, 0
  %v1794 = vsel %vm82, %v1684, 0
  %v1797 = vsel %vm82, %v1685, 0
  %v1800 = vsel %vm82, %v1686, 0
  %v1803 = vsel %vm82, %v1687, 0
  %v1806 = vsel %vm82, %v1688, 0
  %v1809 = vsel %vm82, %v1689, 0
  %v1812 = vsel %vm82, %v1690, 0
  %v1815 = vsel %vm82, %v1691, 0
  %v1818 = vsel %vm82, %v1692, 0
  %v1821 = vsel %vm82, %v1693, 0
  %v1824 = vsel %vm82, %v1694, 0
  %v1827 = vsel %vm82, %v1695, 0
  %v1830 = vsel %vm82, %v1696, 0
  %v1833 = vsel %vm82, %v1697, 0
  %v1836 = vsel %vm82, %v1698, 0
  %v1839 = vsel %vm82, %v1699, 0
  %v1842 = vsel %vm82, %v1700, 0
  %v1845 = vsel %vm82, %v1701, 0
  %v1848 = vsel %vm82, %v1702, 0
  %1850 = vmatprep.subr.mxu0 0.0
  %1851 = vmatpush1.msra.mxu0 %v23
  %1852 = vmatprep.subr.mxu0 0.0
  %1853 = vmatpush1.msra.mxu0 %v24
  %1854 = vmatprep.subr.mxu0 0.0
  %1855 = vmatpush1.msra.mxu0 %v25
  %1856 = vmatprep.subr.mxu0 0.0
  %1857 = vmatpush1.msra.mxu0 %v26
  %1858 = vmatprep.subr.mxu0 0.0
  %1859 = vmatpush1.msra.mxu0 %v27
  %1860 = vmatprep.subr.mxu0 0.0
  %1861 = vmatpush1.msra.mxu0 %v28
  %1862 = vmatprep.subr.mxu0 0.0
  %1863 = vmatpush1.msra.mxu0 %v29
  %1864 = vmatprep.subr.mxu0 0.0
  %1865 = vmatpush1.msra.mxu0 %v30
  %1866 = vmatprep.subr.mxu0 0.0
  %1867 = vmatpush1.msra.mxu0 %v31
  %1868 = vmatprep.subr.mxu0 0.0
  %1869 = vmatpush1.msra.mxu0 %v232
  %1870 = vmatprep.subr.mxu0 0.0
  %1871 = vmatpush1.msra.mxu0 0.0
  %1872 = vmatprep.subr.mxu0 0.0
  %1873 = vmatpush1.msra.mxu0 0.0
  %1874 = vmatprep.subr.mxu0 0.0
  %1875 = vmatpush1.msra.mxu0 0.0
  %1876 = vmatprep.subr.mxu0 0.0
  %1877 = vmatpush1.msra.mxu0 0.0
  %1878 = vmatprep.subr.mxu0 0.0
  %1879 = vmatpush1.msra.mxu0 0.0
  %1880 = vmatprep.subr.mxu0 0.0
  %1881 = vmatpush1.msra.mxu0 0.0
  %1882 = vmatprep.subr.mxu0 0.0
  %1883 = vmatpush1.msra.mxu0 0.0
  %1884 = vmatprep.subr.mxu0 0.0
  %1885 = vmatpush1.msra.mxu0 0.0
  %1886 = vmatprep.subr.mxu0 0.0
  %1887 = vmatpush1.msra.mxu0 0.0
  %1888 = vmatprep.subr.mxu0 0.0
  %1889 = vmatpush1.msra.mxu0 0.0
  %1890 = vmatprep.subr.mxu0 0.0
  %1891 = vmatpush1.msra.mxu0 0.0
  %1892 = vmatprep.subr.mxu0 0.0
  %1893 = vmatpush1.msra.mxu0 0.0
  %1894 = vmatprep.subr.mxu0 0.0
  %1895 = vmatpush1.msra.mxu0 0.0
  %1896 = vmatprep.subr.mxu0 0.0
  %1897 = vmatpush1.msra.mxu0 0.0
  %1898 = vmatprep.subr.mxu0 0.0
  %1899 = vmatpush1.msra.mxu0 0.0
  %1900 = vmatprep.subr.mxu0 0.0
  %1901 = vmatpush1.msra.mxu0 0.0
  %1902 = vmatprep.subr.mxu0 0.0
  %1903 = vmatpush1.msra.mxu0 0.0
  %1904 = vmatprep.subr.mxu0 0.0
  %1905 = vmatpush1.msra.mxu0 0.0
  %1906 = vmatprep.subr.mxu0 0.0
  %1907 = vmatpush1.msra.mxu0 0.0
  %1908 = vmatprep.subr.mxu0 0.0
  %1909 = vmatpush1.msra.mxu0 0.0
  %1910 = vmatprep.subr.mxu0 0.0
  %1911 = vmatpush1.msra.mxu0 0.0
  %1912 = vmatprep.subr.mxu0 0.0
  %1913 = vmatpush1.msra.mxu0 0.0
  %1914 = vmatprep.mubr.f32.mxu0 0.0
  %1915 = vmatmul.mubr.f32.gmra.mrb[0].mxu0 %v1704
  %v1916 = vpop.f32.mrb[0].mxu0
  %v1917 = vadd.f32 0.0, %v1916
  %v1918 = vpop.f32.mrb[0].mxu0
  %1919 = vmatprep.mubr.f32.mxu0 0.0
  %1920 = vmatmul.mubr.f32.gmra.mrb[0].mxu0 %v1707
  %v1921 = vpop.f32.mrb[0].mxu0
  %v1922 = vadd.f32 0.0, %v1921
  %v1923 = vpop.f32.mrb[0].mxu0
  %1924 = vmatprep.mubr.f32.mxu0 0.0
  %1925 = vmatmul.mubr.f32.gmra.mrb[0].mxu0 %v1710
  %v1926 = vpop.f32.mrb[0].mxu0
  %v1927 = vadd.f32 0.0, %v1926
  %v1928 = vpop.f32.mrb[0].mxu0
  %1929 = vmatprep.mubr.f32.mxu0 0.0
  %1930 = vmatmul.mubr.f32.gmra.mrb[0].mxu0 %v1713
  %v1931 = vpop.f32.mrb[0].mxu0
  %v1932 = vadd.f32 0.0, %v1931
  %v1933 = vpop.f32.mrb[0].mxu0
  %1934 = vmatprep.mubr.f32.mxu0 0.0
  %1935 = vmatmul.mubr.f32.gmra.mrb[0].mxu0 %v1716
  %v1936 = vpop.f32.mrb[0].mxu0
  %v1937 = vadd.f32 0.0, %v1936
  %v1938 = vpop.f32.mrb[0].mxu0
  %1939 = vmatprep.mubr.f32.mxu0 0.0
  %1940 = vmatmul.mubr.f32.gmra.mrb[0].mxu0 %v1719
  %v1941 = vpop.f32.mrb[0].mxu0
  %v1942 = vadd.f32 0.0, %v1941
  %v1943 = vpop.f32.mrb[0].mxu0
  %1944 = vmatprep.mubr.f32.mxu0 0.0
  %1945 = vmatmul.mubr.f32.gmra.mrb[0].mxu0 %v1722
  %v1946 = vpop.f32.mrb[0].mxu0
  %v1947 = vadd.f32 0.0, %v1946
  %v1948 = vpop.f32.mrb[0].mxu0
  %1949 = vmatprep.mubr.f32.mxu0 0.0
  %1950 = vmatmul.mubr.f32.gmra.mrb[0].mxu0 %v1725
  %v1951 = vpop.f32.mrb[0].mxu0
  %v1952 = vadd.f32 0.0, %v1951
  %v1953 = vpop.f32.mrb[0].mxu0
  %1954 = vmatprep.mubr.f32.mxu0 0.0
  %1955 = vmatmul.mubr.f32.gmra.mrb[0].mxu0 %v1728
  %v1956 = vpop.f32.mrb[0].mxu0
  %v1957 = vadd.f32 0.0, %v1956
  %v1958 = vpop.f32.mrb[0].mxu0
  %1959 = vmatprep.mubr.f32.mxu0 0.0
  %1960 = vmatmul.mubr.f32.gmra.mrb[0].mxu0 %v1731
  %v1961 = vpop.f32.mrb[0].mxu0
  %v1962 = vadd.f32 0.0, %v1961
  %v1963 = vpop.f32.mrb[0].mxu0
  %1964 = vmatprep.mubr.f32.mxu0 0.0
  %1965 = vmatmul.mubr.f32.gmra.mrb[0].mxu0 %v1734
  %v1966 = vpop.f32.mrb[0].mxu0
  %v1967 = vadd.f32 0.0, %v1966
  %v1968 = vpop.f32.mrb[0].mxu0
  %1969 = vmatprep.mubr.f32.mxu0 0.0
  %1970 = vmatmul.mubr.f32.gmra.mrb[0].mxu0 %v1737
  %v1971 = vpop.f32.mrb[0].mxu0
  %v1972 = vadd.f32 0.0, %v1971
  %v1973 = vpop.f32.mrb[0].mxu0
  %1974 = vmatprep.mubr.f32.mxu0 0.0
  %1975 = vmatmul.mubr.f32.gmra.mrb[0].mxu0 %v1740
  %v1976 = vpop.f32.mrb[0].mxu0
  %v1977 = vadd.f32 0.0, %v1976
  %v1978 = vpop.f32.mrb[0].mxu0
  %1979 = vmatprep.mubr.f32.mxu0 0.0
  %1980 = vmatmul.mubr.f32.gmra.mrb[0].mxu0 %v1743
  %v1981 = vpop.f32.mrb[0].mxu0
  %v1982 = vadd.f32 0.0, %v1981
  %v1983 = vpop.f32.mrb[0].mxu0
  %1984 = vmatprep.mubr.f32.mxu0 0.0
  %1985 = vmatmul.mubr.f32.gmra.mrb[0].mxu0 %v1746
  %v1986 = vpop.f32.mrb[0].mxu0
  %v1987 = vadd.f32 0.0, %v1986
  %v1988 = vpop.f32.mrb[0].mxu0
  %1989 = vmatprep.mubr.f32.mxu0 0.0
  %1990 = vmatmul.mubr.f32.gmra.mrb[0].mxu0 %v1749
  %v1991 = vpop.f32.mrb[0].mxu0
  %v1992 = vadd.f32 0.0, %v1991
  %v1993 = vpop.f32.mrb[0].mxu0
  %1994 = vmatprep.mubr.f32.mxu0 0.0
  %1995 = vmatmul.mubr.f32.gmra.mrb[0].mxu0 %v1752
  %v1996 = vpop.f32.mrb[0].mxu0
  %v1997 = vadd.f32 0.0, %v1996
  %v1998 = vpop.f32.mrb[0].mxu0
  %1999 = vmatprep.mubr.f32.mxu0 0.0
  %2000 = vmatmul.mubr.f32.gmra.mrb[0].mxu0 %v1755
  %v2001 = vpop.f32.mrb[0].mxu0
  %v2002 = vadd.f32 0.0, %v2001
  %v2003 = vpop.f32.mrb[0].mxu0
  %2004 = vmatprep.mubr.f32.mxu0 0.0
  %2005 = vmatmul.mubr.f32.gmra.mrb[0].mxu0 %v1758
  %v2006 = vpop.f32.mrb[0].mxu0
  %v2007 = vadd.f32 0.0, %v2006
  %v2008 = vpop.f32.mrb[0].mxu0
  %2009 = vmatprep.mubr.f32.mxu0 0.0
  %2010 = vmatmul.mubr.f32.gmra.mrb[0].mxu0 %v1761
  %v2011 = vpop.f32.mrb[0].mxu0
  %v2012 = vadd.f32 0.0, %v2011
  %v2013 = vpop.f32.mrb[0].mxu0
  %2014 = vmatprep.mubr.f32.mxu0 0.0
  %2015 = vmatmul.mubr.f32.gmra.mrb[0].mxu0 %v1764
  %v2016 = vpop.f32.mrb[0].mxu0
  %v2017 = vadd.f32 0.0, %v2016
  %v2018 = vpop.f32.mrb[0].mxu0
  %2019 = vmatprep.mubr.f32.mxu0 0.0
  %2020 = vmatmul.mubr.f32.gmra.mrb[0].mxu0 %v1767
  %v2021 = vpop.f32.mrb[0].mxu0
  %v2022 = vadd.f32 0.0, %v2021
  %v2023 = vpop.f32.mrb[0].mxu0
  %2024 = vmatprep.mubr.f32.mxu0 0.0
  %2025 = vmatmul.mubr.f32.gmra.mrb[0].mxu0 %v1770
  %v2026 = vpop.f32.mrb[0].mxu0
  %v2027 = vadd.f32 0.0, %v2026
  %v2028 = vpop.f32.mrb[0].mxu0
  %2029 = vmatprep.mubr.f32.mxu0 0.0
  %2030 = vmatmul.mubr.f32.gmra.mrb[0].mxu0 %v1773
  %v2031 = vpop.f32.mrb[0].mxu0
  %v2032 = vadd.f32 0.0, %v2031
  %v2033 = vpop.f32.mrb[0].mxu0
  %2034 = vmatprep.mubr.f32.mxu0 0.0
  %2035 = vmatmul.mubr.f32.gmra.mrb[0].mxu0 %v1776
  %v2036 = vpop.f32.mrb[0].mxu0
  %v2037 = vadd.f32 0.0, %v2036
  %v2038 = vpop.f32.mrb[0].mxu0
  %2039 = vmatprep.mubr.f32.mxu0 0.0
  %2040 = vmatmul.mubr.f32.gmra.mrb[0].mxu0 %v1779
  %v2041 = vpop.f32.mrb[0].mxu0
  %v2042 = vadd.f32 0.0, %v2041
  %v2043 = vpop.f32.mrb[0].mxu0
  %2044 = vmatprep.mubr.f32.mxu0 0.0
  %2045 = vmatmul.mubr.f32.gmra.mrb[0].mxu0 %v1782
  %v2046 = vpop.f32.mrb[0].mxu0
  %v2047 = vadd.f32 0.0, %v2046
  %v2048 = vpop.f32.mrb[0].mxu0
  %2049 = vmatprep.mubr.f32.mxu0 0.0
  %2050 = vmatmul.mubr.f32.gmra.mrb[0].mxu0 %v1785
  %v2051 = vpop.f32.mrb[0].mxu0
  %v2052 = vadd.f32 0.0, %v2051
  %v2053 = vpop.f32.mrb[0].mxu0
  %2054 = vmatprep.mubr.f32.mxu0 0.0
  %2055 = vmatmul.mubr.f32.gmra.mrb[0].mxu0 %v1788
  %v2056 = vpop.f32.mrb[0].mxu0
  %v2057 = vadd.f32 0.0, %v2056
  %v2058 = vpop.f32.mrb[0].mxu0
  %2059 = vmatprep.mubr.f32.mxu0 0.0
  %2060 = vmatmul.mubr.f32.gmra.mrb[0].mxu0 %v1791
  %v2061 = vpop.f32.mrb[0].mxu0
  %v2062 = vadd.f32 0.0, %v2061
  %v2063 = vpop.f32.mrb[0].mxu0
  %2064 = vmatprep.mubr.f32.mxu0 0.0
  %2065 = vmatmul.mubr.f32.gmra.mrb[0].mxu0 %v1794
  %v2066 = vpop.f32.mrb[0].mxu0
  %v2067 = vadd.f32 0.0, %v2066
  %v2068 = vpop.f32.mrb[0].mxu0
  %2069 = vmatprep.mubr.f32.mxu0 0.0
  %2070 = vmatmul.mubr.f32.gmra.mrb[0].mxu0 %v1797
  %v2071 = vpop.f32.mrb[0].mxu0
  %v2072 = vadd.f32 0.0, %v2071
  %v2073 = vpop.f32.mrb[0].mxu0
  %2074 = vmatprep.mubr.f32.mxu0 0.0
  %2075 = vmatmul.mubr.f32.gmra.mrb[0].mxu0 %v1800
  %v2076 = vpop.f32.mrb[0].mxu0
  %v2077 = vadd.f32 0.0, %v2076
  %v2078 = vpop.f32.mrb[0].mxu0
  %2079 = vmatprep.mubr.f32.mxu0 0.0
  %2080 = vmatmul.mubr.f32.gmra.mrb[0].mxu0 %v1803
  %v2081 = vpop.f32.mrb[0].mxu0
  %v2082 = vadd.f32 0.0, %v2081
  %v2083 = vpop.f32.mrb[0].mxu0
  %2084 = vmatprep.mubr.f32.mxu0 0.0
  %2085 = vmatmul.mubr.f32.gmra.mrb[0].mxu0 %v1806
  %v2086 = vpop.f32.mrb[0].mxu0
  %v2087 = vadd.f32 0.0, %v2086
  %v2088 = vpop.f32.mrb[0].mxu0
  %2089 = vmatprep.mubr.f32.mxu0 0.0
  %2090 = vmatmul.mubr.f32.gmra.mrb[0].mxu0 %v1809
  %v2091 = vpop.f32.mrb[0].mxu0
  %v2092 = vadd.f32 0.0, %v2091
  %v2093 = vpop.f32.mrb[0].mxu0
  %2094 = vmatprep.mubr.f32.mxu0 0.0
  %2095 = vmatmul.mubr.f32.gmra.mrb[0].mxu0 %v1812
  %v2096 = vpop.f32.mrb[0].mxu0
  %v2097 = vadd.f32 0.0, %v2096
  %v2098 = vpop.f32.mrb[0].mxu0
  %2099 = vmatprep.mubr.f32.mxu0 0.0
  %2100 = vmatmul.mubr.f32.gmra.mrb[0].mxu0 %v1815
  %v2101 = vpop.f32.mrb[0].mxu0
  %v2102 = vadd.f32 0.0, %v2101
  %v2103 = vpop.f32.mrb[0].mxu0
  %2104 = vmatprep.mubr.f32.mxu0 0.0
  %2105 = vmatmul.mubr.f32.gmra.mrb[0].mxu0 %v1818
  %v2106 = vpop.f32.mrb[0].mxu0
  %v2107 = vadd.f32 0.0, %v2106
  %v2108 = vpop.f32.mrb[0].mxu0
  %2109 = vmatprep.mubr.f32.mxu0 0.0
  %2110 = vmatmul.mubr.f32.gmra.mrb[0].mxu0 %v1821
  %v2111 = vpop.f32.mrb[0].mxu0
  %v2112 = vadd.f32 0.0, %v2111
  %v2113 = vpop.f32.mrb[0].mxu0
  %2114 = vmatprep.mubr.f32.mxu0 0.0
  %2115 = vmatmul.mubr.f32.gmra.mrb[0].mxu0 %v1824
  %v2116 = vpop.f32.mrb[0].mxu0
  %v2117 = vadd.f32 0.0, %v2116
  %v2118 = vpop.f32.mrb[0].mxu0
  %2119 = vmatprep.mubr.f32.mxu0 0.0
  %2120 = vmatmul.mubr.f32.gmra.mrb[0].mxu0 %v1827
  %v2121 = vpop.f32.mrb[0].mxu0
  %v2122 = vadd.f32 0.0, %v2121
  %v2123 = vpop.f32.mrb[0].mxu0
  %2124 = vmatprep.mubr.f32.mxu0 0.0
  %2125 = vmatmul.mubr.f32.gmra.mrb[0].mxu0 %v1830
  %v2126 = vpop.f32.mrb[0].mxu0
  %v2127 = vadd.f32 0.0, %v2126
  %v2128 = vpop.f32.mrb[0].mxu0
  %2129 = vmatprep.mubr.f32.mxu0 0.0
  %2130 = vmatmul.mubr.f32.gmra.mrb[0].mxu0 %v1833
  %v2131 = vpop.f32.mrb[0].mxu0
  %v2132 = vadd.f32 0.0, %v2131
  %v2133 = vpop.f32.mrb[0].mxu0
  %2134 = vmatprep.mubr.f32.mxu0 0.0
  %2135 = vmatmul.mubr.f32.gmra.mrb[0].mxu0 %v1836
  %v2136 = vpop.f32.mrb[0].mxu0
  %v2137 = vadd.f32 0.0, %v2136
  %v2138 = vpop.f32.mrb[0].mxu0
  %2139 = vmatprep.mubr.f32.mxu0 0.0
  %2140 = vmatmul.mubr.f32.gmra.mrb[0].mxu0 %v1839
  %v2141 = vpop.f32.mrb[0].mxu0
  %v2142 = vadd.f32 0.0, %v2141
  %v2143 = vpop.f32.mrb[0].mxu0
  %2144 = vmatprep.mubr.f32.mxu0 0.0
  %2145 = vmatmul.mubr.f32.gmra.mrb[0].mxu0 %v1842
  %v2146 = vpop.f32.mrb[0].mxu0
  %v2147 = vadd.f32 0.0, %v2146
  %v2148 = vpop.f32.mrb[0].mxu0
  %2149 = vmatprep.mubr.f32.mxu0 0.0
  %2150 = vmatmul.mubr.f32.gmra.mrb[0].mxu0 %v1845
  %v2151 = vpop.f32.mrb[0].mxu0
  %v2152 = vadd.f32 0.0, %v2151
  %v2153 = vpop.f32.mrb[0].mxu0
  %2154 = vmatprep.mubr.f32.mxu0 0.0
  %2155 = vmatmul.mubr.f32.gmra.mrb[0].mxu0 %v1848
  %v2156 = vpop.f32.mrb[0].mxu0
  %v2157 = vadd.f32 0.0, %v2156
  %v2158 = vpop.f32.mrb[0].mxu0
  %2159 = vdwg.mxu0
  %v2160 = vmax.f32 %v1605, %v1917
  %v2161 = vmax.f32 %v1606, %v1922
  %v2162 = vmax.f32 %v1607, %v1927
  %v2163 = vmax.f32 %v1608, %v1932
  %v2164 = vmax.f32 %v1609, %v1937
  %v2165 = vmax.f32 %v1610, %v1942
  %v2166 = vmax.f32 %v1611, %v1947
  %v2167 = vmax.f32 %v1612, %v1952
  %v2168 = vmax.f32 %v1613, %v1957
  %v2169 = vmax.f32 %v1614, %v1962
  %v2170 = vmax.f32 %v1615, %v1967
  %v2171 = vmax.f32 %v1616, %v1972
  %v2172 = vmax.f32 %v1617, %v1977
  %v2173 = vmax.f32 %v1618, %v1982
  %v2174 = vmax.f32 %v1619, %v1987
  %v2175 = vmax.f32 %v1620, %v1992
  %v2176 = vmax.f32 %v1621, %v1997
  %v2177 = vmax.f32 %v1622, %v2002
  %v2178 = vmax.f32 %v1623, %v2007
  %v2179 = vmax.f32 %v1624, %v2012
  %v2180 = vmax.f32 %v1625, %v2017
  %v2181 = vmax.f32 %v1626, %v2022
  %v2182 = vmax.f32 %v1627, %v2027
  %v2183 = vmax.f32 %v1628, %v2032
  %v2184 = vmax.f32 %v1629, %v2037
  %v2185 = vmax.f32 %v1630, %v2042
  %v2186 = vmax.f32 %v1631, %v2047
  %v2187 = vmax.f32 %v1632, %v2052
  %v2188 = vmax.f32 %v1633, %v2057
  %v2189 = vmax.f32 %v1634, %v2062
  %v2190 = vmax.f32 %v1635, %v2067
  %v2191 = vmax.f32 %v1636, %v2072
  %v2192 = vmax.f32 %v1637, %v2077
  %v2193 = vmax.f32 %v1638, %v2082
  %v2194 = vmax.f32 %v1639, %v2087
  %v2195 = vmax.f32 %v1640, %v2092
  %v2196 = vmax.f32 %v1641, %v2097
  %v2197 = vmax.f32 %v1642, %v2102
  %v2198 = vmax.f32 %v1643, %v2107
  %v2199 = vmax.f32 %v1644, %v2112
  %v2200 = vmax.f32 %v1645, %v2117
  %v2201 = vmax.f32 %v1646, %v2122
  %v2202 = vmax.f32 %v1647, %v2127
  %v2203 = vmax.f32 %v1648, %v2132
  %v2204 = vmax.f32 %v1649, %v2137
  %v2205 = vmax.f32 %v1650, %v2142
  %v2206 = vmax.f32 %v1651, %v2147
  %v2207 = vmax.f32 %v1652, %v2152
  %v2208 = vmax.f32 %v1653, %v2157
  %v2209 = vld [vmem:[%s5] sm:$0x1]
  %v2211 = vlaneseq
  %v2212 = vshrl.u32 %v2211, 7
  %v2213 = vsub.s32 0, %v2212
  %v2214 = vrot.slane %v2209, %v2213
  %v2216 = vadd.f32 %v2160, %v2214
  %v2217 = vadd.f32 %v2161, %v2214
  %v2218 = vadd.f32 %v2162, %v2214
  %v2219 = vadd.f32 %v2163, %v2214
  %v2220 = vadd.f32 %v2164, %v2214
  %v2221 = vadd.f32 %v2165, %v2214
  %v2222 = vadd.f32 %v2166, %v2214
  %v2223 = vadd.f32 %v2167, %v2214
  %v2224 = vadd.f32 %v2168, %v2214
  %v2225 = vadd.f32 %v2169, %v2214
  %v2226 = vadd.f32 %v2170, %v2214
  %v2227 = vadd.f32 %v2171, %v2214
  %v2228 = vadd.f32 %v2172, %v2214
  %v2229 = vadd.f32 %v2173, %v2214
  %v2230 = vadd.f32 %v2174, %v2214
  %v2231 = vadd.f32 %v2175, %v2214
  %v2232 = vadd.f32 %v2176, %v2214
  %v2233 = vadd.f32 %v2177, %v2214
  %v2234 = vadd.f32 %v2178, %v2214
  %v2235 = vadd.f32 %v2179, %v2214
  %v2236 = vadd.f32 %v2180, %v2214
  %v2237 = vadd.f32 %v2181, %v2214
  %v2238 = vadd.f32 %v2182, %v2214
  %v2239 = vadd.f32 %v2183, %v2214
  %v2240 = vadd.f32 %v2184, %v2214
  %v2241 = vadd.f32 %v2185, %v2214
  %v2242 = vadd.f32 %v2186, %v2214
  %v2243 = vadd.f32 %v2187, %v2214
  %v2244 = vadd.f32 %v2188, %v2214
  %v2245 = vadd.f32 %v2189, %v2214
  %v2246 = vadd.f32 %v2190, %v2214
  %v2247 = vadd.f32 %v2191, %v2214
  %v2248 = vadd.f32 %v2192, %v2214
  %v2249 = vadd.f32 %v2193, %v2214
  %v2250 = vadd.f32 %v2194, %v2214
  %v2251 = vadd.f32 %v2195, %v2214
  %v2252 = vadd.f32 %v2196, %v2214
  %v2253 = vadd.f32 %v2197, %v2214
  %v2254 = vadd.f32 %v2198, %v2214
  %v2255 = vadd.f32 %v2199, %v2214
  %v2256 = vadd.f32 %v2200, %v2214
  %v2257 = vadd.f32 %v2201, %v2214
  %v2258 = vadd.f32 %v2202, %v2214
  %v2259 = vadd.f32 %v2203, %v2214
  %v2260 = vadd.f32 %v2204, %v2214
  %v2261 = vadd.f32 %v2205, %v2214
  %v2262 = vadd.f32 %v2206, %v2214
  %v2263 = vadd.f32 %v2207, %v2214
  %v2264 = vadd.f32 %v2208, %v2214
  %v2265 = vmax.f32 %v2216, 0.0
  %v2266 = vmax.f32 %v2217, 0.0
  %v2267 = vmax.f32 %v2218, 0.0
  %v2268 = vmax.f32 %v2219, 0.0
  %v2269 = vmax.f32 %v2220, 0.0
  %v2270 = vmax.f32 %v2221, 0.0
  %v2271 = vmax.f32 %v2222, 0.0
  %v2272 = vmax.f32 %v2223, 0.0
  %v2273 = vmax.f32 %v2224, 0.0
  %v2274 = vmax.f32 %v2225, 0.0
  %v2275 = vmax.f32 %v2226, 0.0
  %v2276 = vmax.f32 %v2227, 0.0
  %v2277 = vmax.f32 %v2228, 0.0
  %v2278 = vmax.f32 %v2229, 0.0
  %v2279 = vmax.f32 %v2230, 0.0
  %v2280 = vmax.f32 %v2231, 0.0
  %v2281 = vmax.f32 %v2232, 0.0
  %v2282 = vmax.f32 %v2233, 0.0
  %v2283 = vmax.f32 %v2234, 0.0
  %v2284 = vmax.f32 %v2235, 0.0
  %v2285 = vmax.f32 %v2236, 0.0
  %v2286 = vmax.f32 %v2237, 0.0
  %v2287 = vmax.f32 %v2238, 0.0
  %v2288 = vmax.f32 %v2239, 0.0
  %v2289 = vmax.f32 %v2240, 0.0
  %v2290 = vmax.f32 %v2241, 0.0
  %v2291 = vmax.f32 %v2242, 0.0
  %v2292 = vmax.f32 %v2243, 0.0
  %v2293 = vmax.f32 %v2244, 0.0
  %v2294 = vmax.f32 %v2245, 0.0
  %v2295 = vmax.f32 %v2246, 0.0
  %v2296 = vmax.f32 %v2247, 0.0
  %v2297 = vmax.f32 %v2248, 0.0
  %v2298 = vmax.f32 %v2249, 0.0
  %v2299 = vmax.f32 %v2250, 0.0
  %v2300 = vmax.f32 %v2251, 0.0
  %v2301 = vmax.f32 %v2252, 0.0
  %v2302 = vmax.f32 %v2253, 0.0
  %v2303 = vmax.f32 %v2254, 0.0
  %v2304 = vmax.f32 %v2255, 0.0
  %v2305 = vmax.f32 %v2256, 0.0
  %v2306 = vmax.f32 %v2257, 0.0
  %v2307 = vmax.f32 %v2258, 0.0
  %v2308 = vmax.f32 %v2259, 0.0
  %v2309 = vmax.f32 %v2260, 0.0
  %v2310 = vmax.f32 %v2261, 0.0
  %v2311 = vmax.f32 %v2262, 0.0
  %v2312 = vmax.f32 %v2263, 0.0
  %v2313 = vmax.f32 %v2264, 0.0
  %2314 = vst [vmem:[%s6] sm:$0xff] %v2265
  %2315 = vst [vmem:[%s6 + $0x8] sm:$0xff] %v2266
  %2316 = vst [vmem:[%s6 + $0x10] sm:$0xff] %v2267
  %2317 = vst [vmem:[%s6 + $0x18] sm:$0xff] %v2268
  %2318 = vst [vmem:[%s6 + $0x20] sm:$0xff] %v2269
  %2319 = vst [vmem:[%s6 + $0x28] sm:$0xff] %v2270
  %2320 = vst [vmem:[%s6 + $0x30] sm:$0xff] %v2271
  %2321 = vst [vmem:[%s6 + $0x38] sm:$0xff] %v2272
  %2322 = vst [vmem:[%s6 + $0x40] sm:$0xff] %v2273
  %2323 = vst [vmem:[%s6 + $0x48] sm:$0xff] %v2274
  %2324 = vst [vmem:[%s6 + $0x50] sm:$0xff] %v2275
  %2325 = vst [vmem:[%s6 + $0x58] sm:$0xff] %v2276
  %2326 = vst [vmem:[%s6 + $0x60] sm:$0xff] %v2277
  %2327 = vst [vmem:[%s6 + $0x68] sm:$0xff] %v2278
  %2328 = vst [vmem:[%s6 + $0x70] sm:$0xff] %v2279
  %2329 = vst [vmem:[%s6 + $0x78] sm:$0xff] %v2280
  %2330 = vst [vmem:[%s6 + $0x80] sm:$0xff] %v2281
  %2331 = vst [vmem:[%s6 + $0x88] sm:$0xff] %v2282
  %2332 = vst [vmem:[%s6 + $0x90] sm:$0xff] %v2283
  %2333 = vst [vmem:[%s6 + $0x98] sm:$0xff] %v2284
  %2334 = vst [vmem:[%s6 + $0xa0] sm:$0xff] %v2285
  %2335 = vst [vmem:[%s6 + $0xa8] sm:$0xff] %v2286
  %2336 = vst [vmem:[%s6 + $0xb0] sm:$0xff] %v2287
  %2337 = vst [vmem:[%s6 + $0xb8] sm:$0xff] %v2288
  %2338 = vst [vmem:[%s6 + $0xc0] sm:$0xff] %v2289
  %2339 = vst [vmem:[%s6 + $0xc8] sm:$0xff] %v2290
  %2340 = vst [vmem:[%s6 + $0xd0] sm:$0xff] %v2291
  %2341 = vst [vmem:[%s6 + $0xd8] sm:$0xff] %v2292
  %2342 = vst [vmem:[%s6 + $0xe0] sm:$0xff] %v2293
  %2343 = vst [vmem:[%s6 + $0xe8] sm:$0xff] %v2294
  %2344 = vst [vmem:[%s6 + $0xf0] sm:$0xff] %v2295
  %2345 = vst [vmem:[%s6 + $0xf8] sm:$0xff] %v2296
  %2346 = vst [vmem:[%s6 + $0x100] sm:$0xff] %v2297
  %2347 = vst [vmem:[%s6 + $0x108] sm:$0xff] %v2298
  %2348 = vst [vmem:[%s6 + $0x110] sm:$0xff] %v2299
  %2349 = vst [vmem:[%s6 + $0x118] sm:$0xff] %v2300
  %2350 = vst [vmem:[%s6 + $0x120] sm:$0xff] %v2301
  %2351 = vst [vmem:[%s6 + $0x128] sm:$0xff] %v2302
  %2352 = vst [vmem:[%s6 + $0x130] sm:$0xff] %v2303
  %2353 = vst [vmem:[%s6 + $0x138] sm:$0xff] %v2304
  %2354 = vst [vmem:[%s6 + $0x140] sm:$0xff] %v2305
  %2355 = vst [vmem:[%s6 + $0x148] sm:$0xff] %v2306
  %2356 = vst [vmem:[%s6 + $0x150] sm:$0xff] %v2307
  %2357 = vst [vmem:[%s6 + $0x158] sm:$0xff] %v2308
  %2358 = vst [vmem:[%s6 + $0x160] sm:$0xff] %v2309
  %2359 = vst [vmem:[%s6 + $0x168] sm:$0xff] %v2310
  %2360 = vst [vmem:[%s6 + $0x170] sm:$0xff] %v2311
  %2361 = vst [vmem:[%s6 + $0x178] sm:$0xff] %v2312
  %2362 = vst [vmem:[%s6 + $0x180] sm:$0xff] %v2313
  // Predicated region
  $region26: #{net_forward.3} parent=0 // pred_check
    _
  $region27: #{net_forward.3} parent=0 // pred_check_branch
    %2364 = sbr.rel (0) target = $region29
  $region28: #{net_forward.3} parent=0 // pred_region
    _
  $region29: #{net_forward.3} parent=0 // pred_fallthru
    _
  // Predicated region
  $region30: #{net_forward.3} parent=0 // pred_check
    _
  $region31: #{net_forward.3} parent=0 // pred_check_branch
    %2366 = sbr.rel (0) target = $region33
  $region32: #{net_forward.3} parent=0 // pred_region
    _
  $region33: #{net_forward.3} parent=0 // pred_fallthru
    _

// kernel: net_forward.4
$region0: #{net_forward.4}
  #allocation0 [shape = 'u32[]', space=smem, size = 0x4, offset = 0x4, fixed_abs, tag = 'smem constant byte address 0x4 - core index']
  #allocation1 [shape = 'u32[144,128]{1,0:T(1,128)}', space=vmem, size = 0x12000, scoped, tag = 'internal scratch']
  %s0 = inlined_call_operand.vmem [shape: f32[56,150], index: 0, kind: input, shape index: {}]
  %s1 = inlined_call_operand.vmem [shape: f32[56,150], index: 1, kind: input, shape index: {}]
  %s2 = inlined_call_operand.vmem [shape: f32[56,150], index: 2, kind: input, shape index: {}]
  %s3 = inlined_call_operand.vmem [shape: f32[56,150], index: 3, kind: input, shape index: {}]
  %s4 = inlined_call_operand.vmem [shape: f32[150,128], index: 4, kind: input, shape index: {}]
  %s5 = inlined_call_operand.vmem [shape: f32[1,128], index: 5, kind: input, shape index: {}]
  %s6 = inlined_call_operand.vmem [shape: f32[56,128], index: 6, kind: output, shape index: {}]
  %s7 = sld [smem:[#allocation0]]
  $region34: #{net_forward.4} parent=0
    _
  %s9 = ssub.s32 1, %s7
  %s10 = scalar_select 0, %s9, %s7
  // Predicated region
  $region2: #{net_forward.4} parent=0 // pred_check
    _
  $region3: #{net_forward.4} parent=0 // pred_check_branch
    %12 = sbr.rel (0) target = $region5
  $region4: #{net_forward.4} parent=0 // pred_region
    _
  $region5: #{net_forward.4} parent=0 // pred_fallthru
    _
  // Predicated region
  $region6: #{net_forward.4} parent=0 // pred_check
    _
  $region7: #{net_forward.4} parent=0 // pred_check_branch
    %14 = sbr.rel (0) target = $region9
  $region8: #{net_forward.4} parent=0 // pred_region
    _
  $region9: #{net_forward.4} parent=0 // pred_fallthru
    _
  // Predicated region
  $region10: #{net_forward.4} parent=0 // pred_check
    _
  $region11: #{net_forward.4} parent=0 // pred_check_branch
    %16 = sbr.rel (0) target = $region13
  $region12: #{net_forward.4} parent=0 // pred_region
    _
  $region13: #{net_forward.4} parent=0 // pred_fallthru
    _
  // Predicated region
  $region14: #{net_forward.4} parent=0 // pred_check
    _
  $region15: #{net_forward.4} parent=0 // pred_check_branch
    %18 = sbr.rel (0) target = $region17
  $region16: #{net_forward.4} parent=0 // pred_region
    _
  $region17: #{net_forward.4} parent=0 // pred_fallthru
    _
  // Predicated region
  $region18: #{net_forward.4} parent=0 // pred_check
    _
  $region19: #{net_forward.4} parent=0 // pred_check_branch
    %20 = sbr.rel (0) target = $region21
  $region20: #{net_forward.4} parent=0 // pred_region
    _
  $region21: #{net_forward.4} parent=0 // pred_fallthru
    _
  // Predicated region
  $region22: #{net_forward.4} parent=0 // pred_check
    _
  $region23: #{net_forward.4} parent=0 // pred_check_branch
    %22 = sbr.rel (0) target = $region25
  $region24: #{net_forward.4} parent=0 // pred_region
    _
  $region25: #{net_forward.4} parent=0 // pred_fallthru
    _
  %v23 = vld [vmem:[%s4] sm:$0xff]
  %v24 = vld [vmem:[%s4 + $0x8] sm:$0xff]
  %v25 = vld [vmem:[%s4 + $0x10] sm:$0xff]
  %v26 = vld [vmem:[%s4 + $0x18] sm:$0xff]
  %v27 = vld [vmem:[%s4 + $0x20] sm:$0xff]
  %v28 = vld [vmem:[%s4 + $0x28] sm:$0xff]
  %v29 = vld [vmem:[%s4 + $0x30] sm:$0xff]
  %v30 = vld [vmem:[%s4 + $0x38] sm:$0xff]
  %v31 = vld [vmem:[%s4 + $0x40] sm:$0xff]
  %v32 = vld [vmem:[%s4 + $0x48] sm:$0xff]
  %v33 = vld [vmem:[%s4 + $0x50] sm:$0xff]
  %v34 = vld [vmem:[%s4 + $0x58] sm:$0xff]
  %v35 = vld [vmem:[%s4 + $0x60] sm:$0xff]
  %v36 = vld [vmem:[%s4 + $0x68] sm:$0xff]
  %v37 = vld [vmem:[%s4 + $0x70] sm:$0xff]
  %v38 = vld [vmem:[%s4 + $0x78] sm:$0xff]
  %v39 = vld [vmem:[%s4 + $0x80] sm:$0xff]
  %v40 = vld [vmem:[%s4 + $0x88] sm:$0xff]
  %v41 = vld [vmem:[%s4 + $0x90] sm:$0x3f]
  %v42 = vld [vmem:[%s0] sm:$0xff]
  %v43 = vld [vmem:[%s0 + $0x8] sm:$0xff]
  %v44 = vld [vmem:[%s0 + $0x10] sm:$0xff]
  %v45 = vld [vmem:[%s0 + $0x18] sm:$0xff]
  %v46 = vld [vmem:[%s0 + $0x20] sm:$0xff]
  %v47 = vld [vmem:[%s0 + $0x28] sm:$0xff]
  %v48 = vld [vmem:[%s0 + $0x30] sm:$0xff]
  %v49 = vld [vmem:[%s0 + $0x38] sm:$0xff]
  %v50 = vld [vmem:[%s0 + $0x40] sm:$0xff]
  %v51 = vld [vmem:[%s0 + $0x48] sm:$0xff]
  %v52 = vld [vmem:[%s0 + $0x50] sm:$0xff]
  %v53 = vld [vmem:[%s0 + $0x58] sm:$0xff]
  %v54 = vld [vmem:[%s0 + $0x60] sm:$0xff]
  %v55 = vld [vmem:[%s0 + $0x68] sm:$0xff]
  %vm56 = vcmask 179200
  %v58 = vsel %vm56, %v43, 0
  %v61 = vsel %vm56, %v45, 0
  %v64 = vsel %vm56, %v47, 0
  %v67 = vsel %vm56, %v49, 0
  %v70 = vsel %vm56, %v51, 0
  %v73 = vsel %vm56, %v53, 0
  %v76 = vsel %vm56, %v55, 0
  %vm78 = vcmask 1045504
  %v80 = vsel %vm78, %v41, 0
  %82 = vmatprep.subr.mxu0 0.0
  %83 = vmatpush1.msra.mxu0 %v23
  %84 = vmatprep.subr.mxu0 0.0
  %85 = vmatpush1.msra.mxu0 %v24
  %86 = vmatprep.subr.mxu0 0.0
  %87 = vmatpush1.msra.mxu0 %v25
  %88 = vmatprep.subr.mxu0 0.0
  %89 = vmatpush1.msra.mxu0 %v26
  %90 = vmatprep.subr.mxu0 0.0
  %91 = vmatpush1.msra.mxu0 %v27
  %92 = vmatprep.subr.mxu0 0.0
  %93 = vmatpush1.msra.mxu0 %v28
  %94 = vmatprep.subr.mxu0 0.0
  %95 = vmatpush1.msra.mxu0 %v29
  %96 = vmatprep.subr.mxu0 0.0
  %97 = vmatpush1.msra.mxu0 %v30
  %98 = vmatprep.subr.mxu0 0.0
  %99 = vmatpush1.msra.mxu0 %v31
  %100 = vmatprep.subr.mxu0 0.0
  %101 = vmatpush1.msra.mxu0 %v32
  %102 = vmatprep.subr.mxu0 0.0
  %103 = vmatpush1.msra.mxu0 %v33
  %104 = vmatprep.subr.mxu0 0.0
  %105 = vmatpush1.msra.mxu0 %v34
  %106 = vmatprep.subr.mxu0 0.0
  %107 = vmatpush1.msra.mxu0 %v35
  %108 = vmatprep.subr.mxu0 0.0
  %109 = vmatpush1.msra.mxu0 %v36
  %110 = vmatprep.subr.mxu0 0.0
  %111 = vmatpush1.msra.mxu0 %v37
  %112 = vmatprep.subr.mxu0 0.0
  %113 = vmatpush1.msra.mxu0 %v38
  %114 = vmatprep.subr.mxu0 0.0
  %115 = vmatpush1.msra.mxu0 %v39
  %116 = vmatprep.subr.mxu0 0.0
  %117 = vmatpush1.msra.mxu0 %v40
  %118 = vmatprep.subr.mxu0 0.0
  %119 = vmatpush1.msra.mxu0 %v80
  %120 = vmatprep.subr.mxu0 0.0
  %121 = vmatpush1.msra.mxu0 0.0
  %122 = vmatprep.subr.mxu0 0.0
  %123 = vmatpush1.msra.mxu0 0.0
  %124 = vmatprep.subr.mxu0 0.0
  %125 = vmatpush1.msra.mxu0 0.0
  %126 = vmatprep.subr.mxu0 0.0
  %127 = vmatpush1.msra.mxu0 0.0
  %128 = vmatprep.subr.mxu0 0.0
  %129 = vmatpush1.msra.mxu0 0.0
  %130 = vmatprep.subr.mxu0 0.0
  %131 = vmatpush1.msra.mxu0 0.0
  %132 = vmatprep.subr.mxu0 0.0
  %133 = vmatpush1.msra.mxu0 0.0
  %134 = vmatprep.subr.mxu0 0.0
  %135 = vmatpush1.msra.mxu0 0.0
  %136 = vmatprep.subr.mxu0 0.0
  %137 = vmatpush1.msra.mxu0 0.0
  %138 = vmatprep.subr.mxu0 0.0
  %139 = vmatpush1.msra.mxu0 0.0
  %140 = vmatprep.subr.mxu0 0.0
  %141 = vmatpush1.msra.mxu0 0.0
  %142 = vmatprep.subr.mxu0 0.0
  %143 = vmatpush1.msra.mxu0 0.0
  %144 = vmatprep.subr.mxu0 0.0
  %145 = vmatpush1.msra.mxu0 0.0
  %146 = vmatprep.mubr.f32.mxu0 %v58
  %147 = vmatmul.mubr.f32.gmra.mrb[0].mxu0 %v42
  %v148 = vpop.f32.mrb[0].mxu0
  %v149 = vadd.f32 0.0, %v148
  %v150 = vpop.f32.mrb[0].mxu0
  %151 = vmatprep.mubr.f32.mxu0 %v61
  %152 = vmatmul.mubr.f32.gmra.mrb[0].mxu0 %v44
  %v153 = vpop.f32.mrb[0].mxu0
  %v154 = vadd.f32 0.0, %v153
  %v155 = vpop.f32.mrb[0].mxu0
  %156 = vmatprep.mubr.f32.mxu0 %v64
  %157 = vmatmul.mubr.f32.gmra.mrb[0].mxu0 %v46
  %v158 = vpop.f32.mrb[0].mxu0
  %v159 = vadd.f32 0.0, %v158
  %v160 = vpop.f32.mrb[0].mxu0
  %161 = vmatprep.mubr.f32.mxu0 %v67
  %162 = vmatmul.mubr.f32.gmra.mrb[0].mxu0 %v48
  %v163 = vpop.f32.mrb[0].mxu0
  %v164 = vadd.f32 0.0, %v163
  %v165 = vpop.f32.mrb[0].mxu0
  %166 = vmatprep.mubr.f32.mxu0 %v70
  %167 = vmatmul.mubr.f32.gmra.mrb[0].mxu0 %v50
  %v168 = vpop.f32.mrb[0].mxu0
  %v169 = vadd.f32 0.0, %v168
  %v170 = vpop.f32.mrb[0].mxu0
  %171 = vmatprep.mubr.f32.mxu0 %v73
  %172 = vmatmul.mubr.f32.gmra.mrb[0].mxu0 %v52
  %v173 = vpop.f32.mrb[0].mxu0
  %v174 = vadd.f32 0.0, %v173
  %v175 = vpop.f32.mrb[0].mxu0
  %176 = vmatprep.mubr.f32.mxu0 %v76
  %177 = vmatmul.mubr.f32.gmra.mrb[0].mxu0 %v54
  %v178 = vpop.f32.mrb[0].mxu0
  %v179 = vadd.f32 0.0, %v178
  %v180 = vpop.f32.mrb[0].mxu0
  %181 = vdwg.mxu0
  %v182 = vld [vmem:[%s1] sm:$0xff]
  %v183 = vld [vmem:[%s1 + $0x8] sm:$0xff]
  %v184 = vld [vmem:[%s1 + $0x10] sm:$0xff]
  %v185 = vld [vmem:[%s1 + $0x18] sm:$0xff]
  %v186 = vld [vmem:[%s1 + $0x20] sm:$0xff]
  %v187 = vld [vmem:[%s1 + $0x28] sm:$0xff]
  %v188 = vld [vmem:[%s1 + $0x30] sm:$0xff]
  %v189 = vld [vmem:[%s1 + $0x38] sm:$0xff]
  %v190 = vld [vmem:[%s1 + $0x40] sm:$0xff]
  %v191 = vld [vmem:[%s1 + $0x48] sm:$0xff]
  %v192 = vld [vmem:[%s1 + $0x50] sm:$0xff]
  %v193 = vld [vmem:[%s1 + $0x58] sm:$0xff]
  %v194 = vld [vmem:[%s1 + $0x60] sm:$0xff]
  %v195 = vld [vmem:[%s1 + $0x68] sm:$0xff]
  %v197 = vsel %vm56, %v183, 0
  %v200 = vsel %vm56, %v185, 0
  %v203 = vsel %vm56, %v187, 0
  %v206 = vsel %vm56, %v189, 0
  %v209 = vsel %vm56, %v191, 0
  %v212 = vsel %vm56, %v193, 0
  %v215 = vsel %vm56, %v195, 0
  %217 = vmatprep.subr.mxu0 0.0
  %218 = vmatpush1.msra.mxu0 %v23
  %219 = vmatprep.subr.mxu0 0.0
  %220 = vmatpush1.msra.mxu0 %v24
  %221 = vmatprep.subr.mxu0 0.0
  %222 = vmatpush1.msra.mxu0 %v25
  %223 = vmatprep.subr.mxu0 0.0
  %224 = vmatpush1.msra.mxu0 %v26
  %225 = vmatprep.subr.mxu0 0.0
  %226 = vmatpush1.msra.mxu0 %v27
  %227 = vmatprep.subr.mxu0 0.0
  %228 = vmatpush1.msra.mxu0 %v28
  %229 = vmatprep.subr.mxu0 0.0
  %230 = vmatpush1.msra.mxu0 %v29
  %231 = vmatprep.subr.mxu0 0.0
  %232 = vmatpush1.msra.mxu0 %v30
  %233 = vmatprep.subr.mxu0 0.0
  %234 = vmatpush1.msra.mxu0 %v31
  %235 = vmatprep.subr.mxu0 0.0
  %236 = vmatpush1.msra.mxu0 %v32
  %237 = vmatprep.subr.mxu0 0.0
  %238 = vmatpush1.msra.mxu0 %v33
  %239 = vmatprep.subr.mxu0 0.0
  %240 = vmatpush1.msra.mxu0 %v34
  %241 = vmatprep.subr.mxu0 0.0
  %242 = vmatpush1.msra.mxu0 %v35
  %243 = vmatprep.subr.mxu0 0.0
  %244 = vmatpush1.msra.mxu0 %v36
  %245 = vmatprep.subr.mxu0 0.0
  %246 = vmatpush1.msra.mxu0 %v37
  %247 = vmatprep.subr.mxu0 0.0
  %248 = vmatpush1.msra.mxu0 %v38
  %249 = vmatprep.subr.mxu0 0.0
  %250 = vmatpush1.msra.mxu0 %v39
  %251 = vmatprep.subr.mxu0 0.0
  %252 = vmatpush1.msra.mxu0 %v40
  %253 = vmatprep.subr.mxu0 0.0
  %254 = vmatpush1.msra.mxu0 %v80
  %255 = vmatprep.subr.mxu0 0.0
  %256 = vmatpush1.msra.mxu0 0.0
  %257 = vmatprep.subr.mxu0 0.0
  %258 = vmatpush1.msra.mxu0 0.0
  %259 = vmatprep.subr.mxu0 0.0
  %260 = vmatpush1.msra.mxu0 0.0
  %261 = vmatprep.subr.mxu0 0.0
  %262 = vmatpush1.msra.mxu0 0.0
  %263 = vmatprep.subr.mxu0 0.0
  %264 = vmatpush1.msra.mxu0 0.0
  %265 = vmatprep.subr.mxu0 0.0
  %266 = vmatpush1.msra.mxu0 0.0
  %267 = vmatprep.subr.mxu0 0.0
  %268 = vmatpush1.msra.mxu0 0.0
  %269 = vmatprep.subr.mxu0 0.0
  %270 = vmatpush1.msra.mxu0 0.0
  %271 = vmatprep.subr.mxu0 0.0
  %272 = vmatpush1.msra.mxu0 0.0
  %273 = vmatprep.subr.mxu0 0.0
  %274 = vmatpush1.msra.mxu0 0.0
  %275 = vmatprep.subr.mxu0 0.0
  %276 = vmatpush1.msra.mxu0 0.0
  %277 = vmatprep.subr.mxu0 0.0
  %278 = vmatpush1.msra.mxu0 0.0
  %279 = vmatprep.subr.mxu0 0.0
  %280 = vmatpush1.msra.mxu0 0.0
  %281 = vmatprep.mubr.f32.mxu0 %v197
  %282 = vmatmul.mubr.f32.gmra.mrb[0].mxu0 %v182
  %v283 = vpop.f32.mrb[0].mxu0
  %v284 = vadd.f32 0.0, %v283
  %v285 = vpop.f32.mrb[0].mxu0
  %286 = vmatprep.mubr.f32.mxu0 %v200
  %287 = vmatmul.mubr.f32.gmra.mrb[0].mxu0 %v184
  %v288 = vpop.f32.mrb[0].mxu0
  %v289 = vadd.f32 0.0, %v288
  %v290 = vpop.f32.mrb[0].mxu0
  %291 = vmatprep.mubr.f32.mxu0 %v203
  %292 = vmatmul.mubr.f32.gmra.mrb[0].mxu0 %v186
  %v293 = vpop.f32.mrb[0].mxu0
  %v294 = vadd.f32 0.0, %v293
  %v295 = vpop.f32.mrb[0].mxu0
  %296 = vmatprep.mubr.f32.mxu0 %v206
  %297 = vmatmul.mubr.f32.gmra.mrb[0].mxu0 %v188
  %v298 = vpop.f32.mrb[0].mxu0
  %v299 = vadd.f32 0.0, %v298
  %v300 = vpop.f32.mrb[0].mxu0
  %301 = vmatprep.mubr.f32.mxu0 %v209
  %302 = vmatmul.mubr.f32.gmra.mrb[0].mxu0 %v190
  %v303 = vpop.f32.mrb[0].mxu0
  %v304 = vadd.f32 0.0, %v303
  %v305 = vpop.f32.mrb[0].mxu0
  %306 = vmatprep.mubr.f32.mxu0 %v212
  %307 = vmatmul.mubr.f32.gmra.mrb[0].mxu0 %v192
  %v308 = vpop.f32.mrb[0].mxu0
  %v309 = vadd.f32 0.0, %v308
  %v310 = vpop.f32.mrb[0].mxu0
  %311 = vmatprep.mubr.f32.mxu0 %v215
  %312 = vmatmul.mubr.f32.gmra.mrb[0].mxu0 %v194
  %v313 = vpop.f32.mrb[0].mxu0
  %v314 = vadd.f32 0.0, %v313
  %v315 = vpop.f32.mrb[0].mxu0
  %316 = vdwg.mxu0
  %v317 = vmax.f32 %v149, %v284
  %v318 = vmax.f32 %v154, %v289
  %v319 = vmax.f32 %v159, %v294
  %v320 = vmax.f32 %v164, %v299
  %v321 = vmax.f32 %v169, %v304
  %v322 = vmax.f32 %v174, %v309
  %v323 = vmax.f32 %v179, %v314
  %v324 = vld [vmem:[%s2] sm:$0xff]
  %v325 = vld [vmem:[%s2 + $0x8] sm:$0xff]
  %v326 = vld [vmem:[%s2 + $0x10] sm:$0xff]
  %v327 = vld [vmem:[%s2 + $0x18] sm:$0xff]
  %v328 = vld [vmem:[%s2 + $0x20] sm:$0xff]
  %v329 = vld [vmem:[%s2 + $0x28] sm:$0xff]
  %v330 = vld [vmem:[%s2 + $0x30] sm:$0xff]
  %v331 = vld [vmem:[%s2 + $0x38] sm:$0xff]
  %v332 = vld [vmem:[%s2 + $0x40] sm:$0xff]
  %v333 = vld [vmem:[%s2 + $0x48] sm:$0xff]
  %v334 = vld [vmem:[%s2 + $0x50] sm:$0xff]
  %v335 = vld [vmem:[%s2 + $0x58] sm:$0xff]
  %v336 = vld [vmem:[%s2 + $0x60] sm:$0xff]
  %v337 = vld [vmem:[%s2 + $0x68] sm:$0xff]
  %v339 = vsel %vm56, %v325, 0
  %v342 = vsel %vm56, %v327, 0
  %v345 = vsel %vm56, %v329, 0
  %v348 = vsel %vm56, %v331, 0
  %v351 = vsel %vm56, %v333, 0
  %v354 = vsel %vm56, %v335, 0
  %v357 = vsel %vm56, %v337, 0
  %359 = vmatprep.subr.mxu0 0.0
  %360 = vmatpush1.msra.mxu0 %v23
  %361 = vmatprep.subr.mxu0 0.0
  %362 = vmatpush1.msra.mxu0 %v24
  %363 = vmatprep.subr.mxu0 0.0
  %364 = vmatpush1.msra.mxu0 %v25
  %365 = vmatprep.subr.mxu0 0.0
  %366 = vmatpush1.msra.mxu0 %v26
  %367 = vmatprep.subr.mxu0 0.0
  %368 = vmatpush1.msra.mxu0 %v27
  %369 = vmatprep.subr.mxu0 0.0
  %370 = vmatpush1.msra.mxu0 %v28
  %371 = vmatprep.subr.mxu0 0.0
  %372 = vmatpush1.msra.mxu0 %v29
  %373 = vmatprep.subr.mxu0 0.0
  %374 = vmatpush1.msra.mxu0 %v30
  %375 = vmatprep.subr.mxu0 0.0
  %376 = vmatpush1.msra.mxu0 %v31
  %377 = vmatprep.subr.mxu0 0.0
  %378 = vmatpush1.msra.mxu0 %v32
  %379 = vmatprep.subr.mxu0 0.0
  %380 = vmatpush1.msra.mxu0 %v33
  %381 = vmatprep.subr.mxu0 0.0
  %382 = vmatpush1.msra.mxu0 %v34
  %383 = vmatprep.subr.mxu0 0.0
  %384 = vmatpush1.msra.mxu0 %v35
  %385 = vmatprep.subr.mxu0 0.0
  %386 = vmatpush1.msra.mxu0 %v36
  %387 = vmatprep.subr.mxu0 0.0
  %388 = vmatpush1.msra.mxu0 %v37
  %389 = vmatprep.subr.mxu0 0.0
  %390 = vmatpush1.msra.mxu0 %v38
  %391 = vmatprep.subr.mxu0 0.0
  %392 = vmatpush1.msra.mxu0 %v39
  %393 = vmatprep.subr.mxu0 0.0
  %394 = vmatpush1.msra.mxu0 %v40
  %395 = vmatprep.subr.mxu0 0.0
  %396 = vmatpush1.msra.mxu0 %v80
  %397 = vmatprep.subr.mxu0 0.0
  %398 = vmatpush1.msra.mxu0 0.0
  %399 = vmatprep.subr.mxu0 0.0
  %400 = vmatpush1.msra.mxu0 0.0
  %401 = vmatprep.subr.mxu0 0.0
  %402 = vmatpush1.msra.mxu0 0.0
  %403 = vmatprep.subr.mxu0 0.0
  %404 = vmatpush1.msra.mxu0 0.0
  %405 = vmatprep.subr.mxu0 0.0
  %406 = vmatpush1.msra.mxu0 0.0
  %407 = vmatprep.subr.mxu0 0.0
  %408 = vmatpush1.msra.mxu0 0.0
  %409 = vmatprep.subr.mxu0 0.0
  %410 = vmatpush1.msra.mxu0 0.0
  %411 = vmatprep.subr.mxu0 0.0
  %412 = vmatpush1.msra.mxu0 0.0
  %413 = vmatprep.subr.mxu0 0.0
  %414 = vmatpush1.msra.mxu0 0.0
  %415 = vmatprep.subr.mxu0 0.0
  %416 = vmatpush1.msra.mxu0 0.0
  %417 = vmatprep.subr.mxu0 0.0
  %418 = vmatpush1.msra.mxu0 0.0
  %419 = vmatprep.subr.mxu0 0.0
  %420 = vmatpush1.msra.mxu0 0.0
  %421 = vmatprep.subr.mxu0 0.0
  %422 = vmatpush1.msra.mxu0 0.0
  %423 = vmatprep.mubr.f32.mxu0 %v339
  %424 = vmatmul.mubr.f32.gmra.mrb[0].mxu0 %v324
  %v425 = vpop.f32.mrb[0].mxu0
  %v426 = vadd.f32 0.0, %v425
  %v427 = vpop.f32.mrb[0].mxu0
  %428 = vmatprep.mubr.f32.mxu0 %v342
  %429 = vmatmul.mubr.f32.gmra.mrb[0].mxu0 %v326
  %v430 = vpop.f32.mrb[0].mxu0
  %v431 = vadd.f32 0.0, %v430
  %v432 = vpop.f32.mrb[0].mxu0
  %433 = vmatprep.mubr.f32.mxu0 %v345
  %434 = vmatmul.mubr.f32.gmra.mrb[0].mxu0 %v328
  %v435 = vpop.f32.mrb[0].mxu0
  %v436 = vadd.f32 0.0, %v435
  %v437 = vpop.f32.mrb[0].mxu0
  %438 = vmatprep.mubr.f32.mxu0 %v348
  %439 = vmatmul.mubr.f32.gmra.mrb[0].mxu0 %v330
  %v440 = vpop.f32.mrb[0].mxu0
  %v441 = vadd.f32 0.0, %v440
  %v442 = vpop.f32.mrb[0].mxu0
  %443 = vmatprep.mubr.f32.mxu0 %v351
  %444 = vmatmul.mubr.f32.gmra.mrb[0].mxu0 %v332
  %v445 = vpop.f32.mrb[0].mxu0
  %v446 = vadd.f32 0.0, %v445
  %v447 = vpop.f32.mrb[0].mxu0
  %448 = vmatprep.mubr.f32.mxu0 %v354
  %449 = vmatmul.mubr.f32.gmra.mrb[0].mxu0 %v334
  %v450 = vpop.f32.mrb[0].mxu0
  %v451 = vadd.f32 0.0, %v450
  %v452 = vpop.f32.mrb[0].mxu0
  %453 = vmatprep.mubr.f32.mxu0 %v357
  %454 = vmatmul.mubr.f32.gmra.mrb[0].mxu0 %v336
  %v455 = vpop.f32.mrb[0].mxu0
  %v456 = vadd.f32 0.0, %v455
  %v457 = vpop.f32.mrb[0].mxu0
  %458 = vdwg.mxu0
  %v459 = vmax.f32 %v317, %v426
  %v460 = vmax.f32 %v318, %v431
  %v461 = vmax.f32 %v319, %v436
  %v462 = vmax.f32 %v320, %v441
  %v463 = vmax.f32 %v321, %v446
  %v464 = vmax.f32 %v322, %v451
  %v465 = vmax.f32 %v323, %v456
  %v466 = vld [vmem:[%s3] sm:$0xff]
  %v467 = vld [vmem:[%s3 + $0x8] sm:$0xff]
  %v468 = vld [vmem:[%s3 + $0x10] sm:$0xff]
  %v469 = vld [vmem:[%s3 + $0x18] sm:$0xff]
  %v470 = vld [vmem:[%s3 + $0x20] sm:$0xff]
  %v471 = vld [vmem:[%s3 + $0x28] sm:$0xff]
  %v472 = vld [vmem:[%s3 + $0x30] sm:$0xff]
  %v473 = vld [vmem:[%s3 + $0x38] sm:$0xff]
  %v474 = vld [vmem:[%s3 + $0x40] sm:$0xff]
  %v475 = vld [vmem:[%s3 + $0x48] sm:$0xff]
  %v476 = vld [vmem:[%s3 + $0x50] sm:$0xff]
  %v477 = vld [vmem:[%s3 + $0x58] sm:$0xff]
  %v478 = vld [vmem:[%s3 + $0x60] sm:$0xff]
  %v479 = vld [vmem:[%s3 + $0x68] sm:$0xff]
  %v481 = vsel %vm56, %v467, 0
  %v484 = vsel %vm56, %v469, 0
  %v487 = vsel %vm56, %v471, 0
  %v490 = vsel %vm56, %v473, 0
  %v493 = vsel %vm56, %v475, 0
  %v496 = vsel %vm56, %v477, 0
  %v499 = vsel %vm56, %v479, 0
  %501 = vmatprep.subr.mxu0 0.0
  %502 = vmatpush1.msra.mxu0 %v23
  %503 = vmatprep.subr.mxu0 0.0
  %504 = vmatpush1.msra.mxu0 %v24
  %505 = vmatprep.subr.mxu0 0.0
  %506 = vmatpush1.msra.mxu0 %v25
  %507 = vmatprep.subr.mxu0 0.0
  %508 = vmatpush1.msra.mxu0 %v26
  %509 = vmatprep.subr.mxu0 0.0
  %510 = vmatpush1.msra.mxu0 %v27
  %511 = vmatprep.subr.mxu0 0.0
  %512 = vmatpush1.msra.mxu0 %v28
  %513 = vmatprep.subr.mxu0 0.0
  %514 = vmatpush1.msra.mxu0 %v29
  %515 = vmatprep.subr.mxu0 0.0
  %516 = vmatpush1.msra.mxu0 %v30
  %517 = vmatprep.subr.mxu0 0.0
  %518 = vmatpush1.msra.mxu0 %v31
  %519 = vmatprep.subr.mxu0 0.0
  %520 = vmatpush1.msra.mxu0 %v32
  %521 = vmatprep.subr.mxu0 0.0
  %522 = vmatpush1.msra.mxu0 %v33
  %523 = vmatprep.subr.mxu0 0.0
  %524 = vmatpush1.msra.mxu0 %v34
  %525 = vmatprep.subr.mxu0 0.0
  %526 = vmatpush1.msra.mxu0 %v35
  %527 = vmatprep.subr.mxu0 0.0
  %528 = vmatpush1.msra.mxu0 %v36
  %529 = vmatprep.subr.mxu0 0.0
  %530 = vmatpush1.msra.mxu0 %v37
  %531 = vmatprep.subr.mxu0 0.0
  %532 = vmatpush1.msra.mxu0 %v38
  %533 = vmatprep.subr.mxu0 0.0
  %534 = vmatpush1.msra.mxu0 %v39
  %535 = vmatprep.subr.mxu0 0.0
  %536 = vmatpush1.msra.mxu0 %v40
  %537 = vmatprep.subr.mxu0 0.0
  %538 = vmatpush1.msra.mxu0 %v80
  %539 = vmatprep.subr.mxu0 0.0
  %540 = vmatpush1.msra.mxu0 0.0
  %541 = vmatprep.subr.mxu0 0.0
  %542 = vmatpush1.msra.mxu0 0.0
  %543 = vmatprep.subr.mxu0 0.0
  %544 = vmatpush1.msra.mxu0 0.0
  %545 = vmatprep.subr.mxu0 0.0
  %546 = vmatpush1.msra.mxu0 0.0
  %547 = vmatprep.subr.mxu0 0.0
  %548 = vmatpush1.msra.mxu0 0.0
  %549 = vmatprep.subr.mxu0 0.0
  %550 = vmatpush1.msra.mxu0 0.0
  %551 = vmatprep.subr.mxu0 0.0
  %552 = vmatpush1.msra.mxu0 0.0
  %553 = vmatprep.subr.mxu0 0.0
  %554 = vmatpush1.msra.mxu0 0.0
  %555 = vmatprep.subr.mxu0 0.0
  %556 = vmatpush1.msra.mxu0 0.0
  %557 = vmatprep.subr.mxu0 0.0
  %558 = vmatpush1.msra.mxu0 0.0
  %559 = vmatprep.subr.mxu0 0.0
  %560 = vmatpush1.msra.mxu0 0.0
  %561 = vmatprep.subr.mxu0 0.0
  %562 = vmatpush1.msra.mxu0 0.0
  %563 = vmatprep.subr.mxu0 0.0
  %564 = vmatpush1.msra.mxu0 0.0
  %565 = vmatprep.mubr.f32.mxu0 %v481
  %566 = vmatmul.mubr.f32.gmra.mrb[0].mxu0 %v466
  %v567 = vpop.f32.mrb[0].mxu0
  %v568 = vadd.f32 0.0, %v567
  %v569 = vpop.f32.mrb[0].mxu0
  %570 = vmatprep.mubr.f32.mxu0 %v484
  %571 = vmatmul.mubr.f32.gmra.mrb[0].mxu0 %v468
  %v572 = vpop.f32.mrb[0].mxu0
  %v573 = vadd.f32 0.0, %v572
  %v574 = vpop.f32.mrb[0].mxu0
  %575 = vmatprep.mubr.f32.mxu0 %v487
  %576 = vmatmul.mubr.f32.gmra.mrb[0].mxu0 %v470
  %v577 = vpop.f32.mrb[0].mxu0
  %v578 = vadd.f32 0.0, %v577
  %v579 = vpop.f32.mrb[0].mxu0
  %580 = vmatprep.mubr.f32.mxu0 %v490
  %581 = vmatmul.mubr.f32.gmra.mrb[0].mxu0 %v472
  %v582 = vpop.f32.mrb[0].mxu0
  %v583 = vadd.f32 0.0, %v582
  %v584 = vpop.f32.mrb[0].mxu0
  %585 = vmatprep.mubr.f32.mxu0 %v493
  %586 = vmatmul.mubr.f32.gmra.mrb[0].mxu0 %v474
  %v587 = vpop.f32.mrb[0].mxu0
  %v588 = vadd.f32 0.0, %v587
  %v589 = vpop.f32.mrb[0].mxu0
  %590 = vmatprep.mubr.f32.mxu0 %v496
  %591 = vmatmul.mubr.f32.gmra.mrb[0].mxu0 %v476
  %v592 = vpop.f32.mrb[0].mxu0
  %v593 = vadd.f32 0.0, %v592
  %v594 = vpop.f32.mrb[0].mxu0
  %595 = vmatprep.mubr.f32.mxu0 %v499
  %596 = vmatmul.mubr.f32.gmra.mrb[0].mxu0 %v478
  %v597 = vpop.f32.mrb[0].mxu0
  %v598 = vadd.f32 0.0, %v597
  %v599 = vpop.f32.mrb[0].mxu0
  %600 = vdwg.mxu0
  %v601 = vmax.f32 %v459, %v568
  %v602 = vmax.f32 %v460, %v573
  %v603 = vmax.f32 %v461, %v578
  %v604 = vmax.f32 %v462, %v583
  %v605 = vmax.f32 %v463, %v588
  %v606 = vmax.f32 %v464, %v593
  %v607 = vmax.f32 %v465, %v598
  %v608 = vld [vmem:[%s5] sm:$0x1]
  %v610 = vlaneseq
  %v611 = vshrl.u32 %v610, 7
  %v612 = vsub.s32 0, %v611
  %v613 = vrot.slane %v608, %v612
  %v615 = vadd.f32 %v601, %v613
  %v616 = vadd.f32 %v602, %v613
  %v617 = vadd.f32 %v603, %v613
  %v618 = vadd.f32 %v604, %v613
  %v619 = vadd.f32 %v605, %v613
  %v620 = vadd.f32 %v606, %v613
  %v621 = vadd.f32 %v607, %v613
  %v622 = vmax.f32 %v615, 0.0
  %v623 = vmax.f32 %v616, 0.0
  %v624 = vmax.f32 %v617, 0.0
  %v625 = vmax.f32 %v618, 0.0
  %v626 = vmax.f32 %v619, 0.0
  %v627 = vmax.f32 %v620, 0.0
  %v628 = vmax.f32 %v621, 0.0
  %629 = vst [vmem:[%s6] sm:$0xff] %v622
  %630 = vst [vmem:[%s6 + $0x8] sm:$0xff] %v623
  %631 = vst [vmem:[%s6 + $0x10] sm:$0xff] %v624
  %632 = vst [vmem:[%s6 + $0x18] sm:$0xff] %v625
  %633 = vst [vmem:[%s6 + $0x20] sm:$0xff] %v626
  %634 = vst [vmem:[%s6 + $0x28] sm:$0xff] %v627
  %635 = vst [vmem:[%s6 + $0x30] sm:$0xff] %v628
  // Predicated region
  $region26: #{net_forward.4} parent=0 // pred_check
    _
  $region27: #{net_forward.4} parent=0 // pred_check_branch
    %637 = sbr.rel (0) target = $region29
  $region28: #{net_forward.4} parent=0 // pred_region
    _
  $region29: #{net_forward.4} parent=0 // pred_fallthru
    _
  // Predicated region
  $region30: #{net_forward.4} parent=0 // pred_check
    _
  $region31: #{net_forward.4} parent=0 // pred_check_branch
    %639 = sbr.rel (0) target = $region33
  $region32: #{net_forward.4} parent=0 // pred_region
    _
  $region33: #{net_forward.4} parent=0 // pred_fallthru
    _

// kernel: net_forward.5
$region0: #{net_forward.5}
  #allocation0 [shape = 'u32[]', space=smem, size = 0x4, offset = 0x4, fixed_abs, tag = 'smem constant byte address 0x4 - core index']
  #allocation1 [shape = 'u32[144,128]{1,0:T(1,128)}', space=vmem, size = 0x12000, scoped, tag = 'internal scratch']
  %s0 = inlined_call_operand.vmem [shape: f32[8,400], index: 0, kind: input, shape index: {}]
  %s1 = inlined_call_operand.vmem [shape: f32[400,128], index: 1, kind: input, shape index: {}]
  %s2 = inlined_call_operand.vmem [shape: f32[1,128], index: 2, kind: input, shape index: {}]
  %s3 = inlined_call_operand.vmem [shape: f32[128,128], index: 3, kind: input, shape index: {}]
  %s4 = inlined_call_operand.vmem [shape: f32[1,128], index: 4, kind: input, shape index: {}]
  %s5 = inlined_call_operand.vmem [shape: f32[128,128], index: 5, kind: input, shape index: {}]
  %s6 = inlined_call_operand.vmem [shape: f32[1,128], index: 6, kind: input, shape index: {}]
  %s7 = inlined_call_operand.vmem [shape: f32[8,128], index: 7, kind: output, shape index: {}]
  %s8 = sld [smem:[#allocation0]]
  $region38: #{net_forward.5} parent=0
    _
  %s10 = ssub.s32 1, %s8
  %s11 = scalar_select 0, %s10, %s8
  // Predicated region
  $region2: #{net_forward.5} parent=0 // pred_check
    _
  $region3: #{net_forward.5} parent=0 // pred_check_branch
    %13 = sbr.rel (0) target = $region5
  $region4: #{net_forward.5} parent=0 // pred_region
    _
  $region5: #{net_forward.5} parent=0 // pred_fallthru
    _
  // Predicated region
  $region6: #{net_forward.5} parent=0 // pred_check
    _
  $region7: #{net_forward.5} parent=0 // pred_check_branch
    %15 = sbr.rel (0) target = $region9
  $region8: #{net_forward.5} parent=0 // pred_region
    _
  $region9: #{net_forward.5} parent=0 // pred_fallthru
    _
  // Predicated region
  $region10: #{net_forward.5} parent=0 // pred_check
    _
  $region11: #{net_forward.5} parent=0 // pred_check_branch
    %17 = sbr.rel (0) target = $region13
  $region12: #{net_forward.5} parent=0 // pred_region
    _
  $region13: #{net_forward.5} parent=0 // pred_fallthru
    _
  // Predicated region
  $region14: #{net_forward.5} parent=0 // pred_check
    _
  $region15: #{net_forward.5} parent=0 // pred_check_branch
    %19 = sbr.rel (0) target = $region17
  $region16: #{net_forward.5} parent=0 // pred_region
    _
  $region17: #{net_forward.5} parent=0 // pred_fallthru
    _
  // Predicated region
  $region18: #{net_forward.5} parent=0 // pred_check
    _
  $region19: #{net_forward.5} parent=0 // pred_check_branch
    %21 = sbr.rel (0) target = $region21
  $region20: #{net_forward.5} parent=0 // pred_region
    _
  $region21: #{net_forward.5} parent=0 // pred_fallthru
    _
  // Predicated region
  $region22: #{net_forward.5} parent=0 // pred_check
    _
  $region23: #{net_forward.5} parent=0 // pred_check_branch
    %23 = sbr.rel (0) target = $region25
  $region24: #{net_forward.5} parent=0 // pred_region
    _
  $region25: #{net_forward.5} parent=0 // pred_fallthru
    _
  // Predicated region
  $region26: #{net_forward.5} parent=0 // pred_check
    _
  $region27: #{net_forward.5} parent=0 // pred_check_branch
    %25 = sbr.rel (0) target = $region29
  $region28: #{net_forward.5} parent=0 // pred_region
    _
  $region29: #{net_forward.5} parent=0 // pred_fallthru
    _
  %v26 = vld [vmem:[%s0] sm:$0xff]
  %v27 = vld [vmem:[%s0 + $0x8] sm:$0xff]
  %v28 = vld [vmem:[%s0 + $0x10] sm:$0xff]
  %v29 = vld [vmem:[%s0 + $0x18] sm:$0xff]
  %v30 = vld [vmem:[%s1] sm:$0xff]
  %v31 = vld [vmem:[%s1 + $0x8] sm:$0xff]
  %v32 = vld [vmem:[%s1 + $0x10] sm:$0xff]
  %v33 = vld [vmem:[%s1 + $0x18] sm:$0xff]
  %v34 = vld [vmem:[%s1 + $0x20] sm:$0xff]
  %v35 = vld [vmem:[%s1 + $0x28] sm:$0xff]
  %v36 = vld [vmem:[%s1 + $0x30] sm:$0xff]
  %v37 = vld [vmem:[%s1 + $0x38] sm:$0xff]
  %v38 = vld [vmem:[%s1 + $0x40] sm:$0xff]
  %v39 = vld [vmem:[%s1 + $0x48] sm:$0xff]
  %v40 = vld [vmem:[%s1 + $0x50] sm:$0xff]
  %v41 = vld [vmem:[%s1 + $0x58] sm:$0xff]
  %v42 = vld [vmem:[%s1 + $0x60] sm:$0xff]
  %v43 = vld [vmem:[%s1 + $0x68] sm:$0xff]
  %v44 = vld [vmem:[%s1 + $0x70] sm:$0xff]
  %v45 = vld [vmem:[%s1 + $0x78] sm:$0xff]
  %v46 = vld [vmem:[%s1 + $0x80] sm:$0xff]
  %v47 = vld [vmem:[%s1 + $0x88] sm:$0xff]
  %v48 = vld [vmem:[%s1 + $0x90] sm:$0xff]
  %v49 = vld [vmem:[%s1 + $0x98] sm:$0xff]
  %v50 = vld [vmem:[%s1 + $0xa0] sm:$0xff]
  %v51 = vld [vmem:[%s1 + $0xa8] sm:$0xff]
  %v52 = vld [vmem:[%s1 + $0xb0] sm:$0xff]
  %v53 = vld [vmem:[%s1 + $0xb8] sm:$0xff]
  %v54 = vld [vmem:[%s1 + $0xc0] sm:$0xff]
  %v55 = vld [vmem:[%s1 + $0xc8] sm:$0xff]
  %v56 = vld [vmem:[%s1 + $0xd0] sm:$0xff]
  %v57 = vld [vmem:[%s1 + $0xd8] sm:$0xff]
  %v58 = vld [vmem:[%s1 + $0xe0] sm:$0xff]
  %v59 = vld [vmem:[%s1 + $0xe8] sm:$0xff]
  %v60 = vld [vmem:[%s1 + $0xf0] sm:$0xff]
  %v61 = vld [vmem:[%s1 + $0xf8] sm:$0xff]
  %v62 = vld [vmem:[%s1 + $0x100] sm:$0xff]
  %v63 = vld [vmem:[%s1 + $0x108] sm:$0xff]
  %v64 = vld [vmem:[%s1 + $0x110] sm:$0xff]
  %v65 = vld [vmem:[%s1 + $0x118] sm:$0xff]
  %v66 = vld [vmem:[%s1 + $0x120] sm:$0xff]
  %v67 = vld [vmem:[%s1 + $0x128] sm:$0xff]
  %v68 = vld [vmem:[%s1 + $0x130] sm:$0xff]
  %v69 = vld [vmem:[%s1 + $0x138] sm:$0xff]
  %v70 = vld [vmem:[%s1 + $0x140] sm:$0xff]
  %v71 = vld [vmem:[%s1 + $0x148] sm:$0xff]
  %v72 = vld [vmem:[%s1 + $0x150] sm:$0xff]
  %v73 = vld [vmem:[%s1 + $0x158] sm:$0xff]
  %v74 = vld [vmem:[%s1 + $0x160] sm:$0xff]
  %v75 = vld [vmem:[%s1 + $0x168] sm:$0xff]
  %v76 = vld [vmem:[%s1 + $0x170] sm:$0xff]
  %v77 = vld [vmem:[%s1 + $0x178] sm:$0xff]
  %v78 = vld [vmem:[%s1 + $0x180] sm:$0xff]
  %v79 = vld [vmem:[%s1 + $0x188] sm:$0xff]
  %v80 = vld [vmem:[%s2] sm:$0x1]
  %v82 = vlaneseq
  %v83 = vshrl.u32 %v82, 7
  %v84 = vsub.s32 0, %v83
  %v85 = vrot.slane %v80, %v84
  %vm87 = vcmask 130048
  %v89 = vsel %vm87, %v29, 0
  %91 = vmatprep.subr.mxu0 0.0
  %92 = vmatpush1.msra.mxu0 %v30
  %93 = vmatprep.subr.mxu0 0.0
  %94 = vmatpush1.msra.mxu0 %v31
  %95 = vmatprep.subr.mxu0 0.0
  %96 = vmatpush1.msra.mxu0 %v32
  %97 = vmatprep.subr.mxu0 0.0
  %98 = vmatpush1.msra.mxu0 %v33
  %99 = vmatprep.subr.mxu0 0.0
  %100 = vmatpush1.msra.mxu0 %v34
  %101 = vmatprep.subr.mxu0 0.0
  %102 = vmatpush1.msra.mxu0 %v35
  %103 = vmatprep.subr.mxu0 0.0
  %104 = vmatpush1.msra.mxu0 %v36
  %105 = vmatprep.subr.mxu0 0.0
  %106 = vmatpush1.msra.mxu0 %v37
  %107 = vmatprep.subr.mxu0 0.0
  %108 = vmatpush1.msra.mxu0 %v38
  %109 = vmatprep.subr.mxu0 0.0
  %110 = vmatpush1.msra.mxu0 %v39
  %111 = vmatprep.subr.mxu0 0.0
  %112 = vmatpush1.msra.mxu0 %v40
  %113 = vmatprep.subr.mxu0 0.0
  %114 = vmatpush1.msra.mxu0 %v41
  %115 = vmatprep.subr.mxu0 0.0
  %116 = vmatpush1.msra.mxu0 %v42
  %117 = vmatprep.subr.mxu0 0.0
  %118 = vmatpush1.msra.mxu0 %v43
  %119 = vmatprep.subr.mxu0 0.0
  %120 = vmatpush1.msra.mxu0 %v44
  %121 = vmatprep.subr.mxu0 0.0
  %122 = vmatpush1.msra.mxu0 %v45
  %123 = vmatprep.subr.mxu0 0.0
  %124 = vmatpush1.msra.mxu0 %v46
  %125 = vmatprep.subr.mxu0 0.0
  %126 = vmatpush1.msra.mxu0 %v47
  %127 = vmatprep.subr.mxu0 0.0
  %128 = vmatpush1.msra.mxu0 %v48
  %129 = vmatprep.subr.mxu0 0.0
  %130 = vmatpush1.msra.mxu0 %v49
  %131 = vmatprep.subr.mxu0 0.0
  %132 = vmatpush1.msra.mxu0 %v50
  %133 = vmatprep.subr.mxu0 0.0
  %134 = vmatpush1.msra.mxu0 %v51
  %135 = vmatprep.subr.mxu0 0.0
  %136 = vmatpush1.msra.mxu0 %v52
  %137 = vmatprep.subr.mxu0 0.0
  %138 = vmatpush1.msra.mxu0 %v53
  %139 = vmatprep.subr.mxu0 0.0
  %140 = vmatpush1.msra.mxu0 %v54
  %141 = vmatprep.subr.mxu0 0.0
  %142 = vmatpush1.msra.mxu0 %v55
  %143 = vmatprep.subr.mxu0 0.0
  %144 = vmatpush1.msra.mxu0 %v56
  %145 = vmatprep.subr.mxu0 0.0
  %146 = vmatpush1.msra.mxu0 %v57
  %147 = vmatprep.subr.mxu0 0.0
  %148 = vmatpush1.msra.mxu0 %v58
  %149 = vmatprep.subr.mxu0 0.0
  %150 = vmatpush1.msra.mxu0 %v59
  %151 = vmatprep.subr.mxu0 0.0
  %152 = vmatpush1.msra.mxu0 %v60
  %153 = vmatprep.subr.mxu0 0.0
  %154 = vmatpush1.msra.mxu0 %v61
  %155 = vmatprep.mubr.f32.mxu0 %v27
  %156 = vmatmul.mubr.f32.gmra.mrb[0].mxu0 %v26
  %v157 = vpop.f32.mrb[0].mxu0
  %v158 = vadd.f32 %v85, %v157
  %v159 = vpop.f32.mrb[0].mxu0
  %160 = vdwg.mxu0
  %161 = vmatprep.subr.mxu0 0.0
  %162 = vmatpush1.msra.mxu0 %v62
  %163 = vmatprep.subr.mxu0 0.0
  %164 = vmatpush1.msra.mxu0 %v63
  %165 = vmatprep.subr.mxu0 0.0
  %166 = vmatpush1.msra.mxu0 %v64
  %167 = vmatprep.subr.mxu0 0.0
  %168 = vmatpush1.msra.mxu0 %v65
  %169 = vmatprep.subr.mxu0 0.0
  %170 = vmatpush1.msra.mxu0 %v66
  %171 = vmatprep.subr.mxu0 0.0
  %172 = vmatpush1.msra.mxu0 %v67
  %173 = vmatprep.subr.mxu0 0.0
  %174 = vmatpush1.msra.mxu0 %v68
  %175 = vmatprep.subr.mxu0 0.0
  %176 = vmatpush1.msra.mxu0 %v69
  %177 = vmatprep.subr.mxu0 0.0
  %178 = vmatpush1.msra.mxu0 %v70
  %179 = vmatprep.subr.mxu0 0.0
  %180 = vmatpush1.msra.mxu0 %v71
  %181 = vmatprep.subr.mxu0 0.0
  %182 = vmatpush1.msra.mxu0 %v72
  %183 = vmatprep.subr.mxu0 0.0
  %184 = vmatpush1.msra.mxu0 %v73
  %185 = vmatprep.subr.mxu0 0.0
  %186 = vmatpush1.msra.mxu0 %v74
  %187 = vmatprep.subr.mxu0 0.0
  %188 = vmatpush1.msra.mxu0 %v75
  %189 = vmatprep.subr.mxu0 0.0
  %190 = vmatpush1.msra.mxu0 %v76
  %191 = vmatprep.subr.mxu0 0.0
  %192 = vmatpush1.msra.mxu0 %v77
  %193 = vmatprep.subr.mxu0 0.0
  %194 = vmatpush1.msra.mxu0 %v78
  %195 = vmatprep.subr.mxu0 0.0
  %196 = vmatpush1.msra.mxu0 %v79
  %197 = vmatprep.subr.mxu0 0.0
  %198 = vmatpush1.msra.mxu0 0.0
  %199 = vmatprep.subr.mxu0 0.0
  %200 = vmatpush1.msra.mxu0 0.0
  %201 = vmatprep.subr.mxu0 0.0
  %202 = vmatpush1.msra.mxu0 0.0
  %203 = vmatprep.subr.mxu0 0.0
  %204 = vmatpush1.msra.mxu0 0.0
  %205 = vmatprep.subr.mxu0 0.0
  %206 = vmatpush1.msra.mxu0 0.0
  %207 = vmatprep.subr.mxu0 0.0
  %208 = vmatpush1.msra.mxu0 0.0
  %209 = vmatprep.subr.mxu0 0.0
  %210 = vmatpush1.msra.mxu0 0.0
  %211 = vmatprep.subr.mxu0 0.0
  %212 = vmatpush1.msra.mxu0 0.0
  %213 = vmatprep.subr.mxu0 0.0
  %214 = vmatpush1.msra.mxu0 0.0
  %215 = vmatprep.subr.mxu0 0.0
  %216 = vmatpush1.msra.mxu0 0.0
  %217 = vmatprep.subr.mxu0 0.0
  %218 = vmatpush1.msra.mxu0 0.0
  %219 = vmatprep.subr.mxu0 0.0
  %220 = vmatpush1.msra.mxu0 0.0
  %221 = vmatprep.subr.mxu0 0.0
  %222 = vmatpush1.msra.mxu0 0.0
  %223 = vmatprep.subr.mxu0 0.0
  %224 = vmatpush1.msra.mxu0 0.0
  %225 = vmatprep.mubr.f32.mxu0 %v89
  %226 = vmatmul.mubr.f32.gmra.mrb[0].mxu0 %v28
  %v227 = vpop.f32.mrb[0].mxu0
  %v228 = vadd.f32 %v158, %v227
  %v229 = vpop.f32.mrb[0].mxu0
  %230 = vdwg.mxu0
  %v231 = vmax.f32 %v228, 0.0
  %v232 = vld [vmem:[%s3] sm:$0xff]
  %v233 = vld [vmem:[%s3 + $0x8] sm:$0xff]
  %v234 = vld [vmem:[%s3 + $0x10] sm:$0xff]
  %v235 = vld [vmem:[%s3 + $0x18] sm:$0xff]
  %v236 = vld [vmem:[%s3 + $0x20] sm:$0xff]
  %v237 = vld [vmem:[%s3 + $0x28] sm:$0xff]
  %v238 = vld [vmem:[%s3 + $0x30] sm:$0xff]
  %v239 = vld [vmem:[%s3 + $0x38] sm:$0xff]
  %v240 = vld [vmem:[%s3 + $0x40] sm:$0xff]
  %v241 = vld [vmem:[%s3 + $0x48] sm:$0xff]
  %v242 = vld [vmem:[%s3 + $0x50] sm:$0xff]
  %v243 = vld [vmem:[%s3 + $0x58] sm:$0xff]
  %v244 = vld [vmem:[%s3 + $0x60] sm:$0xff]
  %v245 = vld [vmem:[%s3 + $0x68] sm:$0xff]
  %v246 = vld [vmem:[%s3 + $0x70] sm:$0xff]
  %v247 = vld [vmem:[%s3 + $0x78] sm:$0xff]
  %v248 = vld [vmem:[%s4] sm:$0x1]
  %v250 = vlaneseq
  %v251 = vshrl.u32 %v250, 7
  %v252 = vsub.s32 0, %v251
  %v253 = vrot.slane %v248, %v252
  %255 = vmatprep.subr.mxu0 0.0
  %256 = vmatpush1.msra.mxu0 %v232
  %257 = vmatprep.subr.mxu0 0.0
  %258 = vmatpush1.msra.mxu0 %v233
  %259 = vmatprep.subr.mxu0 0.0
  %260 = vmatpush1.msra.mxu0 %v234
  %261 = vmatprep.subr.mxu0 0.0
  %262 = vmatpush1.msra.mxu0 %v235
  %263 = vmatprep.subr.mxu0 0.0
  %264 = vmatpush1.msra.mxu0 %v236
  %265 = vmatprep.subr.mxu0 0.0
  %266 = vmatpush1.msra.mxu0 %v237
  %267 = vmatprep.subr.mxu0 0.0
  %268 = vmatpush1.msra.mxu0 %v238
  %269 = vmatprep.subr.mxu0 0.0
  %270 = vmatpush1.msra.mxu0 %v239
  %271 = vmatprep.subr.mxu0 0.0
  %272 = vmatpush1.msra.mxu0 %v240
  %273 = vmatprep.subr.mxu0 0.0
  %274 = vmatpush1.msra.mxu0 %v241
  %275 = vmatprep.subr.mxu0 0.0
  %276 = vmatpush1.msra.mxu0 %v242
  %277 = vmatprep.subr.mxu0 0.0
  %278 = vmatpush1.msra.mxu0 %v243
  %279 = vmatprep.subr.mxu0 0.0
  %280 = vmatpush1.msra.mxu0 %v244
  %281 = vmatprep.subr.mxu0 0.0
  %282 = vmatpush1.msra.mxu0 %v245
  %283 = vmatprep.subr.mxu0 0.0
  %284 = vmatpush1.msra.mxu0 %v246
  %285 = vmatprep.subr.mxu0 0.0
  %286 = vmatpush1.msra.mxu0 %v247
  %287 = vmatprep.subr.mxu0 0.0
  %288 = vmatpush1.msra.mxu0 0.0
  %289 = vmatprep.subr.mxu0 0.0
  %290 = vmatpush1.msra.mxu0 0.0
  %291 = vmatprep.subr.mxu0 0.0
  %292 = vmatpush1.msra.mxu0 0.0
  %293 = vmatprep.subr.mxu0 0.0
  %294 = vmatpush1.msra.mxu0 0.0
  %295 = vmatprep.subr.mxu0 0.0
  %296 = vmatpush1.msra.mxu0 0.0
  %297 = vmatprep.subr.mxu0 0.0
  %298 = vmatpush1.msra.mxu0 0.0
  %299 = vmatprep.subr.mxu0 0.0
  %300 = vmatpush1.msra.mxu0 0.0
  %301 = vmatprep.subr.mxu0 0.0
  %302 = vmatpush1.msra.mxu0 0.0
  %303 = vmatprep.subr.mxu0 0.0
  %304 = vmatpush1.msra.mxu0 0.0
  %305 = vmatprep.subr.mxu0 0.0
  %306 = vmatpush1.msra.mxu0 0.0
  %307 = vmatprep.subr.mxu0 0.0
  %308 = vmatpush1.msra.mxu0 0.0
  %309 = vmatprep.subr.mxu0 0.0
  %310 = vmatpush1.msra.mxu0 0.0
  %311 = vmatprep.subr.mxu0 0.0
  %312 = vmatpush1.msra.mxu0 0.0
  %313 = vmatprep.subr.mxu0 0.0
  %314 = vmatpush1.msra.mxu0 0.0
  %315 = vmatprep.subr.mxu0 0.0
  %316 = vmatpush1.msra.mxu0 0.0
  %317 = vmatprep.subr.mxu0 0.0
  %318 = vmatpush1.msra.mxu0 0.0
  %319 = vmatprep.mubr.f32.mxu0 0.0
  %320 = vmatmul.mubr.f32.gmra.mrb[0].mxu0 %v231
  %v321 = vpop.f32.mrb[0].mxu0
  %v322 = vadd.f32 %v253, %v321
  %v323 = vpop.f32.mrb[0].mxu0
  %324 = vdwg.mxu0
  %v325 = vmax.f32 %v322, 0.0
  %v326 = vld [vmem:[%s5] sm:$0xff]
  %v327 = vld [vmem:[%s5 + $0x8] sm:$0xff]
  %v328 = vld [vmem:[%s5 + $0x10] sm:$0xff]
  %v329 = vld [vmem:[%s5 + $0x18] sm:$0xff]
  %v330 = vld [vmem:[%s5 + $0x20] sm:$0xff]
  %v331 = vld [vmem:[%s5 + $0x28] sm:$0xff]
  %v332 = vld [vmem:[%s5 + $0x30] sm:$0xff]
  %v333 = vld [vmem:[%s5 + $0x38] sm:$0xff]
  %v334 = vld [vmem:[%s5 + $0x40] sm:$0xff]
  %v335 = vld [vmem:[%s5 + $0x48] sm:$0xff]
  %v336 = vld [vmem:[%s5 + $0x50] sm:$0xff]
  %v337 = vld [vmem:[%s5 + $0x58] sm:$0xff]
  %v338 = vld [vmem:[%s5 + $0x60] sm:$0xff]
  %v339 = vld [vmem:[%s5 + $0x68] sm:$0xff]
  %v340 = vld [vmem:[%s5 + $0x70] sm:$0xff]
  %v341 = vld [vmem:[%s5 + $0x78] sm:$0xff]
  %v342 = vld [vmem:[%s6] sm:$0x1]
  %v344 = vlaneseq
  %v345 = vshrl.u32 %v344, 7
  %v346 = vsub.s32 0, %v345
  %v347 = vrot.slane %v342, %v346
  %349 = vmatprep.subr.mxu0 0.0
  %350 = vmatpush1.msra.mxu0 %v326
  %351 = vmatprep.subr.mxu0 0.0
  %352 = vmatpush1.msra.mxu0 %v327
  %353 = vmatprep.subr.mxu0 0.0
  %354 = vmatpush1.msra.mxu0 %v328
  %355 = vmatprep.subr.mxu0 0.0
  %356 = vmatpush1.msra.mxu0 %v329
  %357 = vmatprep.subr.mxu0 0.0
  %358 = vmatpush1.msra.mxu0 %v330
  %359 = vmatprep.subr.mxu0 0.0
  %360 = vmatpush1.msra.mxu0 %v331
  %361 = vmatprep.subr.mxu0 0.0
  %362 = vmatpush1.msra.mxu0 %v332
  %363 = vmatprep.subr.mxu0 0.0
  %364 = vmatpush1.msra.mxu0 %v333
  %365 = vmatprep.subr.mxu0 0.0
  %366 = vmatpush1.msra.mxu0 %v334
  %367 = vmatprep.subr.mxu0 0.0
  %368 = vmatpush1.msra.mxu0 %v335
  %369 = vmatprep.subr.mxu0 0.0
  %370 = vmatpush1.msra.mxu0 %v336
  %371 = vmatprep.subr.mxu0 0.0
  %372 = vmatpush1.msra.mxu0 %v337
  %373 = vmatprep.subr.mxu0 0.0
  %374 = vmatpush1.msra.mxu0 %v338
  %375 = vmatprep.subr.mxu0 0.0
  %376 = vmatpush1.msra.mxu0 %v339
  %377 = vmatprep.subr.mxu0 0.0
  %378 = vmatpush1.msra.mxu0 %v340
  %379 = vmatprep.subr.mxu0 0.0
  %380 = vmatpush1.msra.mxu0 %v341
  %381 = vmatprep.subr.mxu0 0.0
  %382 = vmatpush1.msra.mxu0 0.0
  %383 = vmatprep.subr.mxu0 0.0
  %384 = vmatpush1.msra.mxu0 0.0
  %385 = vmatprep.subr.mxu0 0.0
  %386 = vmatpush1.msra.mxu0 0.0
  %387 = vmatprep.subr.mxu0 0.0
  %388 = vmatpush1.msra.mxu0 0.0
  %389 = vmatprep.subr.mxu0 0.0
  %390 = vmatpush1.msra.mxu0 0.0
  %391 = vmatprep.subr.mxu0 0.0
  %392 = vmatpush1.msra.mxu0 0.0
  %393 = vmatprep.subr.mxu0 0.0
  %394 = vmatpush1.msra.mxu0 0.0
  %395 = vmatprep.subr.mxu0 0.0
  %396 = vmatpush1.msra.mxu0 0.0
  %397 = vmatprep.subr.mxu0 0.0
  %398 = vmatpush1.msra.mxu0 0.0
  %399 = vmatprep.subr.mxu0 0.0
  %400 = vmatpush1.msra.mxu0 0.0
  %401 = vmatprep.subr.mxu0 0.0
  %402 = vmatpush1.msra.mxu0 0.0
  %403 = vmatprep.subr.mxu0 0.0
  %404 = vmatpush1.msra.mxu0 0.0
  %405 = vmatprep.subr.mxu0 0.0
  %406 = vmatpush1.msra.mxu0 0.0
  %407 = vmatprep.subr.mxu0 0.0
  %408 = vmatpush1.msra.mxu0 0.0
  %409 = vmatprep.subr.mxu0 0.0
  %410 = vmatpush1.msra.mxu0 0.0
  %411 = vmatprep.subr.mxu0 0.0
  %412 = vmatpush1.msra.mxu0 0.0
  %413 = vmatprep.mubr.f32.mxu0 0.0
  %414 = vmatmul.mubr.f32.gmra.mrb[0].mxu0 %v325
  %v415 = vpop.f32.mrb[0].mxu0
  %v416 = vadd.f32 %v347, %v415
  %v417 = vpop.f32.mrb[0].mxu0
  %418 = vdwg.mxu0
  %419 = vst [vmem:[%s7] sm:$0xff] %v416
  // Predicated region
  $region30: #{net_forward.5} parent=0 // pred_check
    _
  $region31: #{net_forward.5} parent=0 // pred_check_branch
    %421 = sbr.rel (0) target = $region33
  $region32: #{net_forward.5} parent=0 // pred_region
    _
  $region33: #{net_forward.5} parent=0 // pred_fallthru
    _
  // Predicated region
  $region34: #{net_forward.5} parent=0 // pred_check
    _
  $region35: #{net_forward.5} parent=0 // pred_check_branch
    %423 = sbr.rel (0) target = $region37
  $region36: #{net_forward.5} parent=0 // pred_region
    _
  $region37: #{net_forward.5} parent=0 // pred_fallthru
    _

</llo_original>
